<compile_context>
chip_gen: v7x
topology: tpu7x:2x2x1
jax: 0.10.0
libtpu: 0.0.40
codegen_flags: <defaults>
</compile_context>

<pallas_src>
import jax
import jax.numpy as jnp
from jax.experimental import pallas as pl
from jax.experimental.pallas import tpu as pltpu

EPS = 1e-5
LANE = 128
MAX_BT = 16          # bound the static unroll of the per-sample IN/store epilogue


def _round_up(n, m):
    return ((n + m - 1) // m) * m


_VMEM_LIMIT = None


def _vmem_limit_bytes():
    """Generation-aware scoped-VMEM budget (96 MiB on v5e/v6e, 48 MiB on v7x)."""
    global _VMEM_LIMIT
    if _VMEM_LIMIT is None:
        try:
            cap = pltpu.get_tpu_info().vmem_capacity_bytes
        except Exception:
            cap = 64 * 1024 * 1024          # conservative fallback (safe on all chips)
        _VMEM_LIMIT = min((cap * 3) // 4, 96 * 1024 * 1024)
    return _VMEM_LIMIT


# ---------------------------------------------------------------------------
# Pallas kernels: fused (patches @ W) -> InstanceNorm -> ReLU [-> +residual]
# ---------------------------------------------------------------------------
def _fused_body(p_ref, w_ref, o_ref, r_ref):
    # p_ref: (bt, HW, KKC) bf16   im2col patches for bt samples (KKC % 128 == 0)
    # w_ref: (KKC, ct)     bf16   flattened conv weight tile
    # o_ref: (bt, HW, ct)  bf16   output tile (lane-dense, ct % 128 == 0)
    # r_ref: (bt, HW, ct)  bf16   optional residual tile
    bt, HW, KKC = p_ref.shape
    # One folded matmul over all samples in the block -> good MXU fill even for small HW.
    p = p_ref[...].reshape(bt * HW, KKC)
    y = jnp.dot(p, w_ref[...], preferred_element_type=jnp.float32)   # (bt*HW, ct) f32
    # Per-sample InstanceNorm (two-pass variance) + ReLU [+ residual]; cheap vs. the matmul.
    for i in range(bt):
        yi = y[i * HW:(i + 1) * HW]
        mean = jnp.mean(yi, axis=0, keepdims=True)
        var = jnp.mean(jnp.square(yi - mean), axis=0, keepdims=True)
        yi = jnp.maximum((yi - mean) * jax.lax.rsqrt(var + EPS), 0.0)
        if r_ref is not None:
            yi = yi + r_ref[i].astype(jnp.float32)
        o_ref[i] = yi.astype(o_ref.dtype)


def conv_in_relu_kernel(p_ref, w_ref, o_ref):
    _fused_body(p_ref, w_ref, o_ref, None)


def conv_in_relu_res_kernel(p_ref, w_ref, r_ref, o_ref):
    _fused_body(p_ref, w_ref, o_ref, r_ref)


def fused_conv_in_relu(patches, w_flat, residual=None):
    """patches : (B, HW, KKC) bf16, KKC % 128 == 0
       w_flat  : (KKC, Cp)    bf16, Cp  % 128 == 0
       residual: optional (B, HW, Cp) bf16
       returns (B, HW, Cp) bf16
    """
    B, HW, KKC = patches.shape
    Cp = w_flat.shape[1]
    assert KKC % LANE == 0 and Cp % LANE == 0
    ct = 256 if Cp % 256 == 0 else 128      # feed the full 256-wide MXU on v6e/v7x
    has_res = residual is not None

    vmem_limit = _vmem_limit_bytes()
    # Double-buffer-aware block budget: 2x per pipelined operand + 2x weight tile (bf16).
    w_tile_bytes = 2 * (KKC * ct * 2)
    budget = max(int(vmem_limit * 0.7) - w_tile_bytes, 0)
    per_sample = HW * (KKC * 2 + ct * 2 + (ct * 2 if has_res else 0))

    bt = 1
    if HW % 8 == 0:     # folded matmul needs sublane-aligned per-sample row blocks
        for cand in range(1, min(B, MAX_BT) + 1):
            if B % cand == 0 and 2 * cand * per_sample <= budget:
                bt = cand
    # Keep >=2 grid steps on a parallel axis so both v7x TensorCores get work.
    if Cp == ct and bt == B and B >= 2:
        bt = max(d for d in range(1, B) if B % d == 0)

    grid = (B // bt, Cp // ct)   # channel tiles innermost -> patches block stays resident

    in_specs = [
        pl.BlockSpec((bt, HW, KKC), lambda b, c: (b, 0, 0)),
        pl.BlockSpec((KKC, ct), lambda b, c: (0, c)),
    ]
    args = [patches, w_flat]
    if has_res:
        in_specs.append(pl.BlockSpec((bt, HW, ct), lambda b, c: (b, 0, c)))
        args.append(residual)
        kernel = conv_in_relu_res_kernel
    else:
        kernel = conv_in_relu_kernel

    flops = 2 * B * HW * KKC * Cp
    bytes_accessed = (patches.size + w_flat.size + B * HW * Cp) * 2 \
                     + (residual.size * 2 if has_res else 0)

    return pl.pallas_call(
        kernel,
        out_shape=jax.ShapeDtypeStruct((B, HW, Cp), jnp.bfloat16),
        grid=grid,
        in_specs=in_specs,
        out_specs=pl.BlockSpec((bt, HW, ct), lambda b, c: (b, 0, c)),
        compiler_params=pltpu.CompilerParams(
            dimension_semantics=("parallel", "parallel"),
            vmem_limit_bytes=vmem_limit,
        ),
        cost_estimate=pl.CostEstimate(
            flops=flops, transcendentals=B * Cp, bytes_accessed=bytes_accessed),
    )(*args)


# ---------------------------------------------------------------------------
# JAX glue: im2col patch extraction on the REAL channel count
# (only the final K*K*C contraction dim is padded to a multiple of 128)
# ---------------------------------------------------------------------------
def im2col(x_nhwc, ksz, stride, pad):
    B, H, W, C = x_nhwc.shape
    Ho = (H + 2 * pad - ksz) // stride + 1
    Wo = (W + 2 * pad - ksz) // stride + 1
    xp = jnp.pad(x_nhwc, ((0, 0), (pad, pad), (pad, pad), (0, 0)))
    cols = []
    for di in range(ksz):
        for dj in range(ksz):
            cols.append(xp[:, di:di + stride * Ho:stride, dj:dj + stride * Wo:stride, :])
    patches = jnp.stack(cols, axis=3).reshape(B, Ho * Wo, ksz * ksz * C)
    kkc = ksz * ksz * C
    kkc_pad = _round_up(kkc, LANE)
    if kkc_pad > kkc:
        patches = jnp.pad(patches, ((0, 0), (0, 0), (0, kkc_pad - kkc)))
    return patches.astype(jnp.bfloat16), Ho, Wo


# ---------------------------------------------------------------------------
# Parameter init (mirrors PyTorch __init__ shapes + weights_init_normal)
# ---------------------------------------------------------------------------
def init_conv_weight(key, c_in, c_out, ksz):
    # weights_init_normal: Conv weights ~ N(0, 0.02).  The conv bias is omitted: every
    # conv is immediately followed by InstanceNorm whose mean subtraction cancels a
    # per-channel constant exactly (zero effect on the output).
    w = 0.02 * jax.random.normal(key, (c_out, c_in, ksz, ksz), jnp.float32)
    w_hwio = jnp.transpose(w, (2, 3, 1, 0))                      # (kh, kw, c_in, c_out)
    kkc = ksz * ksz * c_in
    kkc_pad = _round_up(kkc, LANE)
    co_pad = _round_up(c_out, LANE)
    w_flat = w_hwio.reshape(kkc, c_out)
    w_flat = jnp.pad(w_flat, ((0, kkc_pad - kkc), (0, co_pad - c_out))).astype(jnp.bfloat16)
    return w_flat, w_hwio   # (padded flat bf16 for the kernel, real HWIO f32 for the ref)


def build_encoder(key, in_channels=2, dim=8, n_sample=2):
    specs = [(in_channels, dim, 7, 1, 3)]       # (c_in, c_out, k, stride, pad)
    d = dim
    for _ in range(n_sample):
        specs.append((d, d * 2, 3, 2, 1))
        d *= 2
    specs.append((d, d * 2, 3, 1, 1))
    d *= 2
    res_spec = (d, d, 5, 1, 2)                  # Residual(d, 'in') conv

    keys = jax.random.split(key, len(specs) + 1)
    layer_static, layer_w, layer_w_hwio = [], [], []
    for kk, (ci, co, ksz, s, p) in zip(keys[:-1], specs):
        w_flat, w_hwio = init_conv_weight(kk, ci, co, ksz)
        layer_w.append(w_flat)
        layer_w_hwio.append(w_hwio)
        layer_static.append((ksz, s, p, ci, co))
    ci, co, ksz, s, p = res_spec
    res_w, res_w_hwio = init_conv_weight(keys[-1], ci, co, ksz)

    return {
        "layer_static": tuple(layer_static),
        "res_static": (ksz, s, p, ci, co),
        "c_final": d,
        "layer_weights": tuple(layer_w),
        "res_weight": res_w,
        "layer_weights_hwio": tuple(layer_w_hwio),
        "res_weight_hwio": res_w_hwio,
    }


# ---------------------------------------------------------------------------
# Encoder forward (static conv hyper-params are closed over, NOT traced)
# ---------------------------------------------------------------------------
def make_encoder_forward(layer_static, res_static, c_final):
    @jax.jit
    def forward(weights, x1, x2):
        layer_ws, res_w = weights
        x = jnp.concatenate([x1, x2], axis=1)                     # NCHW cat
        x = jnp.transpose(x, (0, 2, 3, 1))                        # -> NHWC
        B = x.shape[0]

        for (ksz, s, p, c_in, c_out), w in zip(layer_static, layer_ws):
            patches, Ho, Wo = im2col(x[..., :c_in], ksz, s, p)    # real channels only
            y = fused_conv_in_relu(patches, w)                    # (B, HW, Cp) bf16
            x = y.reshape(B, Ho, Wo, w.shape[1])

        # Residual block: x + ReLU(IN(Conv5x5(x)))
        ksz, s, p, c_in, c_out = res_static
        Bx, H, W, Cp = x.shape
        patches, Ho, Wo = im2col(x[..., :c_in], ksz, s, p)
        y = fused_conv_in_relu(patches, res_w, residual=x.reshape(Bx, H * W, Cp))
        x = y.reshape(Bx, Ho, Wo, Cp)

        x = x[..., :c_final].astype(jnp.float32)                  # drop channel padding
        return jnp.transpose(x, (0, 3, 1, 2))                     # NHWC -> NCHW
    return forward


# ---------------------------------------------------------------------------
# Pure-JAX reference (same bf16 convs + bf16 activation storage) for correctness
# ---------------------------------------------------------------------------
def reference_forward(layer_static, res_static, layer_ws_hwio, res_w_hwio,
                      x1, x2, c_final):
    def conv_in_relu(x, w_hwio, stride, pad):
        y = jax.lax.conv_general_dilated(
            x.astype(jnp.bfloat16), w_hwio.astype(jnp.bfloat16),
            window_strides=(stride, stride), padding=[(pad, pad), (pad, pad)],
            dimension_numbers=("NHWC", "HWIO", "NHWC"),
            preferred_element_type=jnp.float32)
        mean = jnp.mean(y, axis=(1, 2), keepdims=True)
        var = jnp.mean(jnp.square(y - mean), axis=(1, 2), keepdims=True)
        return jnp.maximum((y - mean) * jax.lax.rsqrt(var + EPS), 0.0)

    x = jnp.concatenate([x1, x2], axis=1)
    x = jnp.transpose(x, (0, 2, 3, 1)).astype(jnp.float32)
    for (ksz, s, p, ci, co), w in zip(layer_static, layer_ws_hwio):
        x = conv_in_relu(x, w, s, p).astype(jnp.bfloat16)   # mirror bf16 activation storage
    ksz, s, p, ci, co = res_static
    x = (x.astype(jnp.float32) + conv_in_relu(x, res_w_hwio, s, p)).astype(jnp.bfloat16)
    return jnp.transpose(x.astype(jnp.float32), (0, 3, 1, 2))


# ---------------------------------------------------------------------------
if __name__ == "__main__":
    key = jax.random.PRNGKey(0)
    kp, k1, k2 = jax.random.split(key, 3)

    B, H, W = 4, 16, 16
    in_channels, dim, n_sample = 2, 8, 2   # small but structurally identical config

    enc = build_encoder(kp, in_channels=in_channels, dim=dim, n_sample=n_sample)
    forward = make_encoder_forward(enc["layer_static"], enc["res_static"], enc["c_final"])

    x1 = jax.random.normal(k1, (B, 1, H, W), jnp.float32)
    x2 = jax.random.normal(k2, (B, 1, H, W), jnp.float32)

    out = forward((enc["layer_weights"], enc["res_weight"]), x1, x2)
    out = jax.block_until_ready(out)

    # Expected shape: (B, dim * 2**(n_sample+1), H / 2**n_sample, W / 2**n_sample)
    expected = (B, dim * (2 ** (n_sample + 1)), H // (2 ** n_sample), W // (2 ** n_sample))
    assert out.shape == expected, (out.shape, expected)
    assert bool(jnp.all(jnp.isfinite(out)))

    ref = reference_forward(enc["layer_static"], enc["res_static"],
                            enc["layer_weights_hwio"], enc["res_weight_hwio"],
                            x1, x2, enc["c_final"])
    max_err = float(jnp.max(jnp.abs(out - ref)))
    assert bool(jnp.allclose(out, ref, atol=2e-2, rtol=2e-2)), max_err

    print("KERNEL_OK")
</pallas_src>

<mosaic_0001>
module attributes {stable_mosaic.version = 11 : i64} {
  func.func @conv_in_relu_kernel(%arg0: i32, %arg1: i32, %arg2: memref<2x256x128xbf16, #tpu.memory_space<vmem>>, %arg3: memref<128x128xbf16, #tpu.memory_space<vmem>>, %arg4: memref<2x256x128xbf16, #tpu.memory_space<vmem>>) attributes {dimension_semantics = [#tpu.dimension_semantics<parallel>, #tpu.dimension_semantics<parallel>], iteration_bounds = array<i64: 2, 1>, scalar_prefetch = 0 : i64, scratch_operands = 0 : i64, tpu.core_type = #tpu.core_type<tc>, window_params = [{transform_indices = @transform_0, window_bounds = array<i64: 2, 256, 128>}, {transform_indices = @transform_1, window_bounds = array<i64: 128, 128>}, {transform_indices = @transform_2, window_bounds = array<i64: 2, 256, 128>}]} {
    %c0 = arith.constant 0 : index
    %c0_0 = arith.constant 0 : index
    %c0_1 = arith.constant 0 : index
    %0 = vector.load %arg2[%c0, %c0_0, %c0_1] : memref<2x256x128xbf16, #tpu.memory_space<vmem>>, vector<2x256x128xbf16>
    %1 = vector.shape_cast %0 : vector<2x256x128xbf16> to vector<512x128xbf16>
    %c0_2 = arith.constant 0 : index
    %c0_3 = arith.constant 0 : index
    %2 = vector.load %arg3[%c0_2, %c0_3] : memref<128x128xbf16, #tpu.memory_space<vmem>>, vector<128x128xbf16>
    %cst = arith.constant dense<0.000000e+00> : vector<512x128xf32>
    %3 = tpu.matmul %1, %2, %cst {dimension_numbers = #tpu.dot_dimension_numbers<[1], [0], [0], [1], [0, 0, 1, 1], [], []>} : vector<512x128xbf16>, vector<128x128xbf16>, vector<512x128xf32> -> vector<512x128xf32>
    %4 = vector.extract_strided_slice %3 {offsets = [0, 0], sizes = [256, 128], strides = [1, 1]} : vector<512x128xf32> to vector<256x128xf32>
    %cst_4 = arith.constant dense<0.000000e+00> : vector<128xf32>
    %5 = vector.multi_reduction <add>, %4, %cst_4 [0] : vector<256x128xf32> to vector<128xf32>
    %6 = vector.shape_cast %5 : vector<128xf32> to vector<1x128xf32>
    %cst_5 = arith.constant 2.560000e+02 : f32
    %7 = vector.broadcast %cst_5 : f32 to vector<1x128xf32>
    %8 = arith.divf %6, %7 : vector<1x128xf32>
    %9 = vector.broadcast %8 : vector<1x128xf32> to vector<256x128xf32>
    %10 = arith.subf %4, %9 : vector<256x128xf32>
    %11 = arith.mulf %10, %10 : vector<256x128xf32>
    %cst_6 = arith.constant dense<0.000000e+00> : vector<128xf32>
    %12 = vector.multi_reduction <add>, %11, %cst_6 [0] : vector<256x128xf32> to vector<128xf32>
    %13 = vector.shape_cast %12 : vector<128xf32> to vector<1x128xf32>
    %cst_7 = arith.constant 2.560000e+02 : f32
    %14 = vector.broadcast %cst_7 : f32 to vector<1x128xf32>
    %15 = arith.divf %13, %14 : vector<1x128xf32>
    %16 = vector.broadcast %8 : vector<1x128xf32> to vector<256x128xf32>
    %17 = arith.subf %4, %16 : vector<256x128xf32>
    %cst_8 = arith.constant 9.99999974E-6 : f32
    %18 = vector.broadcast %cst_8 : f32 to vector<1x128xf32>
    %19 = arith.addf %15, %18 : vector<1x128xf32>
    %20 = math.rsqrt %19 : vector<1x128xf32>
    %21 = vector.broadcast %20 : vector<1x128xf32> to vector<256x128xf32>
    %22 = arith.mulf %17, %21 : vector<256x128xf32>
    %cst_9 = arith.constant 0.000000e+00 : f32
    %23 = vector.broadcast %cst_9 : f32 to vector<256x128xf32>
    %24 = arith.maximumf %22, %23 : vector<256x128xf32>
    %25 = arith.truncf %24 : vector<256x128xf32> to vector<256x128xbf16>
    %c0_10 = arith.constant 0 : index
    %c0_11 = arith.constant 0 : index
    %c0_12 = arith.constant 0 : index
    %26 = vector.load %arg4[%c0_10, %c0_11, %c0_12] : memref<2x256x128xbf16, #tpu.memory_space<vmem>>, vector<1x256x128xbf16>
    %27 = vector.shape_cast %26 : vector<1x256x128xbf16> to vector<256x128xbf16>
    %28 = vector.shape_cast %25 : vector<256x128xbf16> to vector<1x256x128xbf16>
    tpu.vector_store %arg4[%c0_10, %c0_11, %c0_12], %28 {strides = array<i32>} : memref<2x256x128xbf16, #tpu.memory_space<vmem>>, vector<1x256x128xbf16>,
    %29 = vector.extract_strided_slice %3 {offsets = [256, 0], sizes = [256, 128], strides = [1, 1]} : vector<512x128xf32> to vector<256x128xf32>
    %cst_13 = arith.constant dense<0.000000e+00> : vector<128xf32>
    %30 = vector.multi_reduction <add>, %29, %cst_13 [0] : vector<256x128xf32> to vector<128xf32>
    %31 = vector.shape_cast %30 : vector<128xf32> to vector<1x128xf32>
    %cst_14 = arith.constant 2.560000e+02 : f32
    %32 = vector.broadcast %cst_14 : f32 to vector<1x128xf32>
    %33 = arith.divf %31, %32 : vector<1x128xf32>
    %34 = vector.broadcast %33 : vector<1x128xf32> to vector<256x128xf32>
    %35 = arith.subf %29, %34 : vector<256x128xf32>
    %36 = arith.mulf %35, %35 : vector<256x128xf32>
    %cst_15 = arith.constant dense<0.000000e+00> : vector<128xf32>
    %37 = vector.multi_reduction <add>, %36, %cst_15 [0] : vector<256x128xf32> to vector<128xf32>
    %38 = vector.shape_cast %37 : vector<128xf32> to vector<1x128xf32>
    %cst_16 = arith.constant 2.560000e+02 : f32
    %39 = vector.broadcast %cst_16 : f32 to vector<1x128xf32>
    %40 = arith.divf %38, %39 : vector<1x128xf32>
    %41 = vector.broadcast %33 : vector<1x128xf32> to vector<256x128xf32>
    %42 = arith.subf %29, %41 : vector<256x128xf32>
    %cst_17 = arith.constant 9.99999974E-6 : f32
    %43 = vector.broadcast %cst_17 : f32 to vector<1x128xf32>
    %44 = arith.addf %40, %43 : vector<1x128xf32>
    %45 = math.rsqrt %44 : vector<1x128xf32>
    %46 = vector.broadcast %45 : vector<1x128xf32> to vector<256x128xf32>
    %47 = arith.mulf %42, %46 : vector<256x128xf32>
    %cst_18 = arith.constant 0.000000e+00 : f32
    %48 = vector.broadcast %cst_18 : f32 to vector<256x128xf32>
    %49 = arith.maximumf %47, %48 : vector<256x128xf32>
    %50 = arith.truncf %49 : vector<256x128xf32> to vector<256x128xbf16>
    %c1 = arith.constant 1 : index
    %c0_19 = arith.constant 0 : index
    %c0_20 = arith.constant 0 : index
    %51 = vector.load %arg4[%c1, %c0_19, %c0_20] : memref<2x256x128xbf16, #tpu.memory_space<vmem>>, vector<1x256x128xbf16>
    %52 = vector.shape_cast %51 : vector<1x256x128xbf16> to vector<256x128xbf16>
    %53 = vector.shape_cast %50 : vector<256x128xbf16> to vector<1x256x128xbf16>
    tpu.vector_store %arg4[%c1, %c0_19, %c0_20], %53 {strides = array<i32>} : memref<2x256x128xbf16, #tpu.memory_space<vmem>>, vector<1x256x128xbf16>,
    return
  }
  func.func @transform_0(%arg0: i32, %arg1: i32) -> (i32, i32, i32) {
    %c0_i32 = arith.constant 0 : i32
    %c0_i32_0 = arith.constant 0 : i32
    %c0_i32_1 = arith.constant 0 : i32
    return %arg0, %c0_i32, %c0_i32_0 : i32, i32, i32
  }
  func.func @transform_1(%arg0: i32, %arg1: i32) -> (i32, i32) {
    %c0_i32 = arith.constant 0 : i32
    %c0_i32_0 = arith.constant 0 : i32
    return %c0_i32, %arg1 : i32, i32
  }
  func.func @transform_2(%arg0: i32, %arg1: i32) -> (i32, i32, i32) {
    %c0_i32 = arith.constant 0 : i32
    %c0_i32_0 = arith.constant 0 : i32
    return %arg0, %c0_i32, %arg1 : i32, i32, i32
  }
}

module attributes {stable_mosaic.version = 11 : i64} {
  func.func @conv_in_relu_kernel(%arg0: i32, %arg1: i32, %arg2: memref<2x64x128xbf16, #tpu.memory_space<vmem>>, %arg3: memref<128x128xbf16, #tpu.memory_space<vmem>>, %arg4: memref<2x64x128xbf16, #tpu.memory_space<vmem>>) attributes {dimension_semantics = [#tpu.dimension_semantics<parallel>, #tpu.dimension_semantics<parallel>], iteration_bounds = array<i64: 2, 1>, scalar_prefetch = 0 : i64, scratch_operands = 0 : i64, tpu.core_type = #tpu.core_type<tc>, window_params = [{transform_indices = @transform_0, window_bounds = array<i64: 2, 64, 128>}, {transform_indices = @transform_1, window_bounds = array<i64: 128, 128>}, {transform_indices = @transform_2, window_bounds = array<i64: 2, 64, 128>}]} {
    %c0 = arith.constant 0 : index
    %c0_0 = arith.constant 0 : index
    %c0_1 = arith.constant 0 : index
    %0 = vector.load %arg2[%c0, %c0_0, %c0_1] : memref<2x64x128xbf16, #tpu.memory_space<vmem>>, vector<2x64x128xbf16>
    %1 = vector.shape_cast %0 : vector<2x64x128xbf16> to vector<128x128xbf16>
    %c0_2 = arith.constant 0 : index
    %c0_3 = arith.constant 0 : index
    %2 = vector.load %arg3[%c0_2, %c0_3] : memref<128x128xbf16, #tpu.memory_space<vmem>>, vector<128x128xbf16>
    %cst = arith.constant dense<0.000000e+00> : vector<128x128xf32>
    %3 = tpu.matmul %1, %2, %cst {dimension_numbers = #tpu.dot_dimension_numbers<[1], [0], [0], [1], [0, 0, 1, 1], [], []>} : vector<128x128xbf16>, vector<128x128xbf16>, vector<128x128xf32> -> vector<128x128xf32>
    %4 = vector.extract_strided_slice %3 {offsets = [0, 0], sizes = [64, 128], strides = [1, 1]} : vector<128x128xf32> to vector<64x128xf32>
    %cst_4 = arith.constant dense<0.000000e+00> : vector<128xf32>
    %5 = vector.multi_reduction <add>, %4, %cst_4 [0] : vector<64x128xf32> to vector<128xf32>
    %6 = vector.shape_cast %5 : vector<128xf32> to vector<1x128xf32>
    %cst_5 = arith.constant 6.400000e+01 : f32
    %7 = vector.broadcast %cst_5 : f32 to vector<1x128xf32>
    %8 = arith.divf %6, %7 : vector<1x128xf32>
    %9 = vector.broadcast %8 : vector<1x128xf32> to vector<64x128xf32>
    %10 = arith.subf %4, %9 : vector<64x128xf32>
    %11 = arith.mulf %10, %10 : vector<64x128xf32>
    %cst_6 = arith.constant dense<0.000000e+00> : vector<128xf32>
    %12 = vector.multi_reduction <add>, %11, %cst_6 [0] : vector<64x128xf32> to vector<128xf32>
    %13 = vector.shape_cast %12 : vector<128xf32> to vector<1x128xf32>
    %cst_7 = arith.constant 6.400000e+01 : f32
    %14 = vector.broadcast %cst_7 : f32 to vector<1x128xf32>
    %15 = arith.divf %13, %14 : vector<1x128xf32>
    %16 = vector.broadcast %8 : vector<1x128xf32> to vector<64x128xf32>
    %17 = arith.subf %4, %16 : vector<64x128xf32>
    %cst_8 = arith.constant 9.99999974E-6 : f32
    %18 = vector.broadcast %cst_8 : f32 to vector<1x128xf32>
    %19 = arith.addf %15, %18 : vector<1x128xf32>
    %20 = math.rsqrt %19 : vector<1x128xf32>
    %21 = vector.broadcast %20 : vector<1x128xf32> to vector<64x128xf32>
    %22 = arith.mulf %17, %21 : vector<64x128xf32>
    %cst_9 = arith.constant 0.000000e+00 : f32
    %23 = vector.broadcast %cst_9 : f32 to vector<64x128xf32>
    %24 = arith.maximumf %22, %23 : vector<64x128xf32>
    %25 = arith.truncf %24 : vector<64x128xf32> to vector<64x128xbf16>
    %c0_10 = arith.constant 0 : index
    %c0_11 = arith.constant 0 : index
    %c0_12 = arith.constant 0 : index
    %26 = vector.load %arg4[%c0_10, %c0_11, %c0_12] : memref<2x64x128xbf16, #tpu.memory_space<vmem>>, vector<1x64x128xbf16>
    %27 = vector.shape_cast %26 : vector<1x64x128xbf16> to vector<64x128xbf16>
    %28 = vector.shape_cast %25 : vector<64x128xbf16> to vector<1x64x128xbf16>
    tpu.vector_store %arg4[%c0_10, %c0_11, %c0_12], %28 {strides = array<i32>} : memref<2x64x128xbf16, #tpu.memory_space<vmem>>, vector<1x64x128xbf16>,
    %29 = vector.extract_strided_slice %3 {offsets = [64, 0], sizes = [64, 128], strides = [1, 1]} : vector<128x128xf32> to vector<64x128xf32>
    %cst_13 = arith.constant dense<0.000000e+00> : vector<128xf32>
    %30 = vector.multi_reduction <add>, %29, %cst_13 [0] : vector<64x128xf32> to vector<128xf32>
    %31 = vector.shape_cast %30 : vector<128xf32> to vector<1x128xf32>
    %cst_14 = arith.constant 6.400000e+01 : f32
    %32 = vector.broadcast %cst_14 : f32 to vector<1x128xf32>
    %33 = arith.divf %31, %32 : vector<1x128xf32>
    %34 = vector.broadcast %33 : vector<1x128xf32> to vector<64x128xf32>
    %35 = arith.subf %29, %34 : vector<64x128xf32>
    %36 = arith.mulf %35, %35 : vector<64x128xf32>
    %cst_15 = arith.constant dense<0.000000e+00> : vector<128xf32>
    %37 = vector.multi_reduction <add>, %36, %cst_15 [0] : vector<64x128xf32> to vector<128xf32>
    %38 = vector.shape_cast %37 : vector<128xf32> to vector<1x128xf32>
    %cst_16 = arith.constant 6.400000e+01 : f32
    %39 = vector.broadcast %cst_16 : f32 to vector<1x128xf32>
    %40 = arith.divf %38, %39 : vector<1x128xf32>
    %41 = vector.broadcast %33 : vector<1x128xf32> to vector<64x128xf32>
    %42 = arith.subf %29, %41 : vector<64x128xf32>
    %cst_17 = arith.constant 9.99999974E-6 : f32
    %43 = vector.broadcast %cst_17 : f32 to vector<1x128xf32>
    %44 = arith.addf %40, %43 : vector<1x128xf32>
    %45 = math.rsqrt %44 : vector<1x128xf32>
    %46 = vector.broadcast %45 : vector<1x128xf32> to vector<64x128xf32>
    %47 = arith.mulf %42, %46 : vector<64x128xf32>
    %cst_18 = arith.constant 0.000000e+00 : f32
    %48 = vector.broadcast %cst_18 : f32 to vector<64x128xf32>
    %49 = arith.maximumf %47, %48 : vector<64x128xf32>
    %50 = arith.truncf %49 : vector<64x128xf32> to vector<64x128xbf16>
    %c1 = arith.constant 1 : index
    %c0_19 = arith.constant 0 : index
    %c0_20 = arith.constant 0 : index
    %51 = vector.load %arg4[%c1, %c0_19, %c0_20] : memref<2x64x128xbf16, #tpu.memory_space<vmem>>, vector<1x64x128xbf16>
    %52 = vector.shape_cast %51 : vector<1x64x128xbf16> to vector<64x128xbf16>
    %53 = vector.shape_cast %50 : vector<64x128xbf16> to vector<1x64x128xbf16>
    tpu.vector_store %arg4[%c1, %c0_19, %c0_20], %53 {strides = array<i32>} : memref<2x64x128xbf16, #tpu.memory_space<vmem>>, vector<1x64x128xbf16>,
    return
  }
  func.func @transform_0(%arg0: i32, %arg1: i32) -> (i32, i32, i32) {
    %c0_i32 = arith.constant 0 : i32
    %c0_i32_0 = arith.constant 0 : i32
    %c0_i32_1 = arith.constant 0 : i32
    return %arg0, %c0_i32, %c0_i32_0 : i32, i32, i32
  }
  func.func @transform_1(%arg0: i32, %arg1: i32) -> (i32, i32) {
    %c0_i32 = arith.constant 0 : i32
    %c0_i32_0 = arith.constant 0 : i32
    return %c0_i32, %arg1 : i32, i32
  }
  func.func @transform_2(%arg0: i32, %arg1: i32) -> (i32, i32, i32) {
    %c0_i32 = arith.constant 0 : i32
    %c0_i32_0 = arith.constant 0 : i32
    return %arg0, %c0_i32, %arg1 : i32, i32, i32
  }
}

module attributes {stable_mosaic.version = 11 : i64} {
  func.func @conv_in_relu_kernel(%arg0: i32, %arg1: i32, %arg2: memref<2x16x256xbf16, #tpu.memory_space<vmem>>, %arg3: memref<256x128xbf16, #tpu.memory_space<vmem>>, %arg4: memref<2x16x128xbf16, #tpu.memory_space<vmem>>) attributes {dimension_semantics = [#tpu.dimension_semantics<parallel>, #tpu.dimension_semantics<parallel>], iteration_bounds = array<i64: 2, 1>, scalar_prefetch = 0 : i64, scratch_operands = 0 : i64, tpu.core_type = #tpu.core_type<tc>, window_params = [{transform_indices = @transform_0, window_bounds = array<i64: 2, 16, 256>}, {transform_indices = @transform_1, window_bounds = array<i64: 256, 128>}, {transform_indices = @transform_2, window_bounds = array<i64: 2, 16, 128>}]} {
    %c0 = arith.constant 0 : index
    %c0_0 = arith.constant 0 : index
    %c0_1 = arith.constant 0 : index
    %0 = vector.load %arg2[%c0, %c0_0, %c0_1] : memref<2x16x256xbf16, #tpu.memory_space<vmem>>, vector<2x16x256xbf16>
    %1 = vector.shape_cast %0 : vector<2x16x256xbf16> to vector<32x256xbf16>
    %c0_2 = arith.constant 0 : index
    %c0_3 = arith.constant 0 : index
    %2 = vector.load %arg3[%c0_2, %c0_3] : memref<256x128xbf16, #tpu.memory_space<vmem>>, vector<256x128xbf16>
    %cst = arith.constant dense<0.000000e+00> : vector<32x128xf32>
    %3 = tpu.matmul %1, %2, %cst {dimension_numbers = #tpu.dot_dimension_numbers<[1], [0], [0], [1], [0, 0, 1, 1], [], []>} : vector<32x256xbf16>, vector<256x128xbf16>, vector<32x128xf32> -> vector<32x128xf32>
    %4 = vector.extract_strided_slice %3 {offsets = [0, 0], sizes = [16, 128], strides = [1, 1]} : vector<32x128xf32> to vector<16x128xf32>
    %cst_4 = arith.constant dense<0.000000e+00> : vector<128xf32>
    %5 = vector.multi_reduction <add>, %4, %cst_4 [0] : vector<16x128xf32> to vector<128xf32>
    %6 = vector.shape_cast %5 : vector<128xf32> to vector<1x128xf32>
    %cst_5 = arith.constant 1.600000e+01 : f32
    %7 = vector.broadcast %cst_5 : f32 to vector<1x128xf32>
    %8 = arith.divf %6, %7 : vector<1x128xf32>
    %9 = vector.broadcast %8 : vector<1x128xf32> to vector<16x128xf32>
    %10 = arith.subf %4, %9 : vector<16x128xf32>
    %11 = arith.mulf %10, %10 : vector<16x128xf32>
    %cst_6 = arith.constant dense<0.000000e+00> : vector<128xf32>
    %12 = vector.multi_reduction <add>, %11, %cst_6 [0] : vector<16x128xf32> to vector<128xf32>
    %13 = vector.shape_cast %12 : vector<128xf32> to vector<1x128xf32>
    %cst_7 = arith.constant 1.600000e+01 : f32
    %14 = vector.broadcast %cst_7 : f32 to vector<1x128xf32>
    %15 = arith.divf %13, %14 : vector<1x128xf32>
    %16 = vector.broadcast %8 : vector<1x128xf32> to vector<16x128xf32>
    %17 = arith.subf %4, %16 : vector<16x128xf32>
    %cst_8 = arith.constant 9.99999974E-6 : f32
    %18 = vector.broadcast %cst_8 : f32 to vector<1x128xf32>
    %19 = arith.addf %15, %18 : vector<1x128xf32>
    %20 = math.rsqrt %19 : vector<1x128xf32>
    %21 = vector.broadcast %20 : vector<1x128xf32> to vector<16x128xf32>
    %22 = arith.mulf %17, %21 : vector<16x128xf32>
    %cst_9 = arith.constant 0.000000e+00 : f32
    %23 = vector.broadcast %cst_9 : f32 to vector<16x128xf32>
    %24 = arith.maximumf %22, %23 : vector<16x128xf32>
    %25 = arith.truncf %24 : vector<16x128xf32> to vector<16x128xbf16>
    %c0_10 = arith.constant 0 : index
    %c0_11 = arith.constant 0 : index
    %c0_12 = arith.constant 0 : index
    %26 = vector.load %arg4[%c0_10, %c0_11, %c0_12] : memref<2x16x128xbf16, #tpu.memory_space<vmem>>, vector<1x16x128xbf16>
    %27 = vector.shape_cast %26 : vector<1x16x128xbf16> to vector<16x128xbf16>
    %28 = vector.shape_cast %25 : vector<16x128xbf16> to vector<1x16x128xbf16>
    tpu.vector_store %arg4[%c0_10, %c0_11, %c0_12], %28 {strides = array<i32>} : memref<2x16x128xbf16, #tpu.memory_space<vmem>>, vector<1x16x128xbf16>,
    %29 = vector.extract_strided_slice %3 {offsets = [16, 0], sizes = [16, 128], strides = [1, 1]} : vector<32x128xf32> to vector<16x128xf32>
    %cst_13 = arith.constant dense<0.000000e+00> : vector<128xf32>
    %30 = vector.multi_reduction <add>, %29, %cst_13 [0] : vector<16x128xf32> to vector<128xf32>
    %31 = vector.shape_cast %30 : vector<128xf32> to vector<1x128xf32>
    %cst_14 = arith.constant 1.600000e+01 : f32
    %32 = vector.broadcast %cst_14 : f32 to vector<1x128xf32>
    %33 = arith.divf %31, %32 : vector<1x128xf32>
    %34 = vector.broadcast %33 : vector<1x128xf32> to vector<16x128xf32>
    %35 = arith.subf %29, %34 : vector<16x128xf32>
    %36 = arith.mulf %35, %35 : vector<16x128xf32>
    %cst_15 = arith.constant dense<0.000000e+00> : vector<128xf32>
    %37 = vector.multi_reduction <add>, %36, %cst_15 [0] : vector<16x128xf32> to vector<128xf32>
    %38 = vector.shape_cast %37 : vector<128xf32> to vector<1x128xf32>
    %cst_16 = arith.constant 1.600000e+01 : f32
    %39 = vector.broadcast %cst_16 : f32 to vector<1x128xf32>
    %40 = arith.divf %38, %39 : vector<1x128xf32>
    %41 = vector.broadcast %33 : vector<1x128xf32> to vector<16x128xf32>
    %42 = arith.subf %29, %41 : vector<16x128xf32>
    %cst_17 = arith.constant 9.99999974E-6 : f32
    %43 = vector.broadcast %cst_17 : f32 to vector<1x128xf32>
    %44 = arith.addf %40, %43 : vector<1x128xf32>
    %45 = math.rsqrt %44 : vector<1x128xf32>
    %46 = vector.broadcast %45 : vector<1x128xf32> to vector<16x128xf32>
    %47 = arith.mulf %42, %46 : vector<16x128xf32>
    %cst_18 = arith.constant 0.000000e+00 : f32
    %48 = vector.broadcast %cst_18 : f32 to vector<16x128xf32>
    %49 = arith.maximumf %47, %48 : vector<16x128xf32>
    %50 = arith.truncf %49 : vector<16x128xf32> to vector<16x128xbf16>
    %c1 = arith.constant 1 : index
    %c0_19 = arith.constant 0 : index
    %c0_20 = arith.constant 0 : index
    %51 = vector.load %arg4[%c1, %c0_19, %c0_20] : memref<2x16x128xbf16, #tpu.memory_space<vmem>>, vector<1x16x128xbf16>
    %52 = vector.shape_cast %51 : vector<1x16x128xbf16> to vector<16x128xbf16>
    %53 = vector.shape_cast %50 : vector<16x128xbf16> to vector<1x16x128xbf16>
    tpu.vector_store %arg4[%c1, %c0_19, %c0_20], %53 {strides = array<i32>} : memref<2x16x128xbf16, #tpu.memory_space<vmem>>, vector<1x16x128xbf16>,
    return
  }
  func.func @transform_0(%arg0: i32, %arg1: i32) -> (i32, i32, i32) {
    %c0_i32 = arith.constant 0 : i32
    %c0_i32_0 = arith.constant 0 : i32
    %c0_i32_1 = arith.constant 0 : i32
    return %arg0, %c0_i32, %c0_i32_0 : i32, i32, i32
  }
  func.func @transform_1(%arg0: i32, %arg1: i32) -> (i32, i32) {
    %c0_i32 = arith.constant 0 : i32
    %c0_i32_0 = arith.constant 0 : i32
    return %c0_i32, %arg1 : i32, i32
  }
  func.func @transform_2(%arg0: i32, %arg1: i32) -> (i32, i32, i32) {
    %c0_i32 = arith.constant 0 : i32
    %c0_i32_0 = arith.constant 0 : i32
    return %arg0, %c0_i32, %arg1 : i32, i32, i32
  }
}

module attributes {stable_mosaic.version = 11 : i64} {
  func.func @conv_in_relu_kernel(%arg0: i32, %arg1: i32, %arg2: memref<2x16x384xbf16, #tpu.memory_space<vmem>>, %arg3: memref<384x128xbf16, #tpu.memory_space<vmem>>, %arg4: memref<2x16x128xbf16, #tpu.memory_space<vmem>>) attributes {dimension_semantics = [#tpu.dimension_semantics<parallel>, #tpu.dimension_semantics<parallel>], iteration_bounds = array<i64: 2, 1>, scalar_prefetch = 0 : i64, scratch_operands = 0 : i64, tpu.core_type = #tpu.core_type<tc>, window_params = [{transform_indices = @transform_0, window_bounds = array<i64: 2, 16, 384>}, {transform_indices = @transform_1, window_bounds = array<i64: 384, 128>}, {transform_indices = @transform_2, window_bounds = array<i64: 2, 16, 128>}]} {
    %c0 = arith.constant 0 : index
    %c0_0 = arith.constant 0 : index
    %c0_1 = arith.constant 0 : index
    %0 = vector.load %arg2[%c0, %c0_0, %c0_1] : memref<2x16x384xbf16, #tpu.memory_space<vmem>>, vector<2x16x384xbf16>
    %1 = vector.shape_cast %0 : vector<2x16x384xbf16> to vector<32x384xbf16>
    %c0_2 = arith.constant 0 : index
    %c0_3 = arith.constant 0 : index
    %2 = vector.load %arg3[%c0_2, %c0_3] : memref<384x128xbf16, #tpu.memory_space<vmem>>, vector<384x128xbf16>
    %cst = arith.constant dense<0.000000e+00> : vector<32x128xf32>
    %3 = tpu.matmul %1, %2, %cst {dimension_numbers = #tpu.dot_dimension_numbers<[1], [0], [0], [1], [0, 0, 1, 1], [], []>} : vector<32x384xbf16>, vector<384x128xbf16>, vector<32x128xf32> -> vector<32x128xf32>
    %4 = vector.extract_strided_slice %3 {offsets = [0, 0], sizes = [16, 128], strides = [1, 1]} : vector<32x128xf32> to vector<16x128xf32>
    %cst_4 = arith.constant dense<0.000000e+00> : vector<128xf32>
    %5 = vector.multi_reduction <add>, %4, %cst_4 [0] : vector<16x128xf32> to vector<128xf32>
    %6 = vector.shape_cast %5 : vector<128xf32> to vector<1x128xf32>
    %cst_5 = arith.constant 1.600000e+01 : f32
    %7 = vector.broadcast %cst_5 : f32 to vector<1x128xf32>
    %8 = arith.divf %6, %7 : vector<1x128xf32>
    %9 = vector.broadcast %8 : vector<1x128xf32> to vector<16x128xf32>
    %10 = arith.subf %4, %9 : vector<16x128xf32>
    %11 = arith.mulf %10, %10 : vector<16x128xf32>
    %cst_6 = arith.constant dense<0.000000e+00> : vector<128xf32>
    %12 = vector.multi_reduction <add>, %11, %cst_6 [0] : vector<16x128xf32> to vector<128xf32>
    %13 = vector.shape_cast %12 : vector<128xf32> to vector<1x128xf32>
    %cst_7 = arith.constant 1.600000e+01 : f32
    %14 = vector.broadcast %cst_7 : f32 to vector<1x128xf32>
    %15 = arith.divf %13, %14 : vector<1x128xf32>
    %16 = vector.broadcast %8 : vector<1x128xf32> to vector<16x128xf32>
    %17 = arith.subf %4, %16 : vector<16x128xf32>
    %cst_8 = arith.constant 9.99999974E-6 : f32
    %18 = vector.broadcast %cst_8 : f32 to vector<1x128xf32>
    %19 = arith.addf %15, %18 : vector<1x128xf32>
    %20 = math.rsqrt %19 : vector<1x128xf32>
    %21 = vector.broadcast %20 : vector<1x128xf32> to vector<16x128xf32>
    %22 = arith.mulf %17, %21 : vector<16x128xf32>
    %cst_9 = arith.constant 0.000000e+00 : f32
    %23 = vector.broadcast %cst_9 : f32 to vector<16x128xf32>
    %24 = arith.maximumf %22, %23 : vector<16x128xf32>
    %25 = arith.truncf %24 : vector<16x128xf32> to vector<16x128xbf16>
    %c0_10 = arith.constant 0 : index
    %c0_11 = arith.constant 0 : index
    %c0_12 = arith.constant 0 : index
    %26 = vector.load %arg4[%c0_10, %c0_11, %c0_12] : memref<2x16x128xbf16, #tpu.memory_space<vmem>>, vector<1x16x128xbf16>
    %27 = vector.shape_cast %26 : vector<1x16x128xbf16> to vector<16x128xbf16>
    %28 = vector.shape_cast %25 : vector<16x128xbf16> to vector<1x16x128xbf16>
    tpu.vector_store %arg4[%c0_10, %c0_11, %c0_12], %28 {strides = array<i32>} : memref<2x16x128xbf16, #tpu.memory_space<vmem>>, vector<1x16x128xbf16>,
    %29 = vector.extract_strided_slice %3 {offsets = [16, 0], sizes = [16, 128], strides = [1, 1]} : vector<32x128xf32> to vector<16x128xf32>
    %cst_13 = arith.constant dense<0.000000e+00> : vector<128xf32>
    %30 = vector.multi_reduction <add>, %29, %cst_13 [0] : vector<16x128xf32> to vector<128xf32>
    %31 = vector.shape_cast %30 : vector<128xf32> to vector<1x128xf32>
    %cst_14 = arith.constant 1.600000e+01 : f32
    %32 = vector.broadcast %cst_14 : f32 to vector<1x128xf32>
    %33 = arith.divf %31, %32 : vector<1x128xf32>
    %34 = vector.broadcast %33 : vector<1x128xf32> to vector<16x128xf32>
    %35 = arith.subf %29, %34 : vector<16x128xf32>
    %36 = arith.mulf %35, %35 : vector<16x128xf32>
    %cst_15 = arith.constant dense<0.000000e+00> : vector<128xf32>
    %37 = vector.multi_reduction <add>, %36, %cst_15 [0] : vector<16x128xf32> to vector<128xf32>
    %38 = vector.shape_cast %37 : vector<128xf32> to vector<1x128xf32>
    %cst_16 = arith.constant 1.600000e+01 : f32
    %39 = vector.broadcast %cst_16 : f32 to vector<1x128xf32>
    %40 = arith.divf %38, %39 : vector<1x128xf32>
    %41 = vector.broadcast %33 : vector<1x128xf32> to vector<16x128xf32>
    %42 = arith.subf %29, %41 : vector<16x128xf32>
    %cst_17 = arith.constant 9.99999974E-6 : f32
    %43 = vector.broadcast %cst_17 : f32 to vector<1x128xf32>
    %44 = arith.addf %40, %43 : vector<1x128xf32>
    %45 = math.rsqrt %44 : vector<1x128xf32>
    %46 = vector.broadcast %45 : vector<1x128xf32> to vector<16x128xf32>
    %47 = arith.mulf %42, %46 : vector<16x128xf32>
    %cst_18 = arith.constant 0.000000e+00 : f32
    %48 = vector.broadcast %cst_18 : f32 to vector<16x128xf32>
    %49 = arith.maximumf %47, %48 : vector<16x128xf32>
    %50 = arith.truncf %49 : vector<16x128xf32> to vector<16x128xbf16>
    %c1 = arith.constant 1 : index
    %c0_19 = arith.constant 0 : index
    %c0_20 = arith.constant 0 : index
    %51 = vector.load %arg4[%c1, %c0_19, %c0_20] : memref<2x16x128xbf16, #tpu.memory_space<vmem>>, vector<1x16x128xbf16>
    %52 = vector.shape_cast %51 : vector<1x16x128xbf16> to vector<16x128xbf16>
    %53 = vector.shape_cast %50 : vector<16x128xbf16> to vector<1x16x128xbf16>
    tpu.vector_store %arg4[%c1, %c0_19, %c0_20], %53 {strides = array<i32>} : memref<2x16x128xbf16, #tpu.memory_space<vmem>>, vector<1x16x128xbf16>,
    return
  }
  func.func @transform_0(%arg0: i32, %arg1: i32) -> (i32, i32, i32) {
    %c0_i32 = arith.constant 0 : i32
    %c0_i32_0 = arith.constant 0 : i32
    %c0_i32_1 = arith.constant 0 : i32
    return %arg0, %c0_i32, %c0_i32_0 : i32, i32, i32
  }
  func.func @transform_1(%arg0: i32, %arg1: i32) -> (i32, i32) {
    %c0_i32 = arith.constant 0 : i32
    %c0_i32_0 = arith.constant 0 : i32
    return %c0_i32, %arg1 : i32, i32
  }
  func.func @transform_2(%arg0: i32, %arg1: i32) -> (i32, i32, i32) {
    %c0_i32 = arith.constant 0 : i32
    %c0_i32_0 = arith.constant 0 : i32
    return %arg0, %c0_i32, %arg1 : i32, i32, i32
  }
}

module attributes {stable_mosaic.version = 11 : i64} {
  func.func @conv_in_relu_res_kernel(%arg0: i32, %arg1: i32, %arg2: memref<2x16x1664xbf16, #tpu.memory_space<vmem>>, %arg3: memref<1664x128xbf16, #tpu.memory_space<vmem>>, %arg4: memref<2x16x128xbf16, #tpu.memory_space<vmem>>, %arg5: memref<2x16x128xbf16, #tpu.memory_space<vmem>>) attributes {dimension_semantics = [#tpu.dimension_semantics<parallel>, #tpu.dimension_semantics<parallel>], iteration_bounds = array<i64: 2, 1>, scalar_prefetch = 0 : i64, scratch_operands = 0 : i64, tpu.core_type = #tpu.core_type<tc>, window_params = [{transform_indices = @transform_0, window_bounds = array<i64: 2, 16, 1664>}, {transform_indices = @transform_1, window_bounds = array<i64: 1664, 128>}, {transform_indices = @transform_2, window_bounds = array<i64: 2, 16, 128>}, {transform_indices = @transform_3, window_bounds = array<i64: 2, 16, 128>}]} {
    %c0 = arith.constant 0 : index
    %c0_0 = arith.constant 0 : index
    %c0_1 = arith.constant 0 : index
    %0 = vector.load %arg2[%c0, %c0_0, %c0_1] : memref<2x16x1664xbf16, #tpu.memory_space<vmem>>, vector<2x16x1664xbf16>
    %1 = vector.shape_cast %0 : vector<2x16x1664xbf16> to vector<32x1664xbf16>
    %c0_2 = arith.constant 0 : index
    %c0_3 = arith.constant 0 : index
    %2 = vector.load %arg3[%c0_2, %c0_3] : memref<1664x128xbf16, #tpu.memory_space<vmem>>, vector<1664x128xbf16>
    %cst = arith.constant dense<0.000000e+00> : vector<32x128xf32>
    %3 = tpu.matmul %1, %2, %cst {dimension_numbers = #tpu.dot_dimension_numbers<[1], [0], [0], [1], [0, 0, 1, 1], [], []>} : vector<32x1664xbf16>, vector<1664x128xbf16>, vector<32x128xf32> -> vector<32x128xf32>
    %4 = vector.extract_strided_slice %3 {offsets = [0, 0], sizes = [16, 128], strides = [1, 1]} : vector<32x128xf32> to vector<16x128xf32>
    %cst_4 = arith.constant dense<0.000000e+00> : vector<128xf32>
    %5 = vector.multi_reduction <add>, %4, %cst_4 [0] : vector<16x128xf32> to vector<128xf32>
    %6 = vector.shape_cast %5 : vector<128xf32> to vector<1x128xf32>
    %cst_5 = arith.constant 1.600000e+01 : f32
    %7 = vector.broadcast %cst_5 : f32 to vector<1x128xf32>
    %8 = arith.divf %6, %7 : vector<1x128xf32>
    %9 = vector.broadcast %8 : vector<1x128xf32> to vector<16x128xf32>
    %10 = arith.subf %4, %9 : vector<16x128xf32>
    %11 = arith.mulf %10, %10 : vector<16x128xf32>
    %cst_6 = arith.constant dense<0.000000e+00> : vector<128xf32>
    %12 = vector.multi_reduction <add>, %11, %cst_6 [0] : vector<16x128xf32> to vector<128xf32>
    %13 = vector.shape_cast %12 : vector<128xf32> to vector<1x128xf32>
    %cst_7 = arith.constant 1.600000e+01 : f32
    %14 = vector.broadcast %cst_7 : f32 to vector<1x128xf32>
    %15 = arith.divf %13, %14 : vector<1x128xf32>
    %16 = vector.broadcast %8 : vector<1x128xf32> to vector<16x128xf32>
    %17 = arith.subf %4, %16 : vector<16x128xf32>
    %cst_8 = arith.constant 9.99999974E-6 : f32
    %18 = vector.broadcast %cst_8 : f32 to vector<1x128xf32>
    %19 = arith.addf %15, %18 : vector<1x128xf32>
    %20 = math.rsqrt %19 : vector<1x128xf32>
    %21 = vector.broadcast %20 : vector<1x128xf32> to vector<16x128xf32>
    %22 = arith.mulf %17, %21 : vector<16x128xf32>
    %cst_9 = arith.constant 0.000000e+00 : f32
    %23 = vector.broadcast %cst_9 : f32 to vector<16x128xf32>
    %24 = arith.maximumf %22, %23 : vector<16x128xf32>
    %c0_10 = arith.constant 0 : index
    %c0_11 = arith.constant 0 : index
    %c0_12 = arith.constant 0 : index
    %25 = vector.load %arg4[%c0_10, %c0_11, %c0_12] : memref<2x16x128xbf16, #tpu.memory_space<vmem>>, vector<1x16x128xbf16>
    %26 = vector.shape_cast %25 : vector<1x16x128xbf16> to vector<16x128xbf16>
    %27 = arith.extf %26 : vector<16x128xbf16> to vector<16x128xf32>
    %28 = arith.addf %24, %27 : vector<16x128xf32>
    %29 = arith.truncf %28 : vector<16x128xf32> to vector<16x128xbf16>
    %c0_13 = arith.constant 0 : index
    %c0_14 = arith.constant 0 : index
    %c0_15 = arith.constant 0 : index
    %30 = vector.load %arg5[%c0_13, %c0_14, %c0_15] : memref<2x16x128xbf16, #tpu.memory_space<vmem>>, vector<1x16x128xbf16>
    %31 = vector.shape_cast %30 : vector<1x16x128xbf16> to vector<16x128xbf16>
    %32 = vector.shape_cast %29 : vector<16x128xbf16> to vector<1x16x128xbf16>
    tpu.vector_store %arg5[%c0_13, %c0_14, %c0_15], %32 {strides = array<i32>} : memref<2x16x128xbf16, #tpu.memory_space<vmem>>, vector<1x16x128xbf16>,
    %33 = vector.extract_strided_slice %3 {offsets = [16, 0], sizes = [16, 128], strides = [1, 1]} : vector<32x128xf32> to vector<16x128xf32>
    %cst_16 = arith.constant dense<0.000000e+00> : vector<128xf32>
    %34 = vector.multi_reduction <add>, %33, %cst_16 [0] : vector<16x128xf32> to vector<128xf32>
    %35 = vector.shape_cast %34 : vector<128xf32> to vector<1x128xf32>
    %cst_17 = arith.constant 1.600000e+01 : f32
    %36 = vector.broadcast %cst_17 : f32 to vector<1x128xf32>
    %37 = arith.divf %35, %36 : vector<1x128xf32>
    %38 = vector.broadcast %37 : vector<1x128xf32> to vector<16x128xf32>
    %39 = arith.subf %33, %38 : vector<16x128xf32>
    %40 = arith.mulf %39, %39 : vector<16x128xf32>
    %cst_18 = arith.constant dense<0.000000e+00> : vector<128xf32>
    %41 = vector.multi_reduction <add>, %40, %cst_18 [0] : vector<16x128xf32> to vector<128xf32>
    %42 = vector.shape_cast %41 : vector<128xf32> to vector<1x128xf32>
    %cst_19 = arith.constant 1.600000e+01 : f32
    %43 = vector.broadcast %cst_19 : f32 to vector<1x128xf32>
    %44 = arith.divf %42, %43 : vector<1x128xf32>
    %45 = vector.broadcast %37 : vector<1x128xf32> to vector<16x128xf32>
    %46 = arith.subf %33, %45 : vector<16x128xf32>
    %cst_20 = arith.constant 9.99999974E-6 : f32
    %47 = vector.broadcast %cst_20 : f32 to vector<1x128xf32>
    %48 = arith.addf %44, %47 : vector<1x128xf32>
    %49 = math.rsqrt %48 : vector<1x128xf32>
    %50 = vector.broadcast %49 : vector<1x128xf32> to vector<16x128xf32>
    %51 = arith.mulf %46, %50 : vector<16x128xf32>
    %cst_21 = arith.constant 0.000000e+00 : f32
    %52 = vector.broadcast %cst_21 : f32 to vector<16x128xf32>
    %53 = arith.maximumf %51, %52 : vector<16x128xf32>
    %c1 = arith.constant 1 : index
    %c0_22 = arith.constant 0 : index
    %c0_23 = arith.constant 0 : index
    %54 = vector.load %arg4[%c1, %c0_22, %c0_23] : memref<2x16x128xbf16, #tpu.memory_space<vmem>>, vector<1x16x128xbf16>
    %55 = vector.shape_cast %54 : vector<1x16x128xbf16> to vector<16x128xbf16>
    %56 = arith.extf %55 : vector<16x128xbf16> to vector<16x128xf32>
    %57 = arith.addf %53, %56 : vector<16x128xf32>
    %58 = arith.truncf %57 : vector<16x128xf32> to vector<16x128xbf16>
    %c1_24 = arith.constant 1 : index
    %c0_25 = arith.constant 0 : index
    %c0_26 = arith.constant 0 : index
    %59 = vector.load %arg5[%c1_24, %c0_25, %c0_26] : memref<2x16x128xbf16, #tpu.memory_space<vmem>>, vector<1x16x128xbf16>
    %60 = vector.shape_cast %59 : vector<1x16x128xbf16> to vector<16x128xbf16>
    %61 = vector.shape_cast %58 : vector<16x128xbf16> to vector<1x16x128xbf16>
    tpu.vector_store %arg5[%c1_24, %c0_25, %c0_26], %61 {strides = array<i32>} : memref<2x16x128xbf16, #tpu.memory_space<vmem>>, vector<1x16x128xbf16>,
    return
  }
  func.func @transform_0(%arg0: i32, %arg1: i32) -> (i32, i32, i32) {
    %c0_i32 = arith.constant 0 : i32
    %c0_i32_0 = arith.constant 0 : i32
    %c0_i32_1 = arith.constant 0 : i32
    return %arg0, %c0_i32, %c0_i32_0 : i32, i32, i32
  }
  func.func @transform_1(%arg0: i32, %arg1: i32) -> (i32, i32) {
    %c0_i32 = arith.constant 0 : i32
    %c0_i32_0 = arith.constant 0 : i32
    return %c0_i32, %arg1 : i32, i32
  }
  func.func @transform_2(%arg0: i32, %arg1: i32) -> (i32, i32, i32) {
    %c0_i32 = arith.constant 0 : i32
    %c0_i32_0 = arith.constant 0 : i32
    return %arg0, %c0_i32, %arg1 : i32, i32, i32
  }
  func.func @transform_3(%arg0: i32, %arg1: i32) -> (i32, i32, i32) {
    %c0_i32 = arith.constant 0 : i32
    %c0_i32_0 = arith.constant 0 : i32
    return %arg0, %c0_i32, %arg1 : i32, i32, i32
  }
}

</mosaic_0001>

<llo_original>
// kernel: forward.5
$region0: #{forward.5}
  #allocation0 [shape = 'u32[]', space=smem, size = 0x4, offset = 0x4, fixed_abs, tag = 'smem constant byte address 0x4 - core index']
  #allocation1 [shape = 'u32[144,128]{1,0:T(1,128)}', space=vmem, size = 0x12000, scoped, tag = 'internal scratch']
  %s0 = inlined_call_operand.vmem [shape: bf16[4,256,128], index: 0, kind: input, shape index: {}]
  %s1 = inlined_call_operand.vmem [shape: bf16[128,128], index: 1, kind: input, shape index: {}]
  %s2 = inlined_call_operand.vmem [shape: bf16[4,256,128], index: 2, kind: output, shape index: {}]
  %s3 = sld [smem:[#allocation0]]
  $region41: #{forward.5} parent=0
    _
  %s5 = ssub.s32 1, %s3
  %s6 = scalar_select 0, %s5, %s3
  loop: start=0, step=1, limit=4
  $region2: #{forward.5} parent=0 // loop_pre_header
    _
  $region3: #{forward.5} parent=0 // loop_header
    %s8 = sphi 0, %s12
    %p9 = scmp.ge.s32.totalorder %s8, 4
    %s15 = sphi 0, %s27
    %s16 = sphi 0, %s23
    %s17 = sphi 0, %s15
    %s18 = sphi 0, %s16
    %s19 = sphi 0, %s17
    %s20 = sphi 0, %s18
    %s30 = sphi 0, %s32
    %s33 = sphi 0, %s30
    %s34 = sphi 0, %s33
    %s50 = sphi 0, %s34
    %s56 = sphi 0, %s58
    %s59 = sphi 0, %s56
    %s60 = sphi 0, %s59
    %s76 = sphi 0, %s60
    %s84 = sphi 0, %s86
    %s87 = sphi 0, %s84
    %s88 = sphi 0, %s87
    %s104 = sphi 0, %s88
  $region4: #{forward.5} parent=0 // loop_header_branch
    %11 = sbr.rel (%p9) target = $region8
  $region5: #{forward.5} parent=0 // loop_body
    %s13 = ssub.s32 %s8, 1
    %s14 = ssub.s32 %s8, 2
    %s21 = sadd.s32 1, %s16
    %p22 = scmp.ge.s32.totalorder %s21, 1
    %s23 = scalar_select %p22, 0, %s21
    %s24 = sadd.s32 1, %s15
    %s25 = scalar_select %p22, %s24, %s15
    %p26 = scmp.ge.s32.totalorder %s25, 2
    %s27 = scalar_select %p26, 0, %s25
    %s28 = ssub.s32 %s15, %s27
    %p29 = scmp.eq.s32.totalorder %s28, 0
    %s31 = sadd.s32 %s30, 1
    %s32 = scalar_select %p29, %s30, %s31
    %p35 = pneg %p29
    %p36 = scmp.eq.s32.totalorder %s8, 1
    %p37 = por %p35, %p36
    %p38 = scmp.ne.s32.totalorder %s30, %s33
    %p39 = scmp.eq.s32.totalorder %s8, 0
    %p40 = por %p38, %p39
    %p41 = scmp.ne.s32.totalorder %s30, %s33
    %p42 = scmp.eq.s32.totalorder %s13, 1
    %p43 = por %p41, %p42
    %p44 = scmp.ne.s32.totalorder %s33, %s34
    %p45 = scmp.eq.s32.totalorder %s13, 0
    %p46 = por %p44, %p45
    %p47 = scmp.ne.s32.totalorder %s33, %s34
    %p48 = scmp.eq.s32.totalorder %s14, 1
    %p49 = por %p47, %p48
    %p51 = scmp.ne.s32.totalorder %s34, %s50
    %p52 = scmp.eq.s32.totalorder %s14, 0
    %p53 = por %p51, %p52
    %s54 = ssub.s32 %s16, %s23
    %p55 = scmp.eq.s32.totalorder %s54, 0
    %s57 = sadd.s32 %s56, 1
    %s58 = scalar_select %p55, %s56, %s57
    %p61 = pneg %p55
    %p62 = scmp.eq.s32.totalorder %s8, 1
    %p63 = por %p61, %p62
    %p64 = scmp.ne.s32.totalorder %s56, %s59
    %p65 = scmp.eq.s32.totalorder %s8, 0
    %p66 = por %p64, %p65
    %p67 = scmp.ne.s32.totalorder %s56, %s59
    %p68 = scmp.eq.s32.totalorder %s13, 1
    %p69 = por %p67, %p68
    %p70 = scmp.ne.s32.totalorder %s59, %s60
    %p71 = scmp.eq.s32.totalorder %s13, 0
    %p72 = por %p70, %p71
    %p73 = scmp.ne.s32.totalorder %s59, %s60
    %p74 = scmp.eq.s32.totalorder %s14, 1
    %p75 = por %p73, %p74
    %p77 = scmp.ne.s32.totalorder %s60, %s76
    %p78 = scmp.eq.s32.totalorder %s14, 0
    %p79 = por %p77, %p78
    %s80 = ssub.s32 %s15, %s27
    %s81 = ssub.s32 %s16, %s23
    %s82 = sor.u32 %s80, %s81
    %p83 = scmp.eq.s32.totalorder %s82, 0
    %s85 = sadd.s32 %s84, 1
    %s86 = scalar_select %p83, %s84, %s85
    %p89 = pneg %p83
    %p90 = scmp.eq.s32.totalorder %s8, 1
    %p91 = por %p89, %p90
    %p92 = scmp.ne.s32.totalorder %s84, %s87
    %p93 = scmp.eq.s32.totalorder %s8, 0
    %p94 = por %p92, %p93
    %p95 = scmp.ne.s32.totalorder %s84, %s87
    %p96 = scmp.eq.s32.totalorder %s13, 1
    %p97 = por %p95, %p96
    %p98 = scmp.ne.s32.totalorder %s87, %s88
    %p99 = scmp.eq.s32.totalorder %s13, 0
    %p100 = por %p98, %p99
    %p101 = scmp.ne.s32.totalorder %s87, %s88
    %p102 = scmp.eq.s32.totalorder %s14, 1
    %p103 = por %p101, %p102
    %p105 = scmp.ne.s32.totalorder %s88, %s104
    %p106 = scmp.eq.s32.totalorder %s14, 0
    %p107 = por %p105, %p106
    %p108 = scmp.le.s32.totalorder 1, %s8
    %p109 = scmp.lt.s32.totalorder %s8, 3
    %p110 = pnand %p108, %p109
    %p111 = pneg %p110
    // Predicated region
    $region9: #{forward.5} parent=5 // pred_check
      _
    $region10: #{forward.5} parent=5 // pred_check_branch
      %113 = sbr.rel (%p110) target = $region12
    $region11: #{forward.5} parent=5 // pred_region
      %s114 = ssub.s32 %s8, 1
      // Predicated region
      $region13: #{forward.5} parent=11 // pred_check
        %p115 = pneg %p72
      $region14: #{forward.5} parent=11 // pred_check_branch
        %117 = sbr.rel (%p115) target = $region16
      $region15: #{forward.5} parent=11 // pred_region
        %p118 = scmp.lt.s32.totalorder %s18, 0
        %s119 = scalar_select %p118, %s18, 0
        %s120 = smul.addr %s119, 4
        %s121 = scalar_lea.vmem %s1, %s120
      $region16: #{forward.5} parent=11 // pred_fallthru
        _
    $region12: #{forward.5} parent=5 // pred_fallthru
      _
    %p122 = scmp.lt.s32.totalorder %s8, 2
    // Predicated region
    $region17: #{forward.5} parent=5 // pred_check
      %p123 = pneg %p122
    $region18: #{forward.5} parent=5 // pred_check_branch
      %125 = sbr.rel (%p123) target = $region20
    $region19: #{forward.5} parent=5 // pred_region
      // Predicated region
      $region21: #{forward.5} parent=19 // pred_check
        %p126 = pneg %p40
      $region22: #{forward.5} parent=19 // pred_check_branch
        %128 = sbr.rel (%p126) target = $region24
      $region23: #{forward.5} parent=19 // pred_region
        %s129 = smul.u32 2, %s15
        %p130 = scmp.lt.s32.totalorder %s129, 3
        %s131 = scalar_select %p130, %s129, 3
        %s132 = smul.addr %s131, 32
        %s133 = smul.addr %s132, 4
        %s134 = scalar_lea.vmem %s0, %s133
        %s135 = smul.u32 2, %s15
      $region24: #{forward.5} parent=19 // pred_fallthru
        _
    $region20: #{forward.5} parent=5 // pred_fallthru
      _
    %p136 = scmp.le.s32.totalorder 1, %s8
    %p137 = scmp.lt.s32.totalorder %s8, 3
    %p138 = pnand %p136, %p137
    %p139 = pneg %p138
    // Predicated region
    $region25: #{forward.5} parent=5 // pred_check
      _
    $region26: #{forward.5} parent=5 // pred_check_branch
      %141 = sbr.rel (%p138) target = $region28
    $region27: #{forward.5} parent=5 // pred_region
      %s142 = ssub.s32 %s8, 1
      %s143 = smul.u32 2, %s17
      %p144 = scmp.lt.s32.totalorder %s143, 3
      %s145 = scalar_select %p144, %s143, 3
      %s146 = smul.addr %s145, 32
      %s147 = smul.addr %s146, 4
      %s148 = scalar_lea.vmem %s0, %s147
      %p149 = pneg %p46
      %p150 = pneg %p43
      %p151 = scmp.lt.s32.totalorder %s18, 0
      %s152 = scalar_select %p151, %s18, 0
      %s153 = smul.addr %s152, 4
      %s154 = scalar_lea.vmem %s1, %s153
      %p155 = pneg %p72
      %p156 = pneg %p69
      %p157 = pneg %p100
      %p158 = pneg %p97
      %s159 = smul.u32 2, %s17
      %p160 = scmp.lt.s32.totalorder %s159, 3
      %s161 = scalar_select %p160, %s159, 3
      %p162 = scmp.lt.s32.totalorder %s18, 0
      %s163 = scalar_select %p162, %s18, 0
      %s164 = smul.addr %s161, 32
      %s165 = sadd.s32 %s163, %s164
      %s166 = smul.addr %s165, 4
      %s167 = scalar_lea.vmem %s2, %s166
      %s168 = smul.u32 2, %s17
      %p169 = scmp.lt.s32.totalorder %s168, 3
      %s170 = scalar_select %p169, %s168, 3
      %s171 = smul.addr %s170, 32
      %s172 = smul.addr %s171, 4
      %s173 = scalar_lea.vmem %s0, %s172
      %s174 = smul.u32 2, %s17
      %p175 = scmp.lt.s32.totalorder %s18, 0
      %s176 = scalar_select %p175, %s18, 0
      %s177 = smul.addr %s176, 4
      %s178 = scalar_lea.vmem %s1, %s177
      %s179 = smul.u32 2, %s17
      %p180 = scmp.lt.s32.totalorder %s179, 3
      %s181 = scalar_select %p180, %s179, 3
      %p182 = scmp.lt.s32.totalorder %s18, 0
      %s183 = scalar_select %p182, %s18, 0
      %s184 = smul.addr %s181, 32
      %s185 = sadd.s32 %s183, %s184
      %s186 = smul.addr %s185, 4
      %s187 = scalar_lea.vmem %s2, %s186
      %s188 = smul.u32 2, %s17
      %v190 = vld [vmem:[%s173] sm:$0xf]
      %v191 = vld [vmem:[%s173 + $0x4] sm:$0xf]
      %v192 = vld [vmem:[%s173 + $0x8] sm:$0xf]
      %v193 = vld [vmem:[%s173 + $0xc] sm:$0xf]
      %v194 = vld [vmem:[%s173 + $0x10] sm:$0xf]
      %v195 = vld [vmem:[%s173 + $0x14] sm:$0xf]
      %v196 = vld [vmem:[%s173 + $0x18] sm:$0xf]
      %v197 = vld [vmem:[%s173 + $0x1c] sm:$0xf]
      %v198 = vld [vmem:[%s173 + $0x20] sm:$0xf]
      %v199 = vld [vmem:[%s173 + $0x24] sm:$0xf]
      %v200 = vld [vmem:[%s173 + $0x28] sm:$0xf]
      %v201 = vld [vmem:[%s173 + $0x2c] sm:$0xf]
      %v202 = vld [vmem:[%s173 + $0x30] sm:$0xf]
      %v203 = vld [vmem:[%s173 + $0x34] sm:$0xf]
      %v204 = vld [vmem:[%s173 + $0x38] sm:$0xf]
      %v205 = vld [vmem:[%s173 + $0x3c] sm:$0xf]
      %v206 = vld [vmem:[%s173 + $0x40] sm:$0xf]
      %v207 = vld [vmem:[%s173 + $0x44] sm:$0xf]
      %v208 = vld [vmem:[%s173 + $0x48] sm:$0xf]
      %v209 = vld [vmem:[%s173 + $0x4c] sm:$0xf]
      %v210 = vld [vmem:[%s173 + $0x50] sm:$0xf]
      %v211 = vld [vmem:[%s173 + $0x54] sm:$0xf]
      %v212 = vld [vmem:[%s173 + $0x58] sm:$0xf]
      %v213 = vld [vmem:[%s173 + $0x5c] sm:$0xf]
      %v214 = vld [vmem:[%s173 + $0x60] sm:$0xf]
      %v215 = vld [vmem:[%s173 + $0x64] sm:$0xf]
      %v216 = vld [vmem:[%s173 + $0x68] sm:$0xf]
      %v217 = vld [vmem:[%s173 + $0x6c] sm:$0xf]
      %v218 = vld [vmem:[%s173 + $0x70] sm:$0xf]
      %v219 = vld [vmem:[%s173 + $0x74] sm:$0xf]
      %v220 = vld [vmem:[%s173 + $0x78] sm:$0xf]
      %v221 = vld [vmem:[%s173 + $0x7c] sm:$0xf]
      %v222 = vld [vmem:[%s173 + $0x80] sm:$0xf]
      %v223 = vld [vmem:[%s173 + $0x84] sm:$0xf]
      %v224 = vld [vmem:[%s173 + $0x88] sm:$0xf]
      %v225 = vld [vmem:[%s173 + $0x8c] sm:$0xf]
      %v226 = vld [vmem:[%s173 + $0x90] sm:$0xf]
      %v227 = vld [vmem:[%s173 + $0x94] sm:$0xf]
      %v228 = vld [vmem:[%s173 + $0x98] sm:$0xf]
      %v229 = vld [vmem:[%s173 + $0x9c] sm:$0xf]
      %v230 = vld [vmem:[%s173 + $0xa0] sm:$0xf]
      %v231 = vld [vmem:[%s173 + $0xa4] sm:$0xf]
      %v232 = vld [vmem:[%s173 + $0xa8] sm:$0xf]
      %v233 = vld [vmem:[%s173 + $0xac] sm:$0xf]
      %v234 = vld [vmem:[%s173 + $0xb0] sm:$0xf]
      %v235 = vld [vmem:[%s173 + $0xb4] sm:$0xf]
      %v236 = vld [vmem:[%s173 + $0xb8] sm:$0xf]
      %v237 = vld [vmem:[%s173 + $0xbc] sm:$0xf]
      %v238 = vld [vmem:[%s173 + $0xc0] sm:$0xf]
      %v239 = vld [vmem:[%s173 + $0xc4] sm:$0xf]
      %v240 = vld [vmem:[%s173 + $0xc8] sm:$0xf]
      %v241 = vld [vmem:[%s173 + $0xcc] sm:$0xf]
      %v242 = vld [vmem:[%s173 + $0xd0] sm:$0xf]
      %v243 = vld [vmem:[%s173 + $0xd4] sm:$0xf]
      %v244 = vld [vmem:[%s173 + $0xd8] sm:$0xf]
      %v245 = vld [vmem:[%s173 + $0xdc] sm:$0xf]
      %v246 = vld [vmem:[%s173 + $0xe0] sm:$0xf]
      %v247 = vld [vmem:[%s173 + $0xe4] sm:$0xf]
      %v248 = vld [vmem:[%s173 + $0xe8] sm:$0xf]
      %v249 = vld [vmem:[%s173 + $0xec] sm:$0xf]
      %v250 = vld [vmem:[%s173 + $0xf0] sm:$0xf]
      %v251 = vld [vmem:[%s173 + $0xf4] sm:$0xf]
      %v252 = vld [vmem:[%s173 + $0xf8] sm:$0xf]
      %v253 = vld [vmem:[%s173 + $0xfc] sm:$0xf]
      %v254 = vld [vmem:[%s178] sm:$0xf]
      %v255 = vld [vmem:[%s178 + $0x4] sm:$0xf]
      %v256 = vld [vmem:[%s178 + $0x8] sm:$0xf]
      %v257 = vld [vmem:[%s178 + $0xc] sm:$0xf]
      %v258 = vld [vmem:[%s178 + $0x10] sm:$0xf]
      %v259 = vld [vmem:[%s178 + $0x14] sm:$0xf]
      %v260 = vld [vmem:[%s178 + $0x18] sm:$0xf]
      %v261 = vld [vmem:[%s178 + $0x1c] sm:$0xf]
      %v262 = vld [vmem:[%s178 + $0x20] sm:$0xf]
      %v263 = vld [vmem:[%s178 + $0x24] sm:$0xf]
      %v264 = vld [vmem:[%s178 + $0x28] sm:$0xf]
      %v265 = vld [vmem:[%s178 + $0x2c] sm:$0xf]
      %v266 = vld [vmem:[%s178 + $0x30] sm:$0xf]
      %v267 = vld [vmem:[%s178 + $0x34] sm:$0xf]
      %v268 = vld [vmem:[%s178 + $0x38] sm:$0xf]
      %v269 = vld [vmem:[%s178 + $0x3c] sm:$0xf]
      %v334 = vunpack.c.l.b16 %v190
      %v335 = vunpack.c.l.b16 %v191
      %v336 = vunpack.c.l.b16 %v192
      %v337 = vunpack.c.l.b16 %v193
      %v338 = vunpack.c.l.b16 %v194
      %v339 = vunpack.c.l.b16 %v195
      %v340 = vunpack.c.l.b16 %v196
      %v341 = vunpack.c.l.b16 %v197
      %v342 = vunpack.c.l.b16 %v198
      %v343 = vunpack.c.l.b16 %v199
      %v344 = vunpack.c.l.b16 %v200
      %v345 = vunpack.c.l.b16 %v201
      %v346 = vunpack.c.l.b16 %v202
      %v347 = vunpack.c.l.b16 %v203
      %v348 = vunpack.c.l.b16 %v204
      %v349 = vunpack.c.l.b16 %v205
      %v350 = vunpack.c.l.b16 %v206
      %v351 = vunpack.c.l.b16 %v207
      %v352 = vunpack.c.l.b16 %v208
      %v353 = vunpack.c.l.b16 %v209
      %v354 = vunpack.c.l.b16 %v210
      %v355 = vunpack.c.l.b16 %v211
      %v356 = vunpack.c.l.b16 %v212
      %v357 = vunpack.c.l.b16 %v213
      %v358 = vunpack.c.l.b16 %v214
      %v359 = vunpack.c.l.b16 %v215
      %v360 = vunpack.c.l.b16 %v216
      %v361 = vunpack.c.l.b16 %v217
      %v362 = vunpack.c.l.b16 %v218
      %v363 = vunpack.c.l.b16 %v219
      %v364 = vunpack.c.l.b16 %v220
      %v365 = vunpack.c.l.b16 %v221
      %v366 = vunpack.c.l.b16 %v222
      %v367 = vunpack.c.l.b16 %v223
      %v368 = vunpack.c.l.b16 %v224
      %v369 = vunpack.c.l.b16 %v225
      %v370 = vunpack.c.l.b16 %v226
      %v371 = vunpack.c.l.b16 %v227
      %v372 = vunpack.c.l.b16 %v228
      %v373 = vunpack.c.l.b16 %v229
      %v374 = vunpack.c.l.b16 %v230
      %v375 = vunpack.c.l.b16 %v231
      %v376 = vunpack.c.l.b16 %v232
      %v377 = vunpack.c.l.b16 %v233
      %v378 = vunpack.c.l.b16 %v234
      %v379 = vunpack.c.l.b16 %v235
      %v380 = vunpack.c.l.b16 %v236
      %v381 = vunpack.c.l.b16 %v237
      %v382 = vunpack.c.l.b16 %v238
      %v383 = vunpack.c.l.b16 %v239
      %v384 = vunpack.c.l.b16 %v240
      %v385 = vunpack.c.l.b16 %v241
      %v386 = vunpack.c.l.b16 %v242
      %v387 = vunpack.c.l.b16 %v243
      %v388 = vunpack.c.l.b16 %v244
      %v389 = vunpack.c.l.b16 %v245
      %v390 = vunpack.c.l.b16 %v246
      %v391 = vunpack.c.l.b16 %v247
      %v392 = vunpack.c.l.b16 %v248
      %v393 = vunpack.c.l.b16 %v249
      %v394 = vunpack.c.l.b16 %v250
      %v395 = vunpack.c.l.b16 %v251
      %v396 = vunpack.c.l.b16 %v252
      %v397 = vunpack.c.l.b16 %v253
      %v398 = vpack.c.b16 %v335, %v334
      %v399 = vpack.c.b16 %v337, %v336
      %v400 = vpack.c.b16 %v339, %v338
      %v401 = vpack.c.b16 %v341, %v340
      %v402 = vpack.c.b16 %v343, %v342
      %v403 = vpack.c.b16 %v345, %v344
      %v404 = vpack.c.b16 %v347, %v346
      %v405 = vpack.c.b16 %v349, %v348
      %v406 = vpack.c.b16 %v351, %v350
      %v407 = vpack.c.b16 %v353, %v352
      %v408 = vpack.c.b16 %v355, %v354
      %v409 = vpack.c.b16 %v357, %v356
      %v410 = vpack.c.b16 %v359, %v358
      %v411 = vpack.c.b16 %v361, %v360
      %v412 = vpack.c.b16 %v363, %v362
      %v413 = vpack.c.b16 %v365, %v364
      %v414 = vpack.c.b16 %v367, %v366
      %v415 = vpack.c.b16 %v369, %v368
      %v416 = vpack.c.b16 %v371, %v370
      %v417 = vpack.c.b16 %v373, %v372
      %v418 = vpack.c.b16 %v375, %v374
      %v419 = vpack.c.b16 %v377, %v376
      %v420 = vpack.c.b16 %v379, %v378
      %v421 = vpack.c.b16 %v381, %v380
      %v422 = vpack.c.b16 %v383, %v382
      %v423 = vpack.c.b16 %v385, %v384
      %v424 = vpack.c.b16 %v387, %v386
      %v425 = vpack.c.b16 %v389, %v388
      %v426 = vpack.c.b16 %v391, %v390
      %v427 = vpack.c.b16 %v393, %v392
      %v428 = vpack.c.b16 %v395, %v394
      %v429 = vpack.c.b16 %v397, %v396
      %v478 = vunpack.c.l.b16 %v254
      %v479 = vunpack.c.l.b16 %v255
      %v480 = vunpack.c.l.b16 %v256
      %v481 = vunpack.c.l.b16 %v257
      %v482 = vunpack.c.l.b16 %v258
      %v483 = vunpack.c.l.b16 %v259
      %v484 = vunpack.c.l.b16 %v260
      %v485 = vunpack.c.l.b16 %v261
      %v486 = vunpack.c.l.b16 %v262
      %v487 = vunpack.c.l.b16 %v263
      %v488 = vunpack.c.l.b16 %v264
      %v489 = vunpack.c.l.b16 %v265
      %v490 = vunpack.c.l.b16 %v266
      %v491 = vunpack.c.l.b16 %v267
      %v492 = vunpack.c.l.b16 %v268
      %v493 = vunpack.c.l.b16 %v269
      %v494 = vpack.c.b16 %v479, %v478
      %v495 = vpack.c.b16 %v481, %v480
      %v496 = vpack.c.b16 %v483, %v482
      %v497 = vpack.c.b16 %v485, %v484
      %v498 = vpack.c.b16 %v487, %v486
      %v499 = vpack.c.b16 %v489, %v488
      %v500 = vpack.c.b16 %v491, %v490
      %v501 = vpack.c.b16 %v493, %v492
      %510 = vmatprep.subr.bf16.mxu0 0
      %511 = vmatpush1.bf16.msra.mxu0 %v494
      %512 = vmatprep.subr.bf16.mxu0 0
      %513 = vmatpush1.bf16.msra.mxu0 %v495
      %514 = vmatprep.subr.bf16.mxu0 0
      %515 = vmatpush1.bf16.msra.mxu0 %v496
      %516 = vmatprep.subr.bf16.mxu0 0
      %517 = vmatpush1.bf16.msra.mxu0 %v497
      %518 = vmatprep.subr.bf16.mxu0 0
      %519 = vmatpush1.bf16.msra.mxu0 %v498
      %520 = vmatprep.subr.bf16.mxu0 0
      %521 = vmatpush1.bf16.msra.mxu0 %v499
      %522 = vmatprep.subr.bf16.mxu0 0
      %523 = vmatpush1.bf16.msra.mxu0 %v500
      %524 = vmatprep.subr.bf16.mxu0 0
      %525 = vmatpush1.bf16.msra.mxu0 %v501
      %526 = vmatprep.subr.bf16.mxu0 0
      %527 = vmatpush1.bf16.msra.mxu0 0
      %528 = vmatprep.subr.bf16.mxu0 0
      %529 = vmatpush1.bf16.msra.mxu0 0
      %530 = vmatprep.subr.bf16.mxu0 0
      %531 = vmatpush1.bf16.msra.mxu0 0
      %532 = vmatprep.subr.bf16.mxu0 0
      %533 = vmatpush1.bf16.msra.mxu0 0
      %534 = vmatprep.subr.bf16.mxu0 0
      %535 = vmatpush1.bf16.msra.mxu0 0
      %536 = vmatprep.subr.bf16.mxu0 0
      %537 = vmatpush1.bf16.msra.mxu0 0
      %538 = vmatprep.subr.bf16.mxu0 0
      %539 = vmatpush1.bf16.msra.mxu0 0
      %540 = vmatprep.subr.bf16.mxu0 0
      %541 = vmatpush1.bf16.msra.mxu0 0
      %542 = vmatprep.mubr.bf16.mxu0 0
      %543 = vmatmul.mubr.bf16.gmra.mrb[0].mxu0 %v398
      %v544 = vpop.f32.mrb[0].mxu0
      %v545 = vadd.f32 0.0, %v544
      %v546 = vpop.f32.mrb[0].mxu0
      %v547 = vpop.f32.mrb[0].mxu0
      %v548 = vadd.f32 0.0, %v547
      %v549 = vpop.f32.mrb[0].mxu0
      %550 = vmatprep.mubr.bf16.mxu0 0
      %551 = vmatmul.mubr.bf16.gmra.mrb[0].mxu0 %v399
      %v552 = vpop.f32.mrb[0].mxu0
      %v553 = vadd.f32 0.0, %v552
      %v554 = vpop.f32.mrb[0].mxu0
      %v555 = vpop.f32.mrb[0].mxu0
      %v556 = vadd.f32 0.0, %v555
      %v557 = vpop.f32.mrb[0].mxu0
      %558 = vmatprep.mubr.bf16.mxu0 0
      %559 = vmatmul.mubr.bf16.gmra.mrb[0].mxu0 %v400
      %v560 = vpop.f32.mrb[0].mxu0
      %v561 = vadd.f32 0.0, %v560
      %v562 = vpop.f32.mrb[0].mxu0
      %v563 = vpop.f32.mrb[0].mxu0
      %v564 = vadd.f32 0.0, %v563
      %v565 = vpop.f32.mrb[0].mxu0
      %566 = vmatprep.mubr.bf16.mxu0 0
      %567 = vmatmul.mubr.bf16.gmra.mrb[0].mxu0 %v401
      %v568 = vpop.f32.mrb[0].mxu0
      %v569 = vadd.f32 0.0, %v568
      %v570 = vpop.f32.mrb[0].mxu0
      %v571 = vpop.f32.mrb[0].mxu0
      %v572 = vadd.f32 0.0, %v571
      %v573 = vpop.f32.mrb[0].mxu0
      %574 = vmatprep.mubr.bf16.mxu0 0
      %575 = vmatmul.mubr.bf16.gmra.mrb[0].mxu0 %v402
      %v576 = vpop.f32.mrb[0].mxu0
      %v577 = vadd.f32 0.0, %v576
      %v578 = vpop.f32.mrb[0].mxu0
      %v579 = vpop.f32.mrb[0].mxu0
      %v580 = vadd.f32 0.0, %v579
      %v581 = vpop.f32.mrb[0].mxu0
      %582 = vmatprep.mubr.bf16.mxu0 0
      %583 = vmatmul.mubr.bf16.gmra.mrb[0].mxu0 %v403
      %v584 = vpop.f32.mrb[0].mxu0
      %v585 = vadd.f32 0.0, %v584
      %v586 = vpop.f32.mrb[0].mxu0
      %v587 = vpop.f32.mrb[0].mxu0
      %v588 = vadd.f32 0.0, %v587
      %v589 = vpop.f32.mrb[0].mxu0
      %590 = vmatprep.mubr.bf16.mxu0 0
      %591 = vmatmul.mubr.bf16.gmra.mrb[0].mxu0 %v404
      %v592 = vpop.f32.mrb[0].mxu0
      %v593 = vadd.f32 0.0, %v592
      %v594 = vpop.f32.mrb[0].mxu0
      %v595 = vpop.f32.mrb[0].mxu0
      %v596 = vadd.f32 0.0, %v595
      %v597 = vpop.f32.mrb[0].mxu0
      %598 = vmatprep.mubr.bf16.mxu0 0
      %599 = vmatmul.mubr.bf16.gmra.mrb[0].mxu0 %v405
      %v600 = vpop.f32.mrb[0].mxu0
      %v601 = vadd.f32 0.0, %v600
      %v602 = vpop.f32.mrb[0].mxu0
      %v603 = vpop.f32.mrb[0].mxu0
      %v604 = vadd.f32 0.0, %v603
      %v605 = vpop.f32.mrb[0].mxu0
      %606 = vmatprep.mubr.bf16.mxu0 0
      %607 = vmatmul.mubr.bf16.gmra.mrb[0].mxu0 %v406
      %v608 = vpop.f32.mrb[0].mxu0
      %v609 = vadd.f32 0.0, %v608
      %v610 = vpop.f32.mrb[0].mxu0
      %v611 = vpop.f32.mrb[0].mxu0
      %v612 = vadd.f32 0.0, %v611
      %v613 = vpop.f32.mrb[0].mxu0
      %614 = vmatprep.mubr.bf16.mxu0 0
      %615 = vmatmul.mubr.bf16.gmra.mrb[0].mxu0 %v407
      %v616 = vpop.f32.mrb[0].mxu0
      %v617 = vadd.f32 0.0, %v616
      %v618 = vpop.f32.mrb[0].mxu0
      %v619 = vpop.f32.mrb[0].mxu0
      %v620 = vadd.f32 0.0, %v619
      %v621 = vpop.f32.mrb[0].mxu0
      %622 = vmatprep.mubr.bf16.mxu0 0
      %623 = vmatmul.mubr.bf16.gmra.mrb[0].mxu0 %v408
      %v624 = vpop.f32.mrb[0].mxu0
      %v625 = vadd.f32 0.0, %v624
      %v626 = vpop.f32.mrb[0].mxu0
      %v627 = vpop.f32.mrb[0].mxu0
      %v628 = vadd.f32 0.0, %v627
      %v629 = vpop.f32.mrb[0].mxu0
      %630 = vmatprep.mubr.bf16.mxu0 0
      %631 = vmatmul.mubr.bf16.gmra.mrb[0].mxu0 %v409
      %v632 = vpop.f32.mrb[0].mxu0
      %v633 = vadd.f32 0.0, %v632
      %v634 = vpop.f32.mrb[0].mxu0
      %v635 = vpop.f32.mrb[0].mxu0
      %v636 = vadd.f32 0.0, %v635
      %v637 = vpop.f32.mrb[0].mxu0
      %638 = vmatprep.mubr.bf16.mxu0 0
      %639 = vmatmul.mubr.bf16.gmra.mrb[0].mxu0 %v410
      %v640 = vpop.f32.mrb[0].mxu0
      %v641 = vadd.f32 0.0, %v640
      %v642 = vpop.f32.mrb[0].mxu0
      %v643 = vpop.f32.mrb[0].mxu0
      %v644 = vadd.f32 0.0, %v643
      %v645 = vpop.f32.mrb[0].mxu0
      %646 = vmatprep.mubr.bf16.mxu0 0
      %647 = vmatmul.mubr.bf16.gmra.mrb[0].mxu0 %v411
      %v648 = vpop.f32.mrb[0].mxu0
      %v649 = vadd.f32 0.0, %v648
      %v650 = vpop.f32.mrb[0].mxu0
      %v651 = vpop.f32.mrb[0].mxu0
      %v652 = vadd.f32 0.0, %v651
      %v653 = vpop.f32.mrb[0].mxu0
      %654 = vmatprep.mubr.bf16.mxu0 0
      %655 = vmatmul.mubr.bf16.gmra.mrb[0].mxu0 %v412
      %v656 = vpop.f32.mrb[0].mxu0
      %v657 = vadd.f32 0.0, %v656
      %v658 = vpop.f32.mrb[0].mxu0
      %v659 = vpop.f32.mrb[0].mxu0
      %v660 = vadd.f32 0.0, %v659
      %v661 = vpop.f32.mrb[0].mxu0
      %662 = vmatprep.mubr.bf16.mxu0 0
      %663 = vmatmul.mubr.bf16.gmra.mrb[0].mxu0 %v413
      %v664 = vpop.f32.mrb[0].mxu0
      %v665 = vadd.f32 0.0, %v664
      %v666 = vpop.f32.mrb[0].mxu0
      %v667 = vpop.f32.mrb[0].mxu0
      %v668 = vadd.f32 0.0, %v667
      %v669 = vpop.f32.mrb[0].mxu0
      %670 = vmatprep.mubr.bf16.mxu0 0
      %671 = vmatmul.mubr.bf16.gmra.mrb[0].mxu0 %v414
      %v672 = vpop.f32.mrb[0].mxu0
      %v673 = vadd.f32 0.0, %v672
      %v674 = vpop.f32.mrb[0].mxu0
      %v675 = vpop.f32.mrb[0].mxu0
      %v676 = vadd.f32 0.0, %v675
      %v677 = vpop.f32.mrb[0].mxu0
      %678 = vmatprep.mubr.bf16.mxu0 0
      %679 = vmatmul.mubr.bf16.gmra.mrb[0].mxu0 %v415
      %v680 = vpop.f32.mrb[0].mxu0
      %v681 = vadd.f32 0.0, %v680
      %v682 = vpop.f32.mrb[0].mxu0
      %v683 = vpop.f32.mrb[0].mxu0
      %v684 = vadd.f32 0.0, %v683
      %v685 = vpop.f32.mrb[0].mxu0
      %686 = vmatprep.mubr.bf16.mxu0 0
      %687 = vmatmul.mubr.bf16.gmra.mrb[0].mxu0 %v416
      %v688 = vpop.f32.mrb[0].mxu0
      %v689 = vadd.f32 0.0, %v688
      %v690 = vpop.f32.mrb[0].mxu0
      %v691 = vpop.f32.mrb[0].mxu0
      %v692 = vadd.f32 0.0, %v691
      %v693 = vpop.f32.mrb[0].mxu0
      %694 = vmatprep.mubr.bf16.mxu0 0
      %695 = vmatmul.mubr.bf16.gmra.mrb[0].mxu0 %v417
      %v696 = vpop.f32.mrb[0].mxu0
      %v697 = vadd.f32 0.0, %v696
      %v698 = vpop.f32.mrb[0].mxu0
      %v699 = vpop.f32.mrb[0].mxu0
      %v700 = vadd.f32 0.0, %v699
      %v701 = vpop.f32.mrb[0].mxu0
      %702 = vmatprep.mubr.bf16.mxu0 0
      %703 = vmatmul.mubr.bf16.gmra.mrb[0].mxu0 %v418
      %v704 = vpop.f32.mrb[0].mxu0
      %v705 = vadd.f32 0.0, %v704
      %v706 = vpop.f32.mrb[0].mxu0
      %v707 = vpop.f32.mrb[0].mxu0
      %v708 = vadd.f32 0.0, %v707
      %v709 = vpop.f32.mrb[0].mxu0
      %710 = vmatprep.mubr.bf16.mxu0 0
      %711 = vmatmul.mubr.bf16.gmra.mrb[0].mxu0 %v419
      %v712 = vpop.f32.mrb[0].mxu0
      %v713 = vadd.f32 0.0, %v712
      %v714 = vpop.f32.mrb[0].mxu0
      %v715 = vpop.f32.mrb[0].mxu0
      %v716 = vadd.f32 0.0, %v715
      %v717 = vpop.f32.mrb[0].mxu0
      %718 = vmatprep.mubr.bf16.mxu0 0
      %719 = vmatmul.mubr.bf16.gmra.mrb[0].mxu0 %v420
      %v720 = vpop.f32.mrb[0].mxu0
      %v721 = vadd.f32 0.0, %v720
      %v722 = vpop.f32.mrb[0].mxu0
      %v723 = vpop.f32.mrb[0].mxu0
      %v724 = vadd.f32 0.0, %v723
      %v725 = vpop.f32.mrb[0].mxu0
      %726 = vmatprep.mubr.bf16.mxu0 0
      %727 = vmatmul.mubr.bf16.gmra.mrb[0].mxu0 %v421
      %v728 = vpop.f32.mrb[0].mxu0
      %v729 = vadd.f32 0.0, %v728
      %v730 = vpop.f32.mrb[0].mxu0
      %v731 = vpop.f32.mrb[0].mxu0
      %v732 = vadd.f32 0.0, %v731
      %v733 = vpop.f32.mrb[0].mxu0
      %734 = vmatprep.mubr.bf16.mxu0 0
      %735 = vmatmul.mubr.bf16.gmra.mrb[0].mxu0 %v422
      %v736 = vpop.f32.mrb[0].mxu0
      %v737 = vadd.f32 0.0, %v736
      %v738 = vpop.f32.mrb[0].mxu0
      %v739 = vpop.f32.mrb[0].mxu0
      %v740 = vadd.f32 0.0, %v739
      %v741 = vpop.f32.mrb[0].mxu0
      %742 = vmatprep.mubr.bf16.mxu0 0
      %743 = vmatmul.mubr.bf16.gmra.mrb[0].mxu0 %v423
      %v744 = vpop.f32.mrb[0].mxu0
      %v745 = vadd.f32 0.0, %v744
      %v746 = vpop.f32.mrb[0].mxu0
      %v747 = vpop.f32.mrb[0].mxu0
      %v748 = vadd.f32 0.0, %v747
      %v749 = vpop.f32.mrb[0].mxu0
      %750 = vmatprep.mubr.bf16.mxu0 0
      %751 = vmatmul.mubr.bf16.gmra.mrb[0].mxu0 %v424
      %v752 = vpop.f32.mrb[0].mxu0
      %v753 = vadd.f32 0.0, %v752
      %v754 = vpop.f32.mrb[0].mxu0
      %v755 = vpop.f32.mrb[0].mxu0
      %v756 = vadd.f32 0.0, %v755
      %v757 = vpop.f32.mrb[0].mxu0
      %758 = vmatprep.mubr.bf16.mxu0 0
      %759 = vmatmul.mubr.bf16.gmra.mrb[0].mxu0 %v425
      %v760 = vpop.f32.mrb[0].mxu0
      %v761 = vadd.f32 0.0, %v760
      %v762 = vpop.f32.mrb[0].mxu0
      %v763 = vpop.f32.mrb[0].mxu0
      %v764 = vadd.f32 0.0, %v763
      %v765 = vpop.f32.mrb[0].mxu0
      %766 = vmatprep.mubr.bf16.mxu0 0
      %767 = vmatmul.mubr.bf16.gmra.mrb[0].mxu0 %v426
      %v768 = vpop.f32.mrb[0].mxu0
      %v769 = vadd.f32 0.0, %v768
      %v770 = vpop.f32.mrb[0].mxu0
      %v771 = vpop.f32.mrb[0].mxu0
      %v772 = vadd.f32 0.0, %v771
      %v773 = vpop.f32.mrb[0].mxu0
      %774 = vmatprep.mubr.bf16.mxu0 0
      %775 = vmatmul.mubr.bf16.gmra.mrb[0].mxu0 %v427
      %v776 = vpop.f32.mrb[0].mxu0
      %v777 = vadd.f32 0.0, %v776
      %v778 = vpop.f32.mrb[0].mxu0
      %v779 = vpop.f32.mrb[0].mxu0
      %v780 = vadd.f32 0.0, %v779
      %v781 = vpop.f32.mrb[0].mxu0
      %782 = vmatprep.mubr.bf16.mxu0 0
      %783 = vmatmul.mubr.bf16.gmra.mrb[0].mxu0 %v428
      %v784 = vpop.f32.mrb[0].mxu0
      %v785 = vadd.f32 0.0, %v784
      %v786 = vpop.f32.mrb[0].mxu0
      %v787 = vpop.f32.mrb[0].mxu0
      %v788 = vadd.f32 0.0, %v787
      %v789 = vpop.f32.mrb[0].mxu0
      %790 = vmatprep.mubr.bf16.mxu0 0
      %791 = vmatmul.mubr.bf16.gmra.mrb[0].mxu0 %v429
      %v792 = vpop.f32.mrb[0].mxu0
      %v793 = vadd.f32 0.0, %v792
      %v794 = vpop.f32.mrb[0].mxu0
      %v795 = vpop.f32.mrb[0].mxu0
      %v796 = vadd.f32 0.0, %v795
      %v797 = vpop.f32.mrb[0].mxu0
      %798 = vdwg.mxu0
      %v799 = vadd.f32 %v545, %v548
      %v800 = vadd.f32 %v799, %v553
      %v801 = vadd.f32 %v800, %v556
      %v802 = vadd.f32 %v801, %v561
      %v803 = vadd.f32 %v802, %v564
      %v804 = vadd.f32 %v803, %v569
      %v805 = vadd.f32 %v804, %v572
      %v806 = vadd.f32 %v805, %v577
      %v807 = vadd.f32 %v806, %v580
      %v808 = vadd.f32 %v807, %v585
      %v809 = vadd.f32 %v808, %v588
      %v810 = vadd.f32 %v809, %v593
      %v811 = vadd.f32 %v810, %v596
      %v812 = vadd.f32 %v811, %v601
      %v813 = vadd.f32 %v812, %v604
      %v814 = vadd.f32 %v813, %v609
      %v815 = vadd.f32 %v814, %v612
      %v816 = vadd.f32 %v815, %v617
      %v817 = vadd.f32 %v816, %v620
      %v818 = vadd.f32 %v817, %v625
      %v819 = vadd.f32 %v818, %v628
      %v820 = vadd.f32 %v819, %v633
      %v821 = vadd.f32 %v820, %v636
      %v822 = vadd.f32 %v821, %v641
      %v823 = vadd.f32 %v822, %v644
      %v824 = vadd.f32 %v823, %v649
      %v825 = vadd.f32 %v824, %v652
      %v826 = vadd.f32 %v825, %v657
      %v827 = vadd.f32 %v826, %v660
      %v828 = vadd.f32 %v827, %v665
      %v829 = vadd.f32 %v828, %v668
      %v830 = vrot.slane %v829, 4
      %v831 = vadd.f32 %v829, %v830
      %v832 = vrot.slane %v831, 2
      %v833 = vadd.f32 %v831, %v832
      %v834 = vrot.slane %v833, 1
      %v835 = vadd.f32 %v833, %v834
      %v836 = vrcp.pop 256.0
      %v837 = vmul.f32 %v835, %v836
      %v838 = vsub.f32 %v545, %v837
      %v839 = vsub.f32 %v548, %v837
      %v840 = vsub.f32 %v553, %v837
      %v841 = vsub.f32 %v556, %v837
      %v842 = vsub.f32 %v561, %v837
      %v843 = vsub.f32 %v564, %v837
      %v844 = vsub.f32 %v569, %v837
      %v845 = vsub.f32 %v572, %v837
      %v846 = vsub.f32 %v577, %v837
      %v847 = vsub.f32 %v580, %v837
      %v848 = vsub.f32 %v585, %v837
      %v849 = vsub.f32 %v588, %v837
      %v850 = vsub.f32 %v593, %v837
      %v851 = vsub.f32 %v596, %v837
      %v852 = vsub.f32 %v601, %v837
      %v853 = vsub.f32 %v604, %v837
      %v854 = vsub.f32 %v609, %v837
      %v855 = vsub.f32 %v612, %v837
      %v856 = vsub.f32 %v617, %v837
      %v857 = vsub.f32 %v620, %v837
      %v858 = vsub.f32 %v625, %v837
      %v859 = vsub.f32 %v628, %v837
      %v860 = vsub.f32 %v633, %v837
      %v861 = vsub.f32 %v636, %v837
      %v862 = vsub.f32 %v641, %v837
      %v863 = vsub.f32 %v644, %v837
      %v864 = vsub.f32 %v649, %v837
      %v865 = vsub.f32 %v652, %v837
      %v866 = vsub.f32 %v657, %v837
      %v867 = vsub.f32 %v660, %v837
      %v868 = vsub.f32 %v665, %v837
      %v869 = vsub.f32 %v668, %v837
      %v870 = vmul.f32 %v838, %v838
      %v871 = vmul.f32 %v839, %v839
      %v872 = vmul.f32 %v840, %v840
      %v873 = vmul.f32 %v841, %v841
      %v874 = vmul.f32 %v842, %v842
      %v875 = vmul.f32 %v843, %v843
      %v876 = vmul.f32 %v844, %v844
      %v877 = vmul.f32 %v845, %v845
      %v878 = vmul.f32 %v846, %v846
      %v879 = vmul.f32 %v847, %v847
      %v880 = vmul.f32 %v848, %v848
      %v881 = vmul.f32 %v849, %v849
      %v882 = vmul.f32 %v850, %v850
      %v883 = vmul.f32 %v851, %v851
      %v884 = vmul.f32 %v852, %v852
      %v885 = vmul.f32 %v853, %v853
      %v886 = vmul.f32 %v854, %v854
      %v887 = vmul.f32 %v855, %v855
      %v888 = vmul.f32 %v856, %v856
      %v889 = vmul.f32 %v857, %v857
      %v890 = vmul.f32 %v858, %v858
      %v891 = vmul.f32 %v859, %v859
      %v892 = vmul.f32 %v860, %v860
      %v893 = vmul.f32 %v861, %v861
      %v894 = vmul.f32 %v862, %v862
      %v895 = vmul.f32 %v863, %v863
      %v896 = vmul.f32 %v864, %v864
      %v897 = vmul.f32 %v865, %v865
      %v898 = vmul.f32 %v866, %v866
      %v899 = vmul.f32 %v867, %v867
      %v900 = vmul.f32 %v868, %v868
      %v901 = vmul.f32 %v869, %v869
      %v902 = vadd.f32 %v870, %v871
      %v903 = vadd.f32 %v902, %v872
      %v904 = vadd.f32 %v903, %v873
      %v905 = vadd.f32 %v904, %v874
      %v906 = vadd.f32 %v905, %v875
      %v907 = vadd.f32 %v906, %v876
      %v908 = vadd.f32 %v907, %v877
      %v909 = vadd.f32 %v908, %v878
      %v910 = vadd.f32 %v909, %v879
      %v911 = vadd.f32 %v910, %v880
      %v912 = vadd.f32 %v911, %v881
      %v913 = vadd.f32 %v912, %v882
      %v914 = vadd.f32 %v913, %v883
      %v915 = vadd.f32 %v914, %v884
      %v916 = vadd.f32 %v915, %v885
      %v917 = vadd.f32 %v916, %v886
      %v918 = vadd.f32 %v917, %v887
      %v919 = vadd.f32 %v918, %v888
      %v920 = vadd.f32 %v919, %v889
      %v921 = vadd.f32 %v920, %v890
      %v922 = vadd.f32 %v921, %v891
      %v923 = vadd.f32 %v922, %v892
      %v924 = vadd.f32 %v923, %v893
      %v925 = vadd.f32 %v924, %v894
      %v926 = vadd.f32 %v925, %v895
      %v927 = vadd.f32 %v926, %v896
      %v928 = vadd.f32 %v927, %v897
      %v929 = vadd.f32 %v928, %v898
      %v930 = vadd.f32 %v929, %v899
      %v931 = vadd.f32 %v930, %v900
      %v932 = vadd.f32 %v931, %v901
      %v933 = vrot.slane %v932, 4
      %v934 = vadd.f32 %v932, %v933
      %v935 = vrot.slane %v934, 2
      %v936 = vadd.f32 %v934, %v935
      %v937 = vrot.slane %v936, 1
      %v938 = vadd.f32 %v936, %v937
      %v939 = vmul.f32 %v938, %v836
      %v940 = vadd.f32 %v939, 1e-05
      %v941 = vrsqrt.pop %v940
      %v942 = vmul.f32 %v838, %v941
      %v943 = vmul.f32 %v839, %v941
      %v944 = vmul.f32 %v840, %v941
      %v945 = vmul.f32 %v841, %v941
      %v946 = vmul.f32 %v842, %v941
      %v947 = vmul.f32 %v843, %v941
      %v948 = vmul.f32 %v844, %v941
      %v949 = vmul.f32 %v845, %v941
      %v950 = vmul.f32 %v846, %v941
      %v951 = vmul.f32 %v847, %v941
      %v952 = vmul.f32 %v848, %v941
      %v953 = vmul.f32 %v849, %v941
      %v954 = vmul.f32 %v850, %v941
      %v955 = vmul.f32 %v851, %v941
      %v956 = vmul.f32 %v852, %v941
      %v957 = vmul.f32 %v853, %v941
      %v958 = vmul.f32 %v854, %v941
      %v959 = vmul.f32 %v855, %v941
      %v960 = vmul.f32 %v856, %v941
      %v961 = vmul.f32 %v857, %v941
      %v962 = vmul.f32 %v858, %v941
      %v963 = vmul.f32 %v859, %v941
      %v964 = vmul.f32 %v860, %v941
      %v965 = vmul.f32 %v861, %v941
      %v966 = vmul.f32 %v862, %v941
      %v967 = vmul.f32 %v863, %v941
      %v968 = vmul.f32 %v864, %v941
      %v969 = vmul.f32 %v865, %v941
      %v970 = vmul.f32 %v866, %v941
      %v971 = vmul.f32 %v867, %v941
      %v972 = vmul.f32 %v868, %v941
      %v973 = vmul.f32 %v869, %v941
      %v974 = vmax.f32 %v942, 0.0
      %v975 = vmax.f32 %v943, 0.0
      %v976 = vmax.f32 %v944, 0.0
      %v977 = vmax.f32 %v945, 0.0
      %v978 = vmax.f32 %v946, 0.0
      %v979 = vmax.f32 %v947, 0.0
      %v980 = vmax.f32 %v948, 0.0
      %v981 = vmax.f32 %v949, 0.0
      %v982 = vmax.f32 %v950, 0.0
      %v983 = vmax.f32 %v951, 0.0
      %v984 = vmax.f32 %v952, 0.0
      %v985 = vmax.f32 %v953, 0.0
      %v986 = vmax.f32 %v954, 0.0
      %v987 = vmax.f32 %v955, 0.0
      %v988 = vmax.f32 %v956, 0.0
      %v989 = vmax.f32 %v957, 0.0
      %v990 = vmax.f32 %v958, 0.0
      %v991 = vmax.f32 %v959, 0.0
      %v992 = vmax.f32 %v960, 0.0
      %v993 = vmax.f32 %v961, 0.0
      %v994 = vmax.f32 %v962, 0.0
      %v995 = vmax.f32 %v963, 0.0
      %v996 = vmax.f32 %v964, 0.0
      %v997 = vmax.f32 %v965, 0.0
      %v998 = vmax.f32 %v966, 0.0
      %v999 = vmax.f32 %v967, 0.0
      %v1000 = vmax.f32 %v968, 0.0
      %v1001 = vmax.f32 %v969, 0.0
      %v1002 = vmax.f32 %v970, 0.0
      %v1003 = vmax.f32 %v971, 0.0
      %v1004 = vmax.f32 %v972, 0.0
      %v1005 = vmax.f32 %v973, 0.0
      %v1006 = vpack.c.bf16 %v975, %v974
      %v1007 = vpack.c.bf16 %v977, %v976
      %v1008 = vpack.c.bf16 %v979, %v978
      %v1009 = vpack.c.bf16 %v981, %v980
      %v1010 = vpack.c.bf16 %v983, %v982
      %v1011 = vpack.c.bf16 %v985, %v984
      %v1012 = vpack.c.bf16 %v987, %v986
      %v1013 = vpack.c.bf16 %v989, %v988
      %v1014 = vpack.c.bf16 %v991, %v990
      %v1015 = vpack.c.bf16 %v993, %v992
      %v1016 = vpack.c.bf16 %v995, %v994
      %v1017 = vpack.c.bf16 %v997, %v996
      %v1018 = vpack.c.bf16 %v999, %v998
      %v1019 = vpack.c.bf16 %v1001, %v1000
      %v1020 = vpack.c.bf16 %v1003, %v1002
      %v1021 = vpack.c.bf16 %v1005, %v1004
      %v1038 = vunpack.c.l.b16 %v1006
      %v1039 = vunpack.c.h.b16 %v1006
      %v1040 = vunpack.c.l.b16 %v1007
      %v1041 = vunpack.c.h.b16 %v1007
      %v1042 = vunpack.c.l.b16 %v1008
      %v1043 = vunpack.c.h.b16 %v1008
      %v1044 = vunpack.c.l.b16 %v1009
      %v1045 = vunpack.c.h.b16 %v1009
      %v1046 = vunpack.c.l.b16 %v1010
      %v1047 = vunpack.c.h.b16 %v1010
      %v1048 = vunpack.c.l.b16 %v1011
      %v1049 = vunpack.c.h.b16 %v1011
      %v1050 = vunpack.c.l.b16 %v1012
      %v1051 = vunpack.c.h.b16 %v1012
      %v1052 = vunpack.c.l.b16 %v1013
      %v1053 = vunpack.c.h.b16 %v1013
      %v1054 = vunpack.c.l.b16 %v1014
      %v1055 = vunpack.c.h.b16 %v1014
      %v1056 = vunpack.c.l.b16 %v1015
      %v1057 = vunpack.c.h.b16 %v1015
      %v1058 = vunpack.c.l.b16 %v1016
      %v1059 = vunpack.c.h.b16 %v1016
      %v1060 = vunpack.c.l.b16 %v1017
      %v1061 = vunpack.c.h.b16 %v1017
      %v1062 = vunpack.c.l.b16 %v1018
      %v1063 = vunpack.c.h.b16 %v1018
      %v1064 = vunpack.c.l.b16 %v1019
      %v1065 = vunpack.c.h.b16 %v1019
      %v1066 = vunpack.c.l.b16 %v1020
      %v1067 = vunpack.c.h.b16 %v1020
      %v1068 = vunpack.c.l.b16 %v1021
      %v1069 = vunpack.c.h.b16 %v1021
      %v1070 = vpack.c.b16 %v1038, %v1038
      %v1071 = vpack.c.b16 %v1039, %v1039
      %v1072 = vpack.c.b16 %v1040, %v1040
      %v1073 = vpack.c.b16 %v1041, %v1041
      %v1074 = vpack.c.b16 %v1042, %v1042
      %v1075 = vpack.c.b16 %v1043, %v1043
      %v1076 = vpack.c.b16 %v1044, %v1044
      %v1077 = vpack.c.b16 %v1045, %v1045
      %v1078 = vpack.c.b16 %v1046, %v1046
      %v1079 = vpack.c.b16 %v1047, %v1047
      %v1080 = vpack.c.b16 %v1048, %v1048
      %v1081 = vpack.c.b16 %v1049, %v1049
      %v1082 = vpack.c.b16 %v1050, %v1050
      %v1083 = vpack.c.b16 %v1051, %v1051
      %v1084 = vpack.c.b16 %v1052, %v1052
      %v1085 = vpack.c.b16 %v1053, %v1053
      %v1086 = vpack.c.b16 %v1054, %v1054
      %v1087 = vpack.c.b16 %v1055, %v1055
      %v1088 = vpack.c.b16 %v1056, %v1056
      %v1089 = vpack.c.b16 %v1057, %v1057
      %v1090 = vpack.c.b16 %v1058, %v1058
      %v1091 = vpack.c.b16 %v1059, %v1059
      %v1092 = vpack.c.b16 %v1060, %v1060
      %v1093 = vpack.c.b16 %v1061, %v1061
      %v1094 = vpack.c.b16 %v1062, %v1062
      %v1095 = vpack.c.b16 %v1063, %v1063
      %v1096 = vpack.c.b16 %v1064, %v1064
      %v1097 = vpack.c.b16 %v1065, %v1065
      %v1098 = vpack.c.b16 %v1066, %v1066
      %v1099 = vpack.c.b16 %v1067, %v1067
      %v1100 = vpack.c.b16 %v1068, %v1068
      %v1101 = vpack.c.b16 %v1069, %v1069
      %1134 = vst [vmem:[%s187] sm:$0xf] %v1070
      %1135 = vst [vmem:[%s187 + $0x4] sm:$0xf] %v1071
      %1136 = vst [vmem:[%s187 + $0x8] sm:$0xf] %v1072
      %1137 = vst [vmem:[%s187 + $0xc] sm:$0xf] %v1073
      %1138 = vst [vmem:[%s187 + $0x10] sm:$0xf] %v1074
      %1139 = vst [vmem:[%s187 + $0x14] sm:$0xf] %v1075
      %1140 = vst [vmem:[%s187 + $0x18] sm:$0xf] %v1076
      %1141 = vst [vmem:[%s187 + $0x1c] sm:$0xf] %v1077
      %1142 = vst [vmem:[%s187 + $0x20] sm:$0xf] %v1078
      %1143 = vst [vmem:[%s187 + $0x24] sm:$0xf] %v1079
      %1144 = vst [vmem:[%s187 + $0x28] sm:$0xf] %v1080
      %1145 = vst [vmem:[%s187 + $0x2c] sm:$0xf] %v1081
      %1146 = vst [vmem:[%s187 + $0x30] sm:$0xf] %v1082
      %1147 = vst [vmem:[%s187 + $0x34] sm:$0xf] %v1083
      %1148 = vst [vmem:[%s187 + $0x38] sm:$0xf] %v1084
      %1149 = vst [vmem:[%s187 + $0x3c] sm:$0xf] %v1085
      %1150 = vst [vmem:[%s187 + $0x40] sm:$0xf] %v1086
      %1151 = vst [vmem:[%s187 + $0x44] sm:$0xf] %v1087
      %1152 = vst [vmem:[%s187 + $0x48] sm:$0xf] %v1088
      %1153 = vst [vmem:[%s187 + $0x4c] sm:$0xf] %v1089
      %1154 = vst [vmem:[%s187 + $0x50] sm:$0xf] %v1090
      %1155 = vst [vmem:[%s187 + $0x54] sm:$0xf] %v1091
      %1156 = vst [vmem:[%s187 + $0x58] sm:$0xf] %v1092
      %1157 = vst [vmem:[%s187 + $0x5c] sm:$0xf] %v1093
      %1158 = vst [vmem:[%s187 + $0x60] sm:$0xf] %v1094
      %1159 = vst [vmem:[%s187 + $0x64] sm:$0xf] %v1095
      %1160 = vst [vmem:[%s187 + $0x68] sm:$0xf] %v1096
      %1161 = vst [vmem:[%s187 + $0x6c] sm:$0xf] %v1097
      %1162 = vst [vmem:[%s187 + $0x70] sm:$0xf] %v1098
      %1163 = vst [vmem:[%s187 + $0x74] sm:$0xf] %v1099
      %1164 = vst [vmem:[%s187 + $0x78] sm:$0xf] %v1100
      %1165 = vst [vmem:[%s187 + $0x7c] sm:$0xf] %v1101
      %v1166 = vadd.f32 %v673, %v676
      %v1167 = vadd.f32 %v1166, %v681
      %v1168 = vadd.f32 %v1167, %v684
      %v1169 = vadd.f32 %v1168, %v689
      %v1170 = vadd.f32 %v1169, %v692
      %v1171 = vadd.f32 %v1170, %v697
      %v1172 = vadd.f32 %v1171, %v700
      %v1173 = vadd.f32 %v1172, %v705
      %v1174 = vadd.f32 %v1173, %v708
      %v1175 = vadd.f32 %v1174, %v713
      %v1176 = vadd.f32 %v1175, %v716
      %v1177 = vadd.f32 %v1176, %v721
      %v1178 = vadd.f32 %v1177, %v724
      %v1179 = vadd.f32 %v1178, %v729
      %v1180 = vadd.f32 %v1179, %v732
      %v1181 = vadd.f32 %v1180, %v737
      %v1182 = vadd.f32 %v1181, %v740
      %v1183 = vadd.f32 %v1182, %v745
      %v1184 = vadd.f32 %v1183, %v748
      %v1185 = vadd.f32 %v1184, %v753
      %v1186 = vadd.f32 %v1185, %v756
      %v1187 = vadd.f32 %v1186, %v761
      %v1188 = vadd.f32 %v1187, %v764
      %v1189 = vadd.f32 %v1188, %v769
      %v1190 = vadd.f32 %v1189, %v772
      %v1191 = vadd.f32 %v1190, %v777
      %v1192 = vadd.f32 %v1191, %v780
      %v1193 = vadd.f32 %v1192, %v785
      %v1194 = vadd.f32 %v1193, %v788
      %v1195 = vadd.f32 %v1194, %v793
      %v1196 = vadd.f32 %v1195, %v796
      %v1197 = vrot.slane %v1196, 4
      %v1198 = vadd.f32 %v1196, %v1197
      %v1199 = vrot.slane %v1198, 2
      %v1200 = vadd.f32 %v1198, %v1199
      %v1201 = vrot.slane %v1200, 1
      %v1202 = vadd.f32 %v1200, %v1201
      %v1203 = vmul.f32 %v1202, %v836
      %v1204 = vsub.f32 %v673, %v1203
      %v1205 = vsub.f32 %v676, %v1203
      %v1206 = vsub.f32 %v681, %v1203
      %v1207 = vsub.f32 %v684, %v1203
      %v1208 = vsub.f32 %v689, %v1203
      %v1209 = vsub.f32 %v692, %v1203
      %v1210 = vsub.f32 %v697, %v1203
      %v1211 = vsub.f32 %v700, %v1203
      %v1212 = vsub.f32 %v705, %v1203
      %v1213 = vsub.f32 %v708, %v1203
      %v1214 = vsub.f32 %v713, %v1203
      %v1215 = vsub.f32 %v716, %v1203
      %v1216 = vsub.f32 %v721, %v1203
      %v1217 = vsub.f32 %v724, %v1203
      %v1218 = vsub.f32 %v729, %v1203
      %v1219 = vsub.f32 %v732, %v1203
      %v1220 = vsub.f32 %v737, %v1203
      %v1221 = vsub.f32 %v740, %v1203
      %v1222 = vsub.f32 %v745, %v1203
      %v1223 = vsub.f32 %v748, %v1203
      %v1224 = vsub.f32 %v753, %v1203
      %v1225 = vsub.f32 %v756, %v1203
      %v1226 = vsub.f32 %v761, %v1203
      %v1227 = vsub.f32 %v764, %v1203
      %v1228 = vsub.f32 %v769, %v1203
      %v1229 = vsub.f32 %v772, %v1203
      %v1230 = vsub.f32 %v777, %v1203
      %v1231 = vsub.f32 %v780, %v1203
      %v1232 = vsub.f32 %v785, %v1203
      %v1233 = vsub.f32 %v788, %v1203
      %v1234 = vsub.f32 %v793, %v1203
      %v1235 = vsub.f32 %v796, %v1203
      %v1236 = vmul.f32 %v1204, %v1204
      %v1237 = vmul.f32 %v1205, %v1205
      %v1238 = vmul.f32 %v1206, %v1206
      %v1239 = vmul.f32 %v1207, %v1207
      %v1240 = vmul.f32 %v1208, %v1208
      %v1241 = vmul.f32 %v1209, %v1209
      %v1242 = vmul.f32 %v1210, %v1210
      %v1243 = vmul.f32 %v1211, %v1211
      %v1244 = vmul.f32 %v1212, %v1212
      %v1245 = vmul.f32 %v1213, %v1213
      %v1246 = vmul.f32 %v1214, %v1214
      %v1247 = vmul.f32 %v1215, %v1215
      %v1248 = vmul.f32 %v1216, %v1216
      %v1249 = vmul.f32 %v1217, %v1217
      %v1250 = vmul.f32 %v1218, %v1218
      %v1251 = vmul.f32 %v1219, %v1219
      %v1252 = vmul.f32 %v1220, %v1220
      %v1253 = vmul.f32 %v1221, %v1221
      %v1254 = vmul.f32 %v1222, %v1222
      %v1255 = vmul.f32 %v1223, %v1223
      %v1256 = vmul.f32 %v1224, %v1224
      %v1257 = vmul.f32 %v1225, %v1225
      %v1258 = vmul.f32 %v1226, %v1226
      %v1259 = vmul.f32 %v1227, %v1227
      %v1260 = vmul.f32 %v1228, %v1228
      %v1261 = vmul.f32 %v1229, %v1229
      %v1262 = vmul.f32 %v1230, %v1230
      %v1263 = vmul.f32 %v1231, %v1231
      %v1264 = vmul.f32 %v1232, %v1232
      %v1265 = vmul.f32 %v1233, %v1233
      %v1266 = vmul.f32 %v1234, %v1234
      %v1267 = vmul.f32 %v1235, %v1235
      %v1268 = vadd.f32 %v1236, %v1237
      %v1269 = vadd.f32 %v1268, %v1238
      %v1270 = vadd.f32 %v1269, %v1239
      %v1271 = vadd.f32 %v1270, %v1240
      %v1272 = vadd.f32 %v1271, %v1241
      %v1273 = vadd.f32 %v1272, %v1242
      %v1274 = vadd.f32 %v1273, %v1243
      %v1275 = vadd.f32 %v1274, %v1244
      %v1276 = vadd.f32 %v1275, %v1245
      %v1277 = vadd.f32 %v1276, %v1246
      %v1278 = vadd.f32 %v1277, %v1247
      %v1279 = vadd.f32 %v1278, %v1248
      %v1280 = vadd.f32 %v1279, %v1249
      %v1281 = vadd.f32 %v1280, %v1250
      %v1282 = vadd.f32 %v1281, %v1251
      %v1283 = vadd.f32 %v1282, %v1252
      %v1284 = vadd.f32 %v1283, %v1253
      %v1285 = vadd.f32 %v1284, %v1254
      %v1286 = vadd.f32 %v1285, %v1255
      %v1287 = vadd.f32 %v1286, %v1256
      %v1288 = vadd.f32 %v1287, %v1257
      %v1289 = vadd.f32 %v1288, %v1258
      %v1290 = vadd.f32 %v1289, %v1259
      %v1291 = vadd.f32 %v1290, %v1260
      %v1292 = vadd.f32 %v1291, %v1261
      %v1293 = vadd.f32 %v1292, %v1262
      %v1294 = vadd.f32 %v1293, %v1263
      %v1295 = vadd.f32 %v1294, %v1264
      %v1296 = vadd.f32 %v1295, %v1265
      %v1297 = vadd.f32 %v1296, %v1266
      %v1298 = vadd.f32 %v1297, %v1267
      %v1299 = vrot.slane %v1298, 4
      %v1300 = vadd.f32 %v1298, %v1299
      %v1301 = vrot.slane %v1300, 2
      %v1302 = vadd.f32 %v1300, %v1301
      %v1303 = vrot.slane %v1302, 1
      %v1304 = vadd.f32 %v1302, %v1303
      %v1305 = vmul.f32 %v1304, %v836
      %v1306 = vadd.f32 %v1305, 1e-05
      %v1307 = vrsqrt.pop %v1306
      %v1308 = vmul.f32 %v1204, %v1307
      %v1309 = vmul.f32 %v1205, %v1307
      %v1310 = vmul.f32 %v1206, %v1307
      %v1311 = vmul.f32 %v1207, %v1307
      %v1312 = vmul.f32 %v1208, %v1307
      %v1313 = vmul.f32 %v1209, %v1307
      %v1314 = vmul.f32 %v1210, %v1307
      %v1315 = vmul.f32 %v1211, %v1307
      %v1316 = vmul.f32 %v1212, %v1307
      %v1317 = vmul.f32 %v1213, %v1307
      %v1318 = vmul.f32 %v1214, %v1307
      %v1319 = vmul.f32 %v1215, %v1307
      %v1320 = vmul.f32 %v1216, %v1307
      %v1321 = vmul.f32 %v1217, %v1307
      %v1322 = vmul.f32 %v1218, %v1307
      %v1323 = vmul.f32 %v1219, %v1307
      %v1324 = vmul.f32 %v1220, %v1307
      %v1325 = vmul.f32 %v1221, %v1307
      %v1326 = vmul.f32 %v1222, %v1307
      %v1327 = vmul.f32 %v1223, %v1307
      %v1328 = vmul.f32 %v1224, %v1307
      %v1329 = vmul.f32 %v1225, %v1307
      %v1330 = vmul.f32 %v1226, %v1307
      %v1331 = vmul.f32 %v1227, %v1307
      %v1332 = vmul.f32 %v1228, %v1307
      %v1333 = vmul.f32 %v1229, %v1307
      %v1334 = vmul.f32 %v1230, %v1307
      %v1335 = vmul.f32 %v1231, %v1307
      %v1336 = vmul.f32 %v1232, %v1307
      %v1337 = vmul.f32 %v1233, %v1307
      %v1338 = vmul.f32 %v1234, %v1307
      %v1339 = vmul.f32 %v1235, %v1307
      %v1340 = vmax.f32 %v1308, 0.0
      %v1341 = vmax.f32 %v1309, 0.0
      %v1342 = vmax.f32 %v1310, 0.0
      %v1343 = vmax.f32 %v1311, 0.0
      %v1344 = vmax.f32 %v1312, 0.0
      %v1345 = vmax.f32 %v1313, 0.0
      %v1346 = vmax.f32 %v1314, 0.0
      %v1347 = vmax.f32 %v1315, 0.0
      %v1348 = vmax.f32 %v1316, 0.0
      %v1349 = vmax.f32 %v1317, 0.0
      %v1350 = vmax.f32 %v1318, 0.0
      %v1351 = vmax.f32 %v1319, 0.0
      %v1352 = vmax.f32 %v1320, 0.0
      %v1353 = vmax.f32 %v1321, 0.0
      %v1354 = vmax.f32 %v1322, 0.0
      %v1355 = vmax.f32 %v1323, 0.0
      %v1356 = vmax.f32 %v1324, 0.0
      %v1357 = vmax.f32 %v1325, 0.0
      %v1358 = vmax.f32 %v1326, 0.0
      %v1359 = vmax.f32 %v1327, 0.0
      %v1360 = vmax.f32 %v1328, 0.0
      %v1361 = vmax.f32 %v1329, 0.0
      %v1362 = vmax.f32 %v1330, 0.0
      %v1363 = vmax.f32 %v1331, 0.0
      %v1364 = vmax.f32 %v1332, 0.0
      %v1365 = vmax.f32 %v1333, 0.0
      %v1366 = vmax.f32 %v1334, 0.0
      %v1367 = vmax.f32 %v1335, 0.0
      %v1368 = vmax.f32 %v1336, 0.0
      %v1369 = vmax.f32 %v1337, 0.0
      %v1370 = vmax.f32 %v1338, 0.0
      %v1371 = vmax.f32 %v1339, 0.0
      %v1372 = vpack.c.bf16 %v1341, %v1340
      %v1373 = vpack.c.bf16 %v1343, %v1342
      %v1374 = vpack.c.bf16 %v1345, %v1344
      %v1375 = vpack.c.bf16 %v1347, %v1346
      %v1376 = vpack.c.bf16 %v1349, %v1348
      %v1377 = vpack.c.bf16 %v1351, %v1350
      %v1378 = vpack.c.bf16 %v1353, %v1352
      %v1379 = vpack.c.bf16 %v1355, %v1354
      %v1380 = vpack.c.bf16 %v1357, %v1356
      %v1381 = vpack.c.bf16 %v1359, %v1358
      %v1382 = vpack.c.bf16 %v1361, %v1360
      %v1383 = vpack.c.bf16 %v1363, %v1362
      %v1384 = vpack.c.bf16 %v1365, %v1364
      %v1385 = vpack.c.bf16 %v1367, %v1366
      %v1386 = vpack.c.bf16 %v1369, %v1368
      %v1387 = vpack.c.bf16 %v1371, %v1370
      %v1404 = vunpack.c.l.b16 %v1372
      %v1405 = vunpack.c.h.b16 %v1372
      %v1406 = vunpack.c.l.b16 %v1373
      %v1407 = vunpack.c.h.b16 %v1373
      %v1408 = vunpack.c.l.b16 %v1374
      %v1409 = vunpack.c.h.b16 %v1374
      %v1410 = vunpack.c.l.b16 %v1375
      %v1411 = vunpack.c.h.b16 %v1375
      %v1412 = vunpack.c.l.b16 %v1376
      %v1413 = vunpack.c.h.b16 %v1376
      %v1414 = vunpack.c.l.b16 %v1377
      %v1415 = vunpack.c.h.b16 %v1377
      %v1416 = vunpack.c.l.b16 %v1378
      %v1417 = vunpack.c.h.b16 %v1378
      %v1418 = vunpack.c.l.b16 %v1379
      %v1419 = vunpack.c.h.b16 %v1379
      %v1420 = vunpack.c.l.b16 %v1380
      %v1421 = vunpack.c.h.b16 %v1380
      %v1422 = vunpack.c.l.b16 %v1381
      %v1423 = vunpack.c.h.b16 %v1381
      %v1424 = vunpack.c.l.b16 %v1382
      %v1425 = vunpack.c.h.b16 %v1382
      %v1426 = vunpack.c.l.b16 %v1383
      %v1427 = vunpack.c.h.b16 %v1383
      %v1428 = vunpack.c.l.b16 %v1384
      %v1429 = vunpack.c.h.b16 %v1384
      %v1430 = vunpack.c.l.b16 %v1385
      %v1431 = vunpack.c.h.b16 %v1385
      %v1432 = vunpack.c.l.b16 %v1386
      %v1433 = vunpack.c.h.b16 %v1386
      %v1434 = vunpack.c.l.b16 %v1387
      %v1435 = vunpack.c.h.b16 %v1387
      %v1436 = vpack.c.b16 %v1404, %v1404
      %v1437 = vpack.c.b16 %v1405, %v1405
      %v1438 = vpack.c.b16 %v1406, %v1406
      %v1439 = vpack.c.b16 %v1407, %v1407
      %v1440 = vpack.c.b16 %v1408, %v1408
      %v1441 = vpack.c.b16 %v1409, %v1409
      %v1442 = vpack.c.b16 %v1410, %v1410
      %v1443 = vpack.c.b16 %v1411, %v1411
      %v1444 = vpack.c.b16 %v1412, %v1412
      %v1445 = vpack.c.b16 %v1413, %v1413
      %v1446 = vpack.c.b16 %v1414, %v1414
      %v1447 = vpack.c.b16 %v1415, %v1415
      %v1448 = vpack.c.b16 %v1416, %v1416
      %v1449 = vpack.c.b16 %v1417, %v1417
      %v1450 = vpack.c.b16 %v1418, %v1418
      %v1451 = vpack.c.b16 %v1419, %v1419
      %v1452 = vpack.c.b16 %v1420, %v1420
      %v1453 = vpack.c.b16 %v1421, %v1421
      %v1454 = vpack.c.b16 %v1422, %v1422
      %v1455 = vpack.c.b16 %v1423, %v1423
      %v1456 = vpack.c.b16 %v1424, %v1424
      %v1457 = vpack.c.b16 %v1425, %v1425
      %v1458 = vpack.c.b16 %v1426, %v1426
      %v1459 = vpack.c.b16 %v1427, %v1427
      %v1460 = vpack.c.b16 %v1428, %v1428
      %v1461 = vpack.c.b16 %v1429, %v1429
      %v1462 = vpack.c.b16 %v1430, %v1430
      %v1463 = vpack.c.b16 %v1431, %v1431
      %v1464 = vpack.c.b16 %v1432, %v1432
      %v1465 = vpack.c.b16 %v1433, %v1433
      %v1466 = vpack.c.b16 %v1434, %v1434
      %v1467 = vpack.c.b16 %v1435, %v1435
      %s1500 = scalar_lea.vmem %s187, 128
      %1501 = vst [vmem:[%s1500] sm:$0xf] %v1436
      %1502 = vst [vmem:[%s1500 + $0x4] sm:$0xf] %v1437
      %1503 = vst [vmem:[%s1500 + $0x8] sm:$0xf] %v1438
      %1504 = vst [vmem:[%s1500 + $0xc] sm:$0xf] %v1439
      %1505 = vst [vmem:[%s1500 + $0x10] sm:$0xf] %v1440
      %1506 = vst [vmem:[%s1500 + $0x14] sm:$0xf] %v1441
      %1507 = vst [vmem:[%s1500 + $0x18] sm:$0xf] %v1442
      %1508 = vst [vmem:[%s1500 + $0x1c] sm:$0xf] %v1443
      %1509 = vst [vmem:[%s1500 + $0x20] sm:$0xf] %v1444
      %1510 = vst [vmem:[%s1500 + $0x24] sm:$0xf] %v1445
      %1511 = vst [vmem:[%s1500 + $0x28] sm:$0xf] %v1446
      %1512 = vst [vmem:[%s1500 + $0x2c] sm:$0xf] %v1447
      %1513 = vst [vmem:[%s1500 + $0x30] sm:$0xf] %v1448
      %1514 = vst [vmem:[%s1500 + $0x34] sm:$0xf] %v1449
      %1515 = vst [vmem:[%s1500 + $0x38] sm:$0xf] %v1450
      %1516 = vst [vmem:[%s1500 + $0x3c] sm:$0xf] %v1451
      %1517 = vst [vmem:[%s1500 + $0x40] sm:$0xf] %v1452
      %1518 = vst [vmem:[%s1500 + $0x44] sm:$0xf] %v1453
      %1519 = vst [vmem:[%s1500 + $0x48] sm:$0xf] %v1454
      %1520 = vst [vmem:[%s1500 + $0x4c] sm:$0xf] %v1455
      %1521 = vst [vmem:[%s1500 + $0x50] sm:$0xf] %v1456
      %1522 = vst [vmem:[%s1500 + $0x54] sm:$0xf] %v1457
      %1523 = vst [vmem:[%s1500 + $0x58] sm:$0xf] %v1458
      %1524 = vst [vmem:[%s1500 + $0x5c] sm:$0xf] %v1459
      %1525 = vst [vmem:[%s1500 + $0x60] sm:$0xf] %v1460
      %1526 = vst [vmem:[%s1500 + $0x64] sm:$0xf] %v1461
      %1527 = vst [vmem:[%s1500 + $0x68] sm:$0xf] %v1462
      %1528 = vst [vmem:[%s1500 + $0x6c] sm:$0xf] %v1463
      %1529 = vst [vmem:[%s1500 + $0x70] sm:$0xf] %v1464
      %1530 = vst [vmem:[%s1500 + $0x74] sm:$0xf] %v1465
      %1531 = vst [vmem:[%s1500 + $0x78] sm:$0xf] %v1466
      %1532 = vst [vmem:[%s1500 + $0x7c] sm:$0xf] %v1467
      %s1533 = smul.u32 2, %s17
      %p1534 = scmp.lt.s32.totalorder %s1533, 3
      %s1535 = scalar_select %p1534, %s1533, 3
      %p1536 = scmp.lt.s32.totalorder %s18, 0
      %s1537 = scalar_select %p1536, %s18, 0
      %s1538 = smul.addr %s1535, 32
      %s1539 = sadd.s32 %s1537, %s1538
      %s1540 = smul.addr %s1539, 4
      %s1541 = scalar_lea.vmem %s2, %s1540
      // Predicated region
      $region29: #{forward.5} parent=27 // pred_check
        %p1542 = pneg %p97
      $region30: #{forward.5} parent=27 // pred_check_branch
        %1544 = sbr.rel (%p1542) target = $region32
      $region31: #{forward.5} parent=27 // pred_region
        %s1545 = smul.u32 2, %s17
      $region32: #{forward.5} parent=27 // pred_fallthru
        _
    $region28: #{forward.5} parent=5 // pred_fallthru
      _
    %p1546 = scmp.le.s32.totalorder 2, %s8
    // Predicated region
    $region33: #{forward.5} parent=5 // pred_check
      %p1547 = pneg %p1546
    $region34: #{forward.5} parent=5 // pred_check_branch
      %1549 = sbr.rel (%p1547) target = $region36
    $region35: #{forward.5} parent=5 // pred_region
      %s1550 = ssub.s32 %s8, 2
      // Predicated region
      $region37: #{forward.5} parent=35 // pred_check
        %p1551 = pneg %p103
      $region38: #{forward.5} parent=35 // pred_check_branch
        %1553 = sbr.rel (%p1551) target = $region40
      $region39: #{forward.5} parent=35 // pred_region
        %s1554 = smul.u32 2, %s19
        %p1555 = scmp.lt.s32.totalorder %s1554, 3
        %s1556 = scalar_select %p1555, %s1554, 3
        %p1557 = scmp.lt.s32.totalorder %s20, 0
        %s1558 = scalar_select %p1557, %s20, 0
        %s1559 = smul.addr %s1556, 32
        %s1560 = sadd.s32 %s1558, %s1559
        %s1561 = smul.addr %s1560, 4
        %s1562 = scalar_lea.vmem %s2, %s1561
      $region40: #{forward.5} parent=35 // pred_fallthru
        _
    $region36: #{forward.5} parent=5 // pred_fallthru
      _
  $region6: #{forward.5} parent=0 // loop_footer
    %s12 = sadd.s32 1, %s8
  $region7: #{forward.5} parent=0 // loop_footer_branch
    %7 = sbr.rel target = $region3
  $region8: #{forward.5} parent=0 // loop_exit
    _

// kernel: forward.6
$region0: #{forward.6}
  #allocation0 [shape = 'u32[]', space=smem, size = 0x4, offset = 0x4, fixed_abs, tag = 'smem constant byte address 0x4 - core index']
  #allocation1 [shape = 'u32[144,128]{1,0:T(1,128)}', space=vmem, size = 0x12000, scoped, tag = 'internal scratch']
  %s0 = inlined_call_operand.vmem [shape: bf16[4,64,128], index: 0, kind: input, shape index: {}]
  %s1 = inlined_call_operand.vmem [shape: bf16[128,128], index: 1, kind: input, shape index: {}]
  %s2 = inlined_call_operand.vmem [shape: bf16[4,64,128], index: 2, kind: output, shape index: {}]
  %s3 = sld [smem:[#allocation0]]
  $region41: #{forward.6} parent=0
    _
  %s5 = ssub.s32 1, %s3
  %s6 = scalar_select 0, %s5, %s3
  loop: start=0, step=1, limit=4
  $region2: #{forward.6} parent=0 // loop_pre_header
    _
  $region3: #{forward.6} parent=0 // loop_header
    %s8 = sphi 0, %s12
    %p9 = scmp.ge.s32.totalorder %s8, 4
    %s15 = sphi 0, %s27
    %s16 = sphi 0, %s23
    %s17 = sphi 0, %s15
    %s18 = sphi 0, %s16
    %s19 = sphi 0, %s17
    %s20 = sphi 0, %s18
    %s30 = sphi 0, %s32
    %s33 = sphi 0, %s30
    %s34 = sphi 0, %s33
    %s50 = sphi 0, %s34
    %s56 = sphi 0, %s58
    %s59 = sphi 0, %s56
    %s60 = sphi 0, %s59
    %s76 = sphi 0, %s60
    %s84 = sphi 0, %s86
    %s87 = sphi 0, %s84
    %s88 = sphi 0, %s87
    %s104 = sphi 0, %s88
  $region4: #{forward.6} parent=0 // loop_header_branch
    %11 = sbr.rel (%p9) target = $region8
  $region5: #{forward.6} parent=0 // loop_body
    %s13 = ssub.s32 %s8, 1
    %s14 = ssub.s32 %s8, 2
    %s21 = sadd.s32 1, %s16
    %p22 = scmp.ge.s32.totalorder %s21, 1
    %s23 = scalar_select %p22, 0, %s21
    %s24 = sadd.s32 1, %s15
    %s25 = scalar_select %p22, %s24, %s15
    %p26 = scmp.ge.s32.totalorder %s25, 2
    %s27 = scalar_select %p26, 0, %s25
    %s28 = ssub.s32 %s15, %s27
    %p29 = scmp.eq.s32.totalorder %s28, 0
    %s31 = sadd.s32 %s30, 1
    %s32 = scalar_select %p29, %s30, %s31
    %p35 = pneg %p29
    %p36 = scmp.eq.s32.totalorder %s8, 1
    %p37 = por %p35, %p36
    %p38 = scmp.ne.s32.totalorder %s30, %s33
    %p39 = scmp.eq.s32.totalorder %s8, 0
    %p40 = por %p38, %p39
    %p41 = scmp.ne.s32.totalorder %s30, %s33
    %p42 = scmp.eq.s32.totalorder %s13, 1
    %p43 = por %p41, %p42
    %p44 = scmp.ne.s32.totalorder %s33, %s34
    %p45 = scmp.eq.s32.totalorder %s13, 0
    %p46 = por %p44, %p45
    %p47 = scmp.ne.s32.totalorder %s33, %s34
    %p48 = scmp.eq.s32.totalorder %s14, 1
    %p49 = por %p47, %p48
    %p51 = scmp.ne.s32.totalorder %s34, %s50
    %p52 = scmp.eq.s32.totalorder %s14, 0
    %p53 = por %p51, %p52
    %s54 = ssub.s32 %s16, %s23
    %p55 = scmp.eq.s32.totalorder %s54, 0
    %s57 = sadd.s32 %s56, 1
    %s58 = scalar_select %p55, %s56, %s57
    %p61 = pneg %p55
    %p62 = scmp.eq.s32.totalorder %s8, 1
    %p63 = por %p61, %p62
    %p64 = scmp.ne.s32.totalorder %s56, %s59
    %p65 = scmp.eq.s32.totalorder %s8, 0
    %p66 = por %p64, %p65
    %p67 = scmp.ne.s32.totalorder %s56, %s59
    %p68 = scmp.eq.s32.totalorder %s13, 1
    %p69 = por %p67, %p68
    %p70 = scmp.ne.s32.totalorder %s59, %s60
    %p71 = scmp.eq.s32.totalorder %s13, 0
    %p72 = por %p70, %p71
    %p73 = scmp.ne.s32.totalorder %s59, %s60
    %p74 = scmp.eq.s32.totalorder %s14, 1
    %p75 = por %p73, %p74
    %p77 = scmp.ne.s32.totalorder %s60, %s76
    %p78 = scmp.eq.s32.totalorder %s14, 0
    %p79 = por %p77, %p78
    %s80 = ssub.s32 %s15, %s27
    %s81 = ssub.s32 %s16, %s23
    %s82 = sor.u32 %s80, %s81
    %p83 = scmp.eq.s32.totalorder %s82, 0
    %s85 = sadd.s32 %s84, 1
    %s86 = scalar_select %p83, %s84, %s85
    %p89 = pneg %p83
    %p90 = scmp.eq.s32.totalorder %s8, 1
    %p91 = por %p89, %p90
    %p92 = scmp.ne.s32.totalorder %s84, %s87
    %p93 = scmp.eq.s32.totalorder %s8, 0
    %p94 = por %p92, %p93
    %p95 = scmp.ne.s32.totalorder %s84, %s87
    %p96 = scmp.eq.s32.totalorder %s13, 1
    %p97 = por %p95, %p96
    %p98 = scmp.ne.s32.totalorder %s87, %s88
    %p99 = scmp.eq.s32.totalorder %s13, 0
    %p100 = por %p98, %p99
    %p101 = scmp.ne.s32.totalorder %s87, %s88
    %p102 = scmp.eq.s32.totalorder %s14, 1
    %p103 = por %p101, %p102
    %p105 = scmp.ne.s32.totalorder %s88, %s104
    %p106 = scmp.eq.s32.totalorder %s14, 0
    %p107 = por %p105, %p106
    %p108 = scmp.le.s32.totalorder 1, %s8
    %p109 = scmp.lt.s32.totalorder %s8, 3
    %p110 = pnand %p108, %p109
    %p111 = pneg %p110
    // Predicated region
    $region9: #{forward.6} parent=5 // pred_check
      _
    $region10: #{forward.6} parent=5 // pred_check_branch
      %113 = sbr.rel (%p110) target = $region12
    $region11: #{forward.6} parent=5 // pred_region
      %s114 = ssub.s32 %s8, 1
      // Predicated region
      $region13: #{forward.6} parent=11 // pred_check
        %p115 = pneg %p72
      $region14: #{forward.6} parent=11 // pred_check_branch
        %117 = sbr.rel (%p115) target = $region16
      $region15: #{forward.6} parent=11 // pred_region
        %p118 = scmp.lt.s32.totalorder %s18, 0
        %s119 = scalar_select %p118, %s18, 0
        %s120 = smul.addr %s119, 4
        %s121 = scalar_lea.vmem %s1, %s120
      $region16: #{forward.6} parent=11 // pred_fallthru
        _
    $region12: #{forward.6} parent=5 // pred_fallthru
      _
    %p122 = scmp.lt.s32.totalorder %s8, 2
    // Predicated region
    $region17: #{forward.6} parent=5 // pred_check
      %p123 = pneg %p122
    $region18: #{forward.6} parent=5 // pred_check_branch
      %125 = sbr.rel (%p123) target = $region20
    $region19: #{forward.6} parent=5 // pred_region
      // Predicated region
      $region21: #{forward.6} parent=19 // pred_check
        %p126 = pneg %p40
      $region22: #{forward.6} parent=19 // pred_check_branch
        %128 = sbr.rel (%p126) target = $region24
      $region23: #{forward.6} parent=19 // pred_region
        %s129 = smul.u32 2, %s15
        %p130 = scmp.lt.s32.totalorder %s129, 3
        %s131 = scalar_select %p130, %s129, 3
        %s132 = smul.addr %s131, 8
        %s133 = smul.addr %s132, 4
        %s134 = scalar_lea.vmem %s0, %s133
        %s135 = smul.u32 2, %s15
      $region24: #{forward.6} parent=19 // pred_fallthru
        _
    $region20: #{forward.6} parent=5 // pred_fallthru
      _
    %p136 = scmp.le.s32.totalorder 1, %s8
    %p137 = scmp.lt.s32.totalorder %s8, 3
    %p138 = pnand %p136, %p137
    %p139 = pneg %p138
    // Predicated region
    $region25: #{forward.6} parent=5 // pred_check
      _
    $region26: #{forward.6} parent=5 // pred_check_branch
      %141 = sbr.rel (%p138) target = $region28
    $region27: #{forward.6} parent=5 // pred_region
      %s142 = ssub.s32 %s8, 1
      %s143 = smul.u32 2, %s17
      %p144 = scmp.lt.s32.totalorder %s143, 3
      %s145 = scalar_select %p144, %s143, 3
      %s146 = smul.addr %s145, 8
      %s147 = smul.addr %s146, 4
      %s148 = scalar_lea.vmem %s0, %s147
      %p149 = pneg %p46
      %p150 = pneg %p43
      %p151 = scmp.lt.s32.totalorder %s18, 0
      %s152 = scalar_select %p151, %s18, 0
      %s153 = smul.addr %s152, 4
      %s154 = scalar_lea.vmem %s1, %s153
      %p155 = pneg %p72
      %p156 = pneg %p69
      %p157 = pneg %p100
      %p158 = pneg %p97
      %s159 = smul.u32 2, %s17
      %p160 = scmp.lt.s32.totalorder %s159, 3
      %s161 = scalar_select %p160, %s159, 3
      %p162 = scmp.lt.s32.totalorder %s18, 0
      %s163 = scalar_select %p162, %s18, 0
      %s164 = smul.addr %s161, 8
      %s165 = sadd.s32 %s163, %s164
      %s166 = smul.addr %s165, 4
      %s167 = scalar_lea.vmem %s2, %s166
      %s168 = smul.u32 2, %s17
      %p169 = scmp.lt.s32.totalorder %s168, 3
      %s170 = scalar_select %p169, %s168, 3
      %s171 = smul.addr %s170, 8
      %s172 = smul.addr %s171, 4
      %s173 = scalar_lea.vmem %s0, %s172
      %s174 = smul.u32 2, %s17
      %p175 = scmp.lt.s32.totalorder %s18, 0
      %s176 = scalar_select %p175, %s18, 0
      %s177 = smul.addr %s176, 4
      %s178 = scalar_lea.vmem %s1, %s177
      %s179 = smul.u32 2, %s17
      %p180 = scmp.lt.s32.totalorder %s179, 3
      %s181 = scalar_select %p180, %s179, 3
      %p182 = scmp.lt.s32.totalorder %s18, 0
      %s183 = scalar_select %p182, %s18, 0
      %s184 = smul.addr %s181, 8
      %s185 = sadd.s32 %s183, %s184
      %s186 = smul.addr %s185, 4
      %s187 = scalar_lea.vmem %s2, %s186
      %s188 = smul.u32 2, %s17
      %v190 = vld [vmem:[%s173] sm:$0xf]
      %v191 = vld [vmem:[%s173 + $0x4] sm:$0xf]
      %v192 = vld [vmem:[%s173 + $0x8] sm:$0xf]
      %v193 = vld [vmem:[%s173 + $0xc] sm:$0xf]
      %v194 = vld [vmem:[%s173 + $0x10] sm:$0xf]
      %v195 = vld [vmem:[%s173 + $0x14] sm:$0xf]
      %v196 = vld [vmem:[%s173 + $0x18] sm:$0xf]
      %v197 = vld [vmem:[%s173 + $0x1c] sm:$0xf]
      %v198 = vld [vmem:[%s173 + $0x20] sm:$0xf]
      %v199 = vld [vmem:[%s173 + $0x24] sm:$0xf]
      %v200 = vld [vmem:[%s173 + $0x28] sm:$0xf]
      %v201 = vld [vmem:[%s173 + $0x2c] sm:$0xf]
      %v202 = vld [vmem:[%s173 + $0x30] sm:$0xf]
      %v203 = vld [vmem:[%s173 + $0x34] sm:$0xf]
      %v204 = vld [vmem:[%s173 + $0x38] sm:$0xf]
      %v205 = vld [vmem:[%s173 + $0x3c] sm:$0xf]
      %v206 = vld [vmem:[%s178] sm:$0xf]
      %v207 = vld [vmem:[%s178 + $0x4] sm:$0xf]
      %v208 = vld [vmem:[%s178 + $0x8] sm:$0xf]
      %v209 = vld [vmem:[%s178 + $0xc] sm:$0xf]
      %v210 = vld [vmem:[%s178 + $0x10] sm:$0xf]
      %v211 = vld [vmem:[%s178 + $0x14] sm:$0xf]
      %v212 = vld [vmem:[%s178 + $0x18] sm:$0xf]
      %v213 = vld [vmem:[%s178 + $0x1c] sm:$0xf]
      %v214 = vld [vmem:[%s178 + $0x20] sm:$0xf]
      %v215 = vld [vmem:[%s178 + $0x24] sm:$0xf]
      %v216 = vld [vmem:[%s178 + $0x28] sm:$0xf]
      %v217 = vld [vmem:[%s178 + $0x2c] sm:$0xf]
      %v218 = vld [vmem:[%s178 + $0x30] sm:$0xf]
      %v219 = vld [vmem:[%s178 + $0x34] sm:$0xf]
      %v220 = vld [vmem:[%s178 + $0x38] sm:$0xf]
      %v221 = vld [vmem:[%s178 + $0x3c] sm:$0xf]
      %v238 = vunpack.c.l.b16 %v190
      %v239 = vunpack.c.l.b16 %v191
      %v240 = vunpack.c.l.b16 %v192
      %v241 = vunpack.c.l.b16 %v193
      %v242 = vunpack.c.l.b16 %v194
      %v243 = vunpack.c.l.b16 %v195
      %v244 = vunpack.c.l.b16 %v196
      %v245 = vunpack.c.l.b16 %v197
      %v246 = vunpack.c.l.b16 %v198
      %v247 = vunpack.c.l.b16 %v199
      %v248 = vunpack.c.l.b16 %v200
      %v249 = vunpack.c.l.b16 %v201
      %v250 = vunpack.c.l.b16 %v202
      %v251 = vunpack.c.l.b16 %v203
      %v252 = vunpack.c.l.b16 %v204
      %v253 = vunpack.c.l.b16 %v205
      %v254 = vpack.c.b16 %v239, %v238
      %v255 = vpack.c.b16 %v241, %v240
      %v256 = vpack.c.b16 %v243, %v242
      %v257 = vpack.c.b16 %v245, %v244
      %v258 = vpack.c.b16 %v247, %v246
      %v259 = vpack.c.b16 %v249, %v248
      %v260 = vpack.c.b16 %v251, %v250
      %v261 = vpack.c.b16 %v253, %v252
      %v286 = vunpack.c.l.b16 %v206
      %v287 = vunpack.c.l.b16 %v207
      %v288 = vunpack.c.l.b16 %v208
      %v289 = vunpack.c.l.b16 %v209
      %v290 = vunpack.c.l.b16 %v210
      %v291 = vunpack.c.l.b16 %v211
      %v292 = vunpack.c.l.b16 %v212
      %v293 = vunpack.c.l.b16 %v213
      %v294 = vunpack.c.l.b16 %v214
      %v295 = vunpack.c.l.b16 %v215
      %v296 = vunpack.c.l.b16 %v216
      %v297 = vunpack.c.l.b16 %v217
      %v298 = vunpack.c.l.b16 %v218
      %v299 = vunpack.c.l.b16 %v219
      %v300 = vunpack.c.l.b16 %v220
      %v301 = vunpack.c.l.b16 %v221
      %v302 = vpack.c.b16 %v287, %v286
      %v303 = vpack.c.b16 %v289, %v288
      %v304 = vpack.c.b16 %v291, %v290
      %v305 = vpack.c.b16 %v293, %v292
      %v306 = vpack.c.b16 %v295, %v294
      %v307 = vpack.c.b16 %v297, %v296
      %v308 = vpack.c.b16 %v299, %v298
      %v309 = vpack.c.b16 %v301, %v300
      %318 = vmatprep.subr.bf16.mxu0 0
      %319 = vmatpush1.bf16.msra.mxu0 %v302
      %320 = vmatprep.subr.bf16.mxu0 0
      %321 = vmatpush1.bf16.msra.mxu0 %v303
      %322 = vmatprep.subr.bf16.mxu0 0
      %323 = vmatpush1.bf16.msra.mxu0 %v304
      %324 = vmatprep.subr.bf16.mxu0 0
      %325 = vmatpush1.bf16.msra.mxu0 %v305
      %326 = vmatprep.subr.bf16.mxu0 0
      %327 = vmatpush1.bf16.msra.mxu0 %v306
      %328 = vmatprep.subr.bf16.mxu0 0
      %329 = vmatpush1.bf16.msra.mxu0 %v307
      %330 = vmatprep.subr.bf16.mxu0 0
      %331 = vmatpush1.bf16.msra.mxu0 %v308
      %332 = vmatprep.subr.bf16.mxu0 0
      %333 = vmatpush1.bf16.msra.mxu0 %v309
      %334 = vmatprep.subr.bf16.mxu0 0
      %335 = vmatpush1.bf16.msra.mxu0 0
      %336 = vmatprep.subr.bf16.mxu0 0
      %337 = vmatpush1.bf16.msra.mxu0 0
      %338 = vmatprep.subr.bf16.mxu0 0
      %339 = vmatpush1.bf16.msra.mxu0 0
      %340 = vmatprep.subr.bf16.mxu0 0
      %341 = vmatpush1.bf16.msra.mxu0 0
      %342 = vmatprep.subr.bf16.mxu0 0
      %343 = vmatpush1.bf16.msra.mxu0 0
      %344 = vmatprep.subr.bf16.mxu0 0
      %345 = vmatpush1.bf16.msra.mxu0 0
      %346 = vmatprep.subr.bf16.mxu0 0
      %347 = vmatpush1.bf16.msra.mxu0 0
      %348 = vmatprep.subr.bf16.mxu0 0
      %349 = vmatpush1.bf16.msra.mxu0 0
      %350 = vmatprep.mubr.bf16.mxu0 0
      %351 = vmatmul.mubr.bf16.gmra.mrb[0].mxu0 %v254
      %v352 = vpop.f32.mrb[0].mxu0
      %v353 = vadd.f32 0.0, %v352
      %v354 = vpop.f32.mrb[0].mxu0
      %v355 = vpop.f32.mrb[0].mxu0
      %v356 = vadd.f32 0.0, %v355
      %v357 = vpop.f32.mrb[0].mxu0
      %358 = vmatprep.mubr.bf16.mxu0 0
      %359 = vmatmul.mubr.bf16.gmra.mrb[0].mxu0 %v255
      %v360 = vpop.f32.mrb[0].mxu0
      %v361 = vadd.f32 0.0, %v360
      %v362 = vpop.f32.mrb[0].mxu0
      %v363 = vpop.f32.mrb[0].mxu0
      %v364 = vadd.f32 0.0, %v363
      %v365 = vpop.f32.mrb[0].mxu0
      %366 = vmatprep.mubr.bf16.mxu0 0
      %367 = vmatmul.mubr.bf16.gmra.mrb[0].mxu0 %v256
      %v368 = vpop.f32.mrb[0].mxu0
      %v369 = vadd.f32 0.0, %v368
      %v370 = vpop.f32.mrb[0].mxu0
      %v371 = vpop.f32.mrb[0].mxu0
      %v372 = vadd.f32 0.0, %v371
      %v373 = vpop.f32.mrb[0].mxu0
      %374 = vmatprep.mubr.bf16.mxu0 0
      %375 = vmatmul.mubr.bf16.gmra.mrb[0].mxu0 %v257
      %v376 = vpop.f32.mrb[0].mxu0
      %v377 = vadd.f32 0.0, %v376
      %v378 = vpop.f32.mrb[0].mxu0
      %v379 = vpop.f32.mrb[0].mxu0
      %v380 = vadd.f32 0.0, %v379
      %v381 = vpop.f32.mrb[0].mxu0
      %382 = vmatprep.mubr.bf16.mxu0 0
      %383 = vmatmul.mubr.bf16.gmra.mrb[0].mxu0 %v258
      %v384 = vpop.f32.mrb[0].mxu0
      %v385 = vadd.f32 0.0, %v384
      %v386 = vpop.f32.mrb[0].mxu0
      %v387 = vpop.f32.mrb[0].mxu0
      %v388 = vadd.f32 0.0, %v387
      %v389 = vpop.f32.mrb[0].mxu0
      %390 = vmatprep.mubr.bf16.mxu0 0
      %391 = vmatmul.mubr.bf16.gmra.mrb[0].mxu0 %v259
      %v392 = vpop.f32.mrb[0].mxu0
      %v393 = vadd.f32 0.0, %v392
      %v394 = vpop.f32.mrb[0].mxu0
      %v395 = vpop.f32.mrb[0].mxu0
      %v396 = vadd.f32 0.0, %v395
      %v397 = vpop.f32.mrb[0].mxu0
      %398 = vmatprep.mubr.bf16.mxu0 0
      %399 = vmatmul.mubr.bf16.gmra.mrb[0].mxu0 %v260
      %v400 = vpop.f32.mrb[0].mxu0
      %v401 = vadd.f32 0.0, %v400
      %v402 = vpop.f32.mrb[0].mxu0
      %v403 = vpop.f32.mrb[0].mxu0
      %v404 = vadd.f32 0.0, %v403
      %v405 = vpop.f32.mrb[0].mxu0
      %406 = vmatprep.mubr.bf16.mxu0 0
      %407 = vmatmul.mubr.bf16.gmra.mrb[0].mxu0 %v261
      %v408 = vpop.f32.mrb[0].mxu0
      %v409 = vadd.f32 0.0, %v408
      %v410 = vpop.f32.mrb[0].mxu0
      %v411 = vpop.f32.mrb[0].mxu0
      %v412 = vadd.f32 0.0, %v411
      %v413 = vpop.f32.mrb[0].mxu0
      %414 = vdwg.mxu0
      %v415 = vadd.f32 %v353, %v356
      %v416 = vadd.f32 %v415, %v361
      %v417 = vadd.f32 %v416, %v364
      %v418 = vadd.f32 %v417, %v369
      %v419 = vadd.f32 %v418, %v372
      %v420 = vadd.f32 %v419, %v377
      %v421 = vadd.f32 %v420, %v380
      %v422 = vrot.slane %v421, 4
      %v423 = vadd.f32 %v421, %v422
      %v424 = vrot.slane %v423, 2
      %v425 = vadd.f32 %v423, %v424
      %v426 = vrot.slane %v425, 1
      %v427 = vadd.f32 %v425, %v426
      %v428 = vrcp.pop 64.0
      %v429 = vmul.f32 %v427, %v428
      %v430 = vsub.f32 %v353, %v429
      %v431 = vsub.f32 %v356, %v429
      %v432 = vsub.f32 %v361, %v429
      %v433 = vsub.f32 %v364, %v429
      %v434 = vsub.f32 %v369, %v429
      %v435 = vsub.f32 %v372, %v429
      %v436 = vsub.f32 %v377, %v429
      %v437 = vsub.f32 %v380, %v429
      %v438 = vmul.f32 %v430, %v430
      %v439 = vmul.f32 %v431, %v431
      %v440 = vmul.f32 %v432, %v432
      %v441 = vmul.f32 %v433, %v433
      %v442 = vmul.f32 %v434, %v434
      %v443 = vmul.f32 %v435, %v435
      %v444 = vmul.f32 %v436, %v436
      %v445 = vmul.f32 %v437, %v437
      %v446 = vadd.f32 %v438, %v439
      %v447 = vadd.f32 %v446, %v440
      %v448 = vadd.f32 %v447, %v441
      %v449 = vadd.f32 %v448, %v442
      %v450 = vadd.f32 %v449, %v443
      %v451 = vadd.f32 %v450, %v444
      %v452 = vadd.f32 %v451, %v445
      %v453 = vrot.slane %v452, 4
      %v454 = vadd.f32 %v452, %v453
      %v455 = vrot.slane %v454, 2
      %v456 = vadd.f32 %v454, %v455
      %v457 = vrot.slane %v456, 1
      %v458 = vadd.f32 %v456, %v457
      %v459 = vmul.f32 %v458, %v428
      %v460 = vadd.f32 %v459, 1e-05
      %v461 = vrsqrt.pop %v460
      %v462 = vmul.f32 %v430, %v461
      %v463 = vmul.f32 %v431, %v461
      %v464 = vmul.f32 %v432, %v461
      %v465 = vmul.f32 %v433, %v461
      %v466 = vmul.f32 %v434, %v461
      %v467 = vmul.f32 %v435, %v461
      %v468 = vmul.f32 %v436, %v461
      %v469 = vmul.f32 %v437, %v461
      %v470 = vmax.f32 %v462, 0.0
      %v471 = vmax.f32 %v463, 0.0
      %v472 = vmax.f32 %v464, 0.0
      %v473 = vmax.f32 %v465, 0.0
      %v474 = vmax.f32 %v466, 0.0
      %v475 = vmax.f32 %v467, 0.0
      %v476 = vmax.f32 %v468, 0.0
      %v477 = vmax.f32 %v469, 0.0
      %v478 = vpack.c.bf16 %v471, %v470
      %v479 = vpack.c.bf16 %v473, %v472
      %v480 = vpack.c.bf16 %v475, %v474
      %v481 = vpack.c.bf16 %v477, %v476
      %v486 = vunpack.c.l.b16 %v478
      %v487 = vunpack.c.h.b16 %v478
      %v488 = vunpack.c.l.b16 %v479
      %v489 = vunpack.c.h.b16 %v479
      %v490 = vunpack.c.l.b16 %v480
      %v491 = vunpack.c.h.b16 %v480
      %v492 = vunpack.c.l.b16 %v481
      %v493 = vunpack.c.h.b16 %v481
      %v494 = vpack.c.b16 %v486, %v486
      %v495 = vpack.c.b16 %v487, %v487
      %v496 = vpack.c.b16 %v488, %v488
      %v497 = vpack.c.b16 %v489, %v489
      %v498 = vpack.c.b16 %v490, %v490
      %v499 = vpack.c.b16 %v491, %v491
      %v500 = vpack.c.b16 %v492, %v492
      %v501 = vpack.c.b16 %v493, %v493
      %510 = vst [vmem:[%s187] sm:$0xf] %v494
      %511 = vst [vmem:[%s187 + $0x4] sm:$0xf] %v495
      %512 = vst [vmem:[%s187 + $0x8] sm:$0xf] %v496
      %513 = vst [vmem:[%s187 + $0xc] sm:$0xf] %v497
      %514 = vst [vmem:[%s187 + $0x10] sm:$0xf] %v498
      %515 = vst [vmem:[%s187 + $0x14] sm:$0xf] %v499
      %516 = vst [vmem:[%s187 + $0x18] sm:$0xf] %v500
      %517 = vst [vmem:[%s187 + $0x1c] sm:$0xf] %v501
      %v518 = vadd.f32 %v385, %v388
      %v519 = vadd.f32 %v518, %v393
      %v520 = vadd.f32 %v519, %v396
      %v521 = vadd.f32 %v520, %v401
      %v522 = vadd.f32 %v521, %v404
      %v523 = vadd.f32 %v522, %v409
      %v524 = vadd.f32 %v523, %v412
      %v525 = vrot.slane %v524, 4
      %v526 = vadd.f32 %v524, %v525
      %v527 = vrot.slane %v526, 2
      %v528 = vadd.f32 %v526, %v527
      %v529 = vrot.slane %v528, 1
      %v530 = vadd.f32 %v528, %v529
      %v531 = vmul.f32 %v530, %v428
      %v532 = vsub.f32 %v385, %v531
      %v533 = vsub.f32 %v388, %v531
      %v534 = vsub.f32 %v393, %v531
      %v535 = vsub.f32 %v396, %v531
      %v536 = vsub.f32 %v401, %v531
      %v537 = vsub.f32 %v404, %v531
      %v538 = vsub.f32 %v409, %v531
      %v539 = vsub.f32 %v412, %v531
      %v540 = vmul.f32 %v532, %v532
      %v541 = vmul.f32 %v533, %v533
      %v542 = vmul.f32 %v534, %v534
      %v543 = vmul.f32 %v535, %v535
      %v544 = vmul.f32 %v536, %v536
      %v545 = vmul.f32 %v537, %v537
      %v546 = vmul.f32 %v538, %v538
      %v547 = vmul.f32 %v539, %v539
      %v548 = vadd.f32 %v540, %v541
      %v549 = vadd.f32 %v548, %v542
      %v550 = vadd.f32 %v549, %v543
      %v551 = vadd.f32 %v550, %v544
      %v552 = vadd.f32 %v551, %v545
      %v553 = vadd.f32 %v552, %v546
      %v554 = vadd.f32 %v553, %v547
      %v555 = vrot.slane %v554, 4
      %v556 = vadd.f32 %v554, %v555
      %v557 = vrot.slane %v556, 2
      %v558 = vadd.f32 %v556, %v557
      %v559 = vrot.slane %v558, 1
      %v560 = vadd.f32 %v558, %v559
      %v561 = vmul.f32 %v560, %v428
      %v562 = vadd.f32 %v561, 1e-05
      %v563 = vrsqrt.pop %v562
      %v564 = vmul.f32 %v532, %v563
      %v565 = vmul.f32 %v533, %v563
      %v566 = vmul.f32 %v534, %v563
      %v567 = vmul.f32 %v535, %v563
      %v568 = vmul.f32 %v536, %v563
      %v569 = vmul.f32 %v537, %v563
      %v570 = vmul.f32 %v538, %v563
      %v571 = vmul.f32 %v539, %v563
      %v572 = vmax.f32 %v564, 0.0
      %v573 = vmax.f32 %v565, 0.0
      %v574 = vmax.f32 %v566, 0.0
      %v575 = vmax.f32 %v567, 0.0
      %v576 = vmax.f32 %v568, 0.0
      %v577 = vmax.f32 %v569, 0.0
      %v578 = vmax.f32 %v570, 0.0
      %v579 = vmax.f32 %v571, 0.0
      %v580 = vpack.c.bf16 %v573, %v572
      %v581 = vpack.c.bf16 %v575, %v574
      %v582 = vpack.c.bf16 %v577, %v576
      %v583 = vpack.c.bf16 %v579, %v578
      %v588 = vunpack.c.l.b16 %v580
      %v589 = vunpack.c.h.b16 %v580
      %v590 = vunpack.c.l.b16 %v581
      %v591 = vunpack.c.h.b16 %v581
      %v592 = vunpack.c.l.b16 %v582
      %v593 = vunpack.c.h.b16 %v582
      %v594 = vunpack.c.l.b16 %v583
      %v595 = vunpack.c.h.b16 %v583
      %v596 = vpack.c.b16 %v588, %v588
      %v597 = vpack.c.b16 %v589, %v589
      %v598 = vpack.c.b16 %v590, %v590
      %v599 = vpack.c.b16 %v591, %v591
      %v600 = vpack.c.b16 %v592, %v592
      %v601 = vpack.c.b16 %v593, %v593
      %v602 = vpack.c.b16 %v594, %v594
      %v603 = vpack.c.b16 %v595, %v595
      %s612 = scalar_lea.vmem %s187, 32
      %613 = vst [vmem:[%s612] sm:$0xf] %v596
      %614 = vst [vmem:[%s612 + $0x4] sm:$0xf] %v597
      %615 = vst [vmem:[%s612 + $0x8] sm:$0xf] %v598
      %616 = vst [vmem:[%s612 + $0xc] sm:$0xf] %v599
      %617 = vst [vmem:[%s612 + $0x10] sm:$0xf] %v600
      %618 = vst [vmem:[%s612 + $0x14] sm:$0xf] %v601
      %619 = vst [vmem:[%s612 + $0x18] sm:$0xf] %v602
      %620 = vst [vmem:[%s612 + $0x1c] sm:$0xf] %v603
      %s621 = smul.u32 2, %s17
      %p622 = scmp.lt.s32.totalorder %s621, 3
      %s623 = scalar_select %p622, %s621, 3
      %p624 = scmp.lt.s32.totalorder %s18, 0
      %s625 = scalar_select %p624, %s18, 0
      %s626 = smul.addr %s623, 8
      %s627 = sadd.s32 %s625, %s626
      %s628 = smul.addr %s627, 4
      %s629 = scalar_lea.vmem %s2, %s628
      // Predicated region
      $region29: #{forward.6} parent=27 // pred_check
        %p630 = pneg %p97
      $region30: #{forward.6} parent=27 // pred_check_branch
        %632 = sbr.rel (%p630) target = $region32
      $region31: #{forward.6} parent=27 // pred_region
        %s633 = smul.u32 2, %s17
      $region32: #{forward.6} parent=27 // pred_fallthru
        _
    $region28: #{forward.6} parent=5 // pred_fallthru
      _
    %p634 = scmp.le.s32.totalorder 2, %s8
    // Predicated region
    $region33: #{forward.6} parent=5 // pred_check
      %p635 = pneg %p634
    $region34: #{forward.6} parent=5 // pred_check_branch
      %637 = sbr.rel (%p635) target = $region36
    $region35: #{forward.6} parent=5 // pred_region
      %s638 = ssub.s32 %s8, 2
      // Predicated region
      $region37: #{forward.6} parent=35 // pred_check
        %p639 = pneg %p103
      $region38: #{forward.6} parent=35 // pred_check_branch
        %641 = sbr.rel (%p639) target = $region40
      $region39: #{forward.6} parent=35 // pred_region
        %s642 = smul.u32 2, %s19
        %p643 = scmp.lt.s32.totalorder %s642, 3
        %s644 = scalar_select %p643, %s642, 3
        %p645 = scmp.lt.s32.totalorder %s20, 0
        %s646 = scalar_select %p645, %s20, 0
        %s647 = smul.addr %s644, 8
        %s648 = sadd.s32 %s646, %s647
        %s649 = smul.addr %s648, 4
        %s650 = scalar_lea.vmem %s2, %s649
      $region40: #{forward.6} parent=35 // pred_fallthru
        _
    $region36: #{forward.6} parent=5 // pred_fallthru
      _
  $region6: #{forward.6} parent=0 // loop_footer
    %s12 = sadd.s32 1, %s8
  $region7: #{forward.6} parent=0 // loop_footer_branch
    %7 = sbr.rel target = $region3
  $region8: #{forward.6} parent=0 // loop_exit
    _

// kernel: forward.7
$region0: #{forward.7}
  #allocation0 [shape = 'u32[]', space=smem, size = 0x4, offset = 0x4, fixed_abs, tag = 'smem constant byte address 0x4 - core index']
  #allocation1 [shape = 'u32[144,128]{1,0:T(1,128)}', space=vmem, size = 0x12000, scoped, tag = 'internal scratch']
  %s0 = inlined_call_operand.vmem [shape: bf16[4,16,256], index: 0, kind: input, shape index: {}]
  %s1 = inlined_call_operand.vmem [shape: bf16[256,128], index: 1, kind: input, shape index: {}]
  %s2 = inlined_call_operand.vmem [shape: bf16[4,16,128], index: 2, kind: output, shape index: {}]
  %s3 = sld [smem:[#allocation0]]
  $region41: #{forward.7} parent=0
    _
  %s5 = ssub.s32 1, %s3
  %s6 = scalar_select 0, %s5, %s3
  loop: start=0, step=1, limit=4
  $region2: #{forward.7} parent=0 // loop_pre_header
    _
  $region3: #{forward.7} parent=0 // loop_header
    %s8 = sphi 0, %s12
    %p9 = scmp.ge.s32.totalorder %s8, 4
    %s15 = sphi 0, %s27
    %s16 = sphi 0, %s23
    %s17 = sphi 0, %s15
    %s18 = sphi 0, %s16
    %s19 = sphi 0, %s17
    %s20 = sphi 0, %s18
    %s30 = sphi 0, %s32
    %s33 = sphi 0, %s30
    %s34 = sphi 0, %s33
    %s50 = sphi 0, %s34
    %s56 = sphi 0, %s58
    %s59 = sphi 0, %s56
    %s60 = sphi 0, %s59
    %s76 = sphi 0, %s60
    %s84 = sphi 0, %s86
    %s87 = sphi 0, %s84
    %s88 = sphi 0, %s87
    %s104 = sphi 0, %s88
  $region4: #{forward.7} parent=0 // loop_header_branch
    %11 = sbr.rel (%p9) target = $region8
  $region5: #{forward.7} parent=0 // loop_body
    %s13 = ssub.s32 %s8, 1
    %s14 = ssub.s32 %s8, 2
    %s21 = sadd.s32 1, %s16
    %p22 = scmp.ge.s32.totalorder %s21, 1
    %s23 = scalar_select %p22, 0, %s21
    %s24 = sadd.s32 1, %s15
    %s25 = scalar_select %p22, %s24, %s15
    %p26 = scmp.ge.s32.totalorder %s25, 2
    %s27 = scalar_select %p26, 0, %s25
    %s28 = ssub.s32 %s15, %s27
    %p29 = scmp.eq.s32.totalorder %s28, 0
    %s31 = sadd.s32 %s30, 1
    %s32 = scalar_select %p29, %s30, %s31
    %p35 = pneg %p29
    %p36 = scmp.eq.s32.totalorder %s8, 1
    %p37 = por %p35, %p36
    %p38 = scmp.ne.s32.totalorder %s30, %s33
    %p39 = scmp.eq.s32.totalorder %s8, 0
    %p40 = por %p38, %p39
    %p41 = scmp.ne.s32.totalorder %s30, %s33
    %p42 = scmp.eq.s32.totalorder %s13, 1
    %p43 = por %p41, %p42
    %p44 = scmp.ne.s32.totalorder %s33, %s34
    %p45 = scmp.eq.s32.totalorder %s13, 0
    %p46 = por %p44, %p45
    %p47 = scmp.ne.s32.totalorder %s33, %s34
    %p48 = scmp.eq.s32.totalorder %s14, 1
    %p49 = por %p47, %p48
    %p51 = scmp.ne.s32.totalorder %s34, %s50
    %p52 = scmp.eq.s32.totalorder %s14, 0
    %p53 = por %p51, %p52
    %s54 = ssub.s32 %s16, %s23
    %p55 = scmp.eq.s32.totalorder %s54, 0
    %s57 = sadd.s32 %s56, 1
    %s58 = scalar_select %p55, %s56, %s57
    %p61 = pneg %p55
    %p62 = scmp.eq.s32.totalorder %s8, 1
    %p63 = por %p61, %p62
    %p64 = scmp.ne.s32.totalorder %s56, %s59
    %p65 = scmp.eq.s32.totalorder %s8, 0
    %p66 = por %p64, %p65
    %p67 = scmp.ne.s32.totalorder %s56, %s59
    %p68 = scmp.eq.s32.totalorder %s13, 1
    %p69 = por %p67, %p68
    %p70 = scmp.ne.s32.totalorder %s59, %s60
    %p71 = scmp.eq.s32.totalorder %s13, 0
    %p72 = por %p70, %p71
    %p73 = scmp.ne.s32.totalorder %s59, %s60
    %p74 = scmp.eq.s32.totalorder %s14, 1
    %p75 = por %p73, %p74
    %p77 = scmp.ne.s32.totalorder %s60, %s76
    %p78 = scmp.eq.s32.totalorder %s14, 0
    %p79 = por %p77, %p78
    %s80 = ssub.s32 %s15, %s27
    %s81 = ssub.s32 %s16, %s23
    %s82 = sor.u32 %s80, %s81
    %p83 = scmp.eq.s32.totalorder %s82, 0
    %s85 = sadd.s32 %s84, 1
    %s86 = scalar_select %p83, %s84, %s85
    %p89 = pneg %p83
    %p90 = scmp.eq.s32.totalorder %s8, 1
    %p91 = por %p89, %p90
    %p92 = scmp.ne.s32.totalorder %s84, %s87
    %p93 = scmp.eq.s32.totalorder %s8, 0
    %p94 = por %p92, %p93
    %p95 = scmp.ne.s32.totalorder %s84, %s87
    %p96 = scmp.eq.s32.totalorder %s13, 1
    %p97 = por %p95, %p96
    %p98 = scmp.ne.s32.totalorder %s87, %s88
    %p99 = scmp.eq.s32.totalorder %s13, 0
    %p100 = por %p98, %p99
    %p101 = scmp.ne.s32.totalorder %s87, %s88
    %p102 = scmp.eq.s32.totalorder %s14, 1
    %p103 = por %p101, %p102
    %p105 = scmp.ne.s32.totalorder %s88, %s104
    %p106 = scmp.eq.s32.totalorder %s14, 0
    %p107 = por %p105, %p106
    %p108 = scmp.le.s32.totalorder 1, %s8
    %p109 = scmp.lt.s32.totalorder %s8, 3
    %p110 = pnand %p108, %p109
    %p111 = pneg %p110
    // Predicated region
    $region9: #{forward.7} parent=5 // pred_check
      _
    $region10: #{forward.7} parent=5 // pred_check_branch
      %113 = sbr.rel (%p110) target = $region12
    $region11: #{forward.7} parent=5 // pred_region
      %s114 = ssub.s32 %s8, 1
      // Predicated region
      $region13: #{forward.7} parent=11 // pred_check
        %p115 = pneg %p72
      $region14: #{forward.7} parent=11 // pred_check_branch
        %117 = sbr.rel (%p115) target = $region16
      $region15: #{forward.7} parent=11 // pred_region
        %p118 = scmp.lt.s32.totalorder %s18, 0
        %s119 = scalar_select %p118, %s18, 0
        %s120 = smul.addr %s119, 4
        %s121 = scalar_lea.vmem %s1, %s120
      $region16: #{forward.7} parent=11 // pred_fallthru
        _
    $region12: #{forward.7} parent=5 // pred_fallthru
      _
    %p122 = scmp.lt.s32.totalorder %s8, 2
    // Predicated region
    $region17: #{forward.7} parent=5 // pred_check
      %p123 = pneg %p122
    $region18: #{forward.7} parent=5 // pred_check_branch
      %125 = sbr.rel (%p123) target = $region20
    $region19: #{forward.7} parent=5 // pred_region
      // Predicated region
      $region21: #{forward.7} parent=19 // pred_check
        %p126 = pneg %p40
      $region22: #{forward.7} parent=19 // pred_check_branch
        %128 = sbr.rel (%p126) target = $region24
      $region23: #{forward.7} parent=19 // pred_region
        %s129 = smul.u32 2, %s15
        %p130 = scmp.lt.s32.totalorder %s129, 3
        %s131 = scalar_select %p130, %s129, 3
        %s132 = smul.addr %s131, 4
        %s133 = smul.addr %s132, 4
        %s134 = scalar_lea.vmem %s0, %s133
        %s135 = smul.u32 2, %s15
      $region24: #{forward.7} parent=19 // pred_fallthru
        _
    $region20: #{forward.7} parent=5 // pred_fallthru
      _
    %p136 = scmp.le.s32.totalorder 1, %s8
    %p137 = scmp.lt.s32.totalorder %s8, 3
    %p138 = pnand %p136, %p137
    %p139 = pneg %p138
    // Predicated region
    $region25: #{forward.7} parent=5 // pred_check
      _
    $region26: #{forward.7} parent=5 // pred_check_branch
      %141 = sbr.rel (%p138) target = $region28
    $region27: #{forward.7} parent=5 // pred_region
      %s142 = ssub.s32 %s8, 1
      %s143 = smul.u32 2, %s17
      %p144 = scmp.lt.s32.totalorder %s143, 3
      %s145 = scalar_select %p144, %s143, 3
      %s146 = smul.addr %s145, 4
      %s147 = smul.addr %s146, 4
      %s148 = scalar_lea.vmem %s0, %s147
      %p149 = pneg %p46
      %p150 = pneg %p43
      %p151 = scmp.lt.s32.totalorder %s18, 0
      %s152 = scalar_select %p151, %s18, 0
      %s153 = smul.addr %s152, 4
      %s154 = scalar_lea.vmem %s1, %s153
      %p155 = pneg %p72
      %p156 = pneg %p69
      %p157 = pneg %p100
      %p158 = pneg %p97
      %s159 = smul.u32 2, %s17
      %p160 = scmp.lt.s32.totalorder %s159, 3
      %s161 = scalar_select %p160, %s159, 3
      %p162 = scmp.lt.s32.totalorder %s18, 0
      %s163 = scalar_select %p162, %s18, 0
      %s164 = smul.addr %s161, 2
      %s165 = sadd.s32 %s163, %s164
      %s166 = smul.addr %s165, 4
      %s167 = scalar_lea.vmem %s2, %s166
      %s168 = smul.u32 2, %s17
      %p169 = scmp.lt.s32.totalorder %s168, 3
      %s170 = scalar_select %p169, %s168, 3
      %s171 = smul.addr %s170, 4
      %s172 = smul.addr %s171, 4
      %s173 = scalar_lea.vmem %s0, %s172
      %s174 = smul.u32 2, %s17
      %p175 = scmp.lt.s32.totalorder %s18, 0
      %s176 = scalar_select %p175, %s18, 0
      %s177 = smul.addr %s176, 4
      %s178 = scalar_lea.vmem %s1, %s177
      %s179 = smul.u32 2, %s17
      %p180 = scmp.lt.s32.totalorder %s179, 3
      %s181 = scalar_select %p180, %s179, 3
      %p182 = scmp.lt.s32.totalorder %s18, 0
      %s183 = scalar_select %p182, %s18, 0
      %s184 = smul.addr %s181, 2
      %s185 = sadd.s32 %s183, %s184
      %s186 = smul.addr %s185, 4
      %s187 = scalar_lea.vmem %s2, %s186
      %s188 = smul.u32 2, %s17
      %v190 = vld [vmem:[%s173] sm:$0xff]
      %v191 = vld [vmem:[%s173 + $0x8] sm:$0xff]
      %v192 = vld [vmem:[%s173 + $0x10] sm:$0xff]
      %v193 = vld [vmem:[%s173 + $0x18] sm:$0xff]
      %v194 = vld [vmem:[%s178] sm:$0xf]
      %v195 = vld [vmem:[%s178 + $0x4] sm:$0xf]
      %v196 = vld [vmem:[%s178 + $0x8] sm:$0xf]
      %v197 = vld [vmem:[%s178 + $0xc] sm:$0xf]
      %v198 = vld [vmem:[%s178 + $0x10] sm:$0xf]
      %v199 = vld [vmem:[%s178 + $0x14] sm:$0xf]
      %v200 = vld [vmem:[%s178 + $0x18] sm:$0xf]
      %v201 = vld [vmem:[%s178 + $0x1c] sm:$0xf]
      %v202 = vld [vmem:[%s178 + $0x20] sm:$0xf]
      %v203 = vld [vmem:[%s178 + $0x24] sm:$0xf]
      %v204 = vld [vmem:[%s178 + $0x28] sm:$0xf]
      %v205 = vld [vmem:[%s178 + $0x2c] sm:$0xf]
      %v206 = vld [vmem:[%s178 + $0x30] sm:$0xf]
      %v207 = vld [vmem:[%s178 + $0x34] sm:$0xf]
      %v208 = vld [vmem:[%s178 + $0x38] sm:$0xf]
      %v209 = vld [vmem:[%s178 + $0x3c] sm:$0xf]
      %v210 = vld [vmem:[%s178 + $0x40] sm:$0xf]
      %v211 = vld [vmem:[%s178 + $0x44] sm:$0xf]
      %v212 = vld [vmem:[%s178 + $0x48] sm:$0xf]
      %v213 = vld [vmem:[%s178 + $0x4c] sm:$0xf]
      %v214 = vld [vmem:[%s178 + $0x50] sm:$0xf]
      %v215 = vld [vmem:[%s178 + $0x54] sm:$0xf]
      %v216 = vld [vmem:[%s178 + $0x58] sm:$0xf]
      %v217 = vld [vmem:[%s178 + $0x5c] sm:$0xf]
      %v218 = vld [vmem:[%s178 + $0x60] sm:$0xf]
      %v219 = vld [vmem:[%s178 + $0x64] sm:$0xf]
      %v220 = vld [vmem:[%s178 + $0x68] sm:$0xf]
      %v221 = vld [vmem:[%s178 + $0x6c] sm:$0xf]
      %v222 = vld [vmem:[%s178 + $0x70] sm:$0xf]
      %v223 = vld [vmem:[%s178 + $0x74] sm:$0xf]
      %v224 = vld [vmem:[%s178 + $0x78] sm:$0xf]
      %v225 = vld [vmem:[%s178 + $0x7c] sm:$0xf]
      %v230 = vunpack.c.l.b16 %v190
      %v231 = vunpack.c.h.b16 %v190
      %v232 = vunpack.c.l.b16 %v191
      %v233 = vunpack.c.h.b16 %v191
      %v234 = vunpack.c.l.b16 %v192
      %v235 = vunpack.c.h.b16 %v192
      %v236 = vunpack.c.l.b16 %v193
      %v237 = vunpack.c.h.b16 %v193
      %v238 = vpack.c.b16 %v232, %v230
      %v239 = vpack.c.b16 %v233, %v231
      %v240 = vpack.c.b16 %v236, %v234
      %v241 = vpack.c.b16 %v237, %v235
      %v278 = vunpack.c.l.b16 %v194
      %v279 = vunpack.c.l.b16 %v195
      %v280 = vunpack.c.l.b16 %v196
      %v281 = vunpack.c.l.b16 %v197
      %v282 = vunpack.c.l.b16 %v198
      %v283 = vunpack.c.l.b16 %v199
      %v284 = vunpack.c.l.b16 %v200
      %v285 = vunpack.c.l.b16 %v201
      %v286 = vunpack.c.l.b16 %v202
      %v287 = vunpack.c.l.b16 %v203
      %v288 = vunpack.c.l.b16 %v204
      %v289 = vunpack.c.l.b16 %v205
      %v290 = vunpack.c.l.b16 %v206
      %v291 = vunpack.c.l.b16 %v207
      %v292 = vunpack.c.l.b16 %v208
      %v293 = vunpack.c.l.b16 %v209
      %v294 = vunpack.c.l.b16 %v210
      %v295 = vunpack.c.l.b16 %v211
      %v296 = vunpack.c.l.b16 %v212
      %v297 = vunpack.c.l.b16 %v213
      %v298 = vunpack.c.l.b16 %v214
      %v299 = vunpack.c.l.b16 %v215
      %v300 = vunpack.c.l.b16 %v216
      %v301 = vunpack.c.l.b16 %v217
      %v302 = vunpack.c.l.b16 %v218
      %v303 = vunpack.c.l.b16 %v219
      %v304 = vunpack.c.l.b16 %v220
      %v305 = vunpack.c.l.b16 %v221
      %v306 = vunpack.c.l.b16 %v222
      %v307 = vunpack.c.l.b16 %v223
      %v308 = vunpack.c.l.b16 %v224
      %v309 = vunpack.c.l.b16 %v225
      %v310 = vpack.c.b16 %v279, %v278
      %v311 = vpack.c.b16 %v281, %v280
      %v312 = vpack.c.b16 %v283, %v282
      %v313 = vpack.c.b16 %v285, %v284
      %v314 = vpack.c.b16 %v287, %v286
      %v315 = vpack.c.b16 %v289, %v288
      %v316 = vpack.c.b16 %v291, %v290
      %v317 = vpack.c.b16 %v293, %v292
      %v318 = vpack.c.b16 %v295, %v294
      %v319 = vpack.c.b16 %v297, %v296
      %v320 = vpack.c.b16 %v299, %v298
      %v321 = vpack.c.b16 %v301, %v300
      %v322 = vpack.c.b16 %v303, %v302
      %v323 = vpack.c.b16 %v305, %v304
      %v324 = vpack.c.b16 %v307, %v306
      %v325 = vpack.c.b16 %v309, %v308
      %342 = vmatprep.subr.bf16.mxu0 0
      %343 = vmatpush1.bf16.msra.mxu0 %v310
      %344 = vmatprep.subr.bf16.mxu0 0
      %345 = vmatpush1.bf16.msra.mxu0 %v311
      %346 = vmatprep.subr.bf16.mxu0 0
      %347 = vmatpush1.bf16.msra.mxu0 %v312
      %348 = vmatprep.subr.bf16.mxu0 0
      %349 = vmatpush1.bf16.msra.mxu0 %v313
      %350 = vmatprep.subr.bf16.mxu0 0
      %351 = vmatpush1.bf16.msra.mxu0 %v314
      %352 = vmatprep.subr.bf16.mxu0 0
      %353 = vmatpush1.bf16.msra.mxu0 %v315
      %354 = vmatprep.subr.bf16.mxu0 0
      %355 = vmatpush1.bf16.msra.mxu0 %v316
      %356 = vmatprep.subr.bf16.mxu0 0
      %357 = vmatpush1.bf16.msra.mxu0 %v317
      %358 = vmatprep.subr.bf16.mxu0 0
      %359 = vmatpush1.bf16.msra.mxu0 %v318
      %360 = vmatprep.subr.bf16.mxu0 0
      %361 = vmatpush1.bf16.msra.mxu0 %v319
      %362 = vmatprep.subr.bf16.mxu0 0
      %363 = vmatpush1.bf16.msra.mxu0 %v320
      %364 = vmatprep.subr.bf16.mxu0 0
      %365 = vmatpush1.bf16.msra.mxu0 %v321
      %366 = vmatprep.subr.bf16.mxu0 0
      %367 = vmatpush1.bf16.msra.mxu0 %v322
      %368 = vmatprep.subr.bf16.mxu0 0
      %369 = vmatpush1.bf16.msra.mxu0 %v323
      %370 = vmatprep.subr.bf16.mxu0 0
      %371 = vmatpush1.bf16.msra.mxu0 %v324
      %372 = vmatprep.subr.bf16.mxu0 0
      %373 = vmatpush1.bf16.msra.mxu0 %v325
      %374 = vmatprep.mubr.bf16.mxu0 %v239
      %375 = vmatmul.mubr.bf16.gmra.mrb[0].mxu0 %v238
      %v376 = vpop.f32.mrb[0].mxu0
      %v377 = vadd.f32 0.0, %v376
      %v378 = vpop.f32.mrb[0].mxu0
      %v379 = vpop.f32.mrb[0].mxu0
      %v380 = vadd.f32 0.0, %v379
      %v381 = vpop.f32.mrb[0].mxu0
      %382 = vmatprep.mubr.bf16.mxu0 %v241
      %383 = vmatmul.mubr.bf16.gmra.mrb[0].mxu0 %v240
      %v384 = vpop.f32.mrb[0].mxu0
      %v385 = vadd.f32 0.0, %v384
      %v386 = vpop.f32.mrb[0].mxu0
      %v387 = vpop.f32.mrb[0].mxu0
      %v388 = vadd.f32 0.0, %v387
      %v389 = vpop.f32.mrb[0].mxu0
      %390 = vdwg.mxu0
      %v391 = vadd.f32 %v377, %v380
      %v392 = vrot.slane %v391, 4
      %v393 = vadd.f32 %v391, %v392
      %v394 = vrot.slane %v393, 2
      %v395 = vadd.f32 %v393, %v394
      %v396 = vrot.slane %v395, 1
      %v397 = vadd.f32 %v395, %v396
      %v398 = vrcp.pop 16.0
      %v399 = vmul.f32 %v397, %v398
      %v400 = vsub.f32 %v377, %v399
      %v401 = vsub.f32 %v380, %v399
      %v402 = vmul.f32 %v400, %v400
      %v403 = vmul.f32 %v401, %v401
      %v404 = vadd.f32 %v402, %v403
      %v405 = vrot.slane %v404, 4
      %v406 = vadd.f32 %v404, %v405
      %v407 = vrot.slane %v406, 2
      %v408 = vadd.f32 %v406, %v407
      %v409 = vrot.slane %v408, 1
      %v410 = vadd.f32 %v408, %v409
      %v411 = vmul.f32 %v410, %v398
      %v412 = vadd.f32 %v411, 1e-05
      %v413 = vrsqrt.pop %v412
      %v414 = vmul.f32 %v400, %v413
      %v415 = vmul.f32 %v401, %v413
      %v416 = vmax.f32 %v414, 0.0
      %v417 = vmax.f32 %v415, 0.0
      %v418 = vpack.c.bf16 %v417, %v416
      %v420 = vunpack.c.l.b16 %v418
      %v421 = vunpack.c.h.b16 %v418
      %v422 = vpack.c.b16 %v420, %v420
      %v423 = vpack.c.b16 %v421, %v421
      %426 = vst [vmem:[%s187] sm:$0xf] %v422
      %427 = vst [vmem:[%s187 + $0x4] sm:$0xf] %v423
      %v428 = vadd.f32 %v385, %v388
      %v429 = vrot.slane %v428, 4
      %v430 = vadd.f32 %v428, %v429
      %v431 = vrot.slane %v430, 2
      %v432 = vadd.f32 %v430, %v431
      %v433 = vrot.slane %v432, 1
      %v434 = vadd.f32 %v432, %v433
      %v435 = vmul.f32 %v434, %v398
      %v436 = vsub.f32 %v385, %v435
      %v437 = vsub.f32 %v388, %v435
      %v438 = vmul.f32 %v436, %v436
      %v439 = vmul.f32 %v437, %v437
      %v440 = vadd.f32 %v438, %v439
      %v441 = vrot.slane %v440, 4
      %v442 = vadd.f32 %v440, %v441
      %v443 = vrot.slane %v442, 2
      %v444 = vadd.f32 %v442, %v443
      %v445 = vrot.slane %v444, 1
      %v446 = vadd.f32 %v444, %v445
      %v447 = vmul.f32 %v446, %v398
      %v448 = vadd.f32 %v447, 1e-05
      %v449 = vrsqrt.pop %v448
      %v450 = vmul.f32 %v436, %v449
      %v451 = vmul.f32 %v437, %v449
      %v452 = vmax.f32 %v450, 0.0
      %v453 = vmax.f32 %v451, 0.0
      %v454 = vpack.c.bf16 %v453, %v452
      %v456 = vunpack.c.l.b16 %v454
      %v457 = vunpack.c.h.b16 %v454
      %v458 = vpack.c.b16 %v456, %v456
      %v459 = vpack.c.b16 %v457, %v457
      %s462 = scalar_lea.vmem %s187, 8
      %463 = vst [vmem:[%s462] sm:$0xf] %v458
      %464 = vst [vmem:[%s462 + $0x4] sm:$0xf] %v459
      %s465 = smul.u32 2, %s17
      %p466 = scmp.lt.s32.totalorder %s465, 3
      %s467 = scalar_select %p466, %s465, 3
      %p468 = scmp.lt.s32.totalorder %s18, 0
      %s469 = scalar_select %p468, %s18, 0
      %s470 = smul.addr %s467, 2
      %s471 = sadd.s32 %s469, %s470
      %s472 = smul.addr %s471, 4
      %s473 = scalar_lea.vmem %s2, %s472
      // Predicated region
      $region29: #{forward.7} parent=27 // pred_check
        %p474 = pneg %p97
      $region30: #{forward.7} parent=27 // pred_check_branch
        %476 = sbr.rel (%p474) target = $region32
      $region31: #{forward.7} parent=27 // pred_region
        %s477 = smul.u32 2, %s17
      $region32: #{forward.7} parent=27 // pred_fallthru
        _
    $region28: #{forward.7} parent=5 // pred_fallthru
      _
    %p478 = scmp.le.s32.totalorder 2, %s8
    // Predicated region
    $region33: #{forward.7} parent=5 // pred_check
      %p479 = pneg %p478
    $region34: #{forward.7} parent=5 // pred_check_branch
      %481 = sbr.rel (%p479) target = $region36
    $region35: #{forward.7} parent=5 // pred_region
      %s482 = ssub.s32 %s8, 2
      // Predicated region
      $region37: #{forward.7} parent=35 // pred_check
        %p483 = pneg %p103
      $region38: #{forward.7} parent=35 // pred_check_branch
        %485 = sbr.rel (%p483) target = $region40
      $region39: #{forward.7} parent=35 // pred_region
        %s486 = smul.u32 2, %s19
        %p487 = scmp.lt.s32.totalorder %s486, 3
        %s488 = scalar_select %p487, %s486, 3
        %p489 = scmp.lt.s32.totalorder %s20, 0
        %s490 = scalar_select %p489, %s20, 0
        %s491 = smul.addr %s488, 2
        %s492 = sadd.s32 %s490, %s491
        %s493 = smul.addr %s492, 4
        %s494 = scalar_lea.vmem %s2, %s493
      $region40: #{forward.7} parent=35 // pred_fallthru
        _
    $region36: #{forward.7} parent=5 // pred_fallthru
      _
  $region6: #{forward.7} parent=0 // loop_footer
    %s12 = sadd.s32 1, %s8
  $region7: #{forward.7} parent=0 // loop_footer_branch
    %7 = sbr.rel target = $region3
  $region8: #{forward.7} parent=0 // loop_exit
    _

// kernel: forward.8
$region0: #{forward.8}
  #allocation0 [shape = 'u32[]', space=smem, size = 0x4, offset = 0x4, fixed_abs, tag = 'smem constant byte address 0x4 - core index']
  #allocation1 [shape = 'u32[144,128]{1,0:T(1,128)}', space=vmem, size = 0x12000, scoped, tag = 'internal scratch']
  %s0 = inlined_call_operand.vmem [shape: bf16[4,16,384], index: 0, kind: input, shape index: {}]
  %s1 = inlined_call_operand.vmem [shape: bf16[384,128], index: 1, kind: input, shape index: {}]
  %s2 = inlined_call_operand.vmem [shape: bf16[4,16,128], index: 2, kind: output, shape index: {}]
  %s3 = sld [smem:[#allocation0]]
  $region41: #{forward.8} parent=0
    _
  %s5 = ssub.s32 1, %s3
  %s6 = scalar_select 0, %s5, %s3
  loop: start=0, step=1, limit=4
  $region2: #{forward.8} parent=0 // loop_pre_header
    _
  $region3: #{forward.8} parent=0 // loop_header
    %s8 = sphi 0, %s12
    %p9 = scmp.ge.s32.totalorder %s8, 4
    %s15 = sphi 0, %s27
    %s16 = sphi 0, %s23
    %s17 = sphi 0, %s15
    %s18 = sphi 0, %s16
    %s19 = sphi 0, %s17
    %s20 = sphi 0, %s18
    %s30 = sphi 0, %s32
    %s33 = sphi 0, %s30
    %s34 = sphi 0, %s33
    %s50 = sphi 0, %s34
    %s56 = sphi 0, %s58
    %s59 = sphi 0, %s56
    %s60 = sphi 0, %s59
    %s76 = sphi 0, %s60
    %s84 = sphi 0, %s86
    %s87 = sphi 0, %s84
    %s88 = sphi 0, %s87
    %s104 = sphi 0, %s88
  $region4: #{forward.8} parent=0 // loop_header_branch
    %11 = sbr.rel (%p9) target = $region8
  $region5: #{forward.8} parent=0 // loop_body
    %s13 = ssub.s32 %s8, 1
    %s14 = ssub.s32 %s8, 2
    %s21 = sadd.s32 1, %s16
    %p22 = scmp.ge.s32.totalorder %s21, 1
    %s23 = scalar_select %p22, 0, %s21
    %s24 = sadd.s32 1, %s15
    %s25 = scalar_select %p22, %s24, %s15
    %p26 = scmp.ge.s32.totalorder %s25, 2
    %s27 = scalar_select %p26, 0, %s25
    %s28 = ssub.s32 %s15, %s27
    %p29 = scmp.eq.s32.totalorder %s28, 0
    %s31 = sadd.s32 %s30, 1
    %s32 = scalar_select %p29, %s30, %s31
    %p35 = pneg %p29
    %p36 = scmp.eq.s32.totalorder %s8, 1
    %p37 = por %p35, %p36
    %p38 = scmp.ne.s32.totalorder %s30, %s33
    %p39 = scmp.eq.s32.totalorder %s8, 0
    %p40 = por %p38, %p39
    %p41 = scmp.ne.s32.totalorder %s30, %s33
    %p42 = scmp.eq.s32.totalorder %s13, 1
    %p43 = por %p41, %p42
    %p44 = scmp.ne.s32.totalorder %s33, %s34
    %p45 = scmp.eq.s32.totalorder %s13, 0
    %p46 = por %p44, %p45
    %p47 = scmp.ne.s32.totalorder %s33, %s34
    %p48 = scmp.eq.s32.totalorder %s14, 1
    %p49 = por %p47, %p48
    %p51 = scmp.ne.s32.totalorder %s34, %s50
    %p52 = scmp.eq.s32.totalorder %s14, 0
    %p53 = por %p51, %p52
    %s54 = ssub.s32 %s16, %s23
    %p55 = scmp.eq.s32.totalorder %s54, 0
    %s57 = sadd.s32 %s56, 1
    %s58 = scalar_select %p55, %s56, %s57
    %p61 = pneg %p55
    %p62 = scmp.eq.s32.totalorder %s8, 1
    %p63 = por %p61, %p62
    %p64 = scmp.ne.s32.totalorder %s56, %s59
    %p65 = scmp.eq.s32.totalorder %s8, 0
    %p66 = por %p64, %p65
    %p67 = scmp.ne.s32.totalorder %s56, %s59
    %p68 = scmp.eq.s32.totalorder %s13, 1
    %p69 = por %p67, %p68
    %p70 = scmp.ne.s32.totalorder %s59, %s60
    %p71 = scmp.eq.s32.totalorder %s13, 0
    %p72 = por %p70, %p71
    %p73 = scmp.ne.s32.totalorder %s59, %s60
    %p74 = scmp.eq.s32.totalorder %s14, 1
    %p75 = por %p73, %p74
    %p77 = scmp.ne.s32.totalorder %s60, %s76
    %p78 = scmp.eq.s32.totalorder %s14, 0
    %p79 = por %p77, %p78
    %s80 = ssub.s32 %s15, %s27
    %s81 = ssub.s32 %s16, %s23
    %s82 = sor.u32 %s80, %s81
    %p83 = scmp.eq.s32.totalorder %s82, 0
    %s85 = sadd.s32 %s84, 1
    %s86 = scalar_select %p83, %s84, %s85
    %p89 = pneg %p83
    %p90 = scmp.eq.s32.totalorder %s8, 1
    %p91 = por %p89, %p90
    %p92 = scmp.ne.s32.totalorder %s84, %s87
    %p93 = scmp.eq.s32.totalorder %s8, 0
    %p94 = por %p92, %p93
    %p95 = scmp.ne.s32.totalorder %s84, %s87
    %p96 = scmp.eq.s32.totalorder %s13, 1
    %p97 = por %p95, %p96
    %p98 = scmp.ne.s32.totalorder %s87, %s88
    %p99 = scmp.eq.s32.totalorder %s13, 0
    %p100 = por %p98, %p99
    %p101 = scmp.ne.s32.totalorder %s87, %s88
    %p102 = scmp.eq.s32.totalorder %s14, 1
    %p103 = por %p101, %p102
    %p105 = scmp.ne.s32.totalorder %s88, %s104
    %p106 = scmp.eq.s32.totalorder %s14, 0
    %p107 = por %p105, %p106
    %p108 = scmp.le.s32.totalorder 1, %s8
    %p109 = scmp.lt.s32.totalorder %s8, 3
    %p110 = pnand %p108, %p109
    %p111 = pneg %p110
    // Predicated region
    $region9: #{forward.8} parent=5 // pred_check
      _
    $region10: #{forward.8} parent=5 // pred_check_branch
      %113 = sbr.rel (%p110) target = $region12
    $region11: #{forward.8} parent=5 // pred_region
      %s114 = ssub.s32 %s8, 1
      // Predicated region
      $region13: #{forward.8} parent=11 // pred_check
        %p115 = pneg %p72
      $region14: #{forward.8} parent=11 // pred_check_branch
        %117 = sbr.rel (%p115) target = $region16
      $region15: #{forward.8} parent=11 // pred_region
        %p118 = scmp.lt.s32.totalorder %s18, 0
        %s119 = scalar_select %p118, %s18, 0
        %s120 = smul.addr %s119, 4
        %s121 = scalar_lea.vmem %s1, %s120
      $region16: #{forward.8} parent=11 // pred_fallthru
        _
    $region12: #{forward.8} parent=5 // pred_fallthru
      _
    %p122 = scmp.lt.s32.totalorder %s8, 2
    // Predicated region
    $region17: #{forward.8} parent=5 // pred_check
      %p123 = pneg %p122
    $region18: #{forward.8} parent=5 // pred_check_branch
      %125 = sbr.rel (%p123) target = $region20
    $region19: #{forward.8} parent=5 // pred_region
      // Predicated region
      $region21: #{forward.8} parent=19 // pred_check
        %p126 = pneg %p40
      $region22: #{forward.8} parent=19 // pred_check_branch
        %128 = sbr.rel (%p126) target = $region24
      $region23: #{forward.8} parent=19 // pred_region
        %s129 = smul.u32 2, %s15
        %p130 = scmp.lt.s32.totalorder %s129, 3
        %s131 = scalar_select %p130, %s129, 3
        %s132 = smul.addr %s131, 6
        %s133 = smul.addr %s132, 4
        %s134 = scalar_lea.vmem %s0, %s133
        %s135 = smul.u32 2, %s15
      $region24: #{forward.8} parent=19 // pred_fallthru
        _
    $region20: #{forward.8} parent=5 // pred_fallthru
      _
    %p136 = scmp.le.s32.totalorder 1, %s8
    %p137 = scmp.lt.s32.totalorder %s8, 3
    %p138 = pnand %p136, %p137
    %p139 = pneg %p138
    // Predicated region
    $region25: #{forward.8} parent=5 // pred_check
      _
    $region26: #{forward.8} parent=5 // pred_check_branch
      %141 = sbr.rel (%p138) target = $region28
    $region27: #{forward.8} parent=5 // pred_region
      %s142 = ssub.s32 %s8, 1
      %s143 = smul.u32 2, %s17
      %p144 = scmp.lt.s32.totalorder %s143, 3
      %s145 = scalar_select %p144, %s143, 3
      %s146 = smul.addr %s145, 6
      %s147 = smul.addr %s146, 4
      %s148 = scalar_lea.vmem %s0, %s147
      %p149 = pneg %p46
      %p150 = pneg %p43
      %p151 = scmp.lt.s32.totalorder %s18, 0
      %s152 = scalar_select %p151, %s18, 0
      %s153 = smul.addr %s152, 4
      %s154 = scalar_lea.vmem %s1, %s153
      %p155 = pneg %p72
      %p156 = pneg %p69
      %p157 = pneg %p100
      %p158 = pneg %p97
      %s159 = smul.u32 2, %s17
      %p160 = scmp.lt.s32.totalorder %s159, 3
      %s161 = scalar_select %p160, %s159, 3
      %p162 = scmp.lt.s32.totalorder %s18, 0
      %s163 = scalar_select %p162, %s18, 0
      %s164 = smul.addr %s161, 2
      %s165 = sadd.s32 %s163, %s164
      %s166 = smul.addr %s165, 4
      %s167 = scalar_lea.vmem %s2, %s166
      %s168 = smul.u32 2, %s17
      %p169 = scmp.lt.s32.totalorder %s168, 3
      %s170 = scalar_select %p169, %s168, 3
      %s171 = smul.addr %s170, 6
      %s172 = smul.addr %s171, 4
      %s173 = scalar_lea.vmem %s0, %s172
      %s174 = smul.u32 2, %s17
      %p175 = scmp.lt.s32.totalorder %s18, 0
      %s176 = scalar_select %p175, %s18, 0
      %s177 = smul.addr %s176, 4
      %s178 = scalar_lea.vmem %s1, %s177
      %s179 = smul.u32 2, %s17
      %p180 = scmp.lt.s32.totalorder %s179, 3
      %s181 = scalar_select %p180, %s179, 3
      %p182 = scmp.lt.s32.totalorder %s18, 0
      %s183 = scalar_select %p182, %s18, 0
      %s184 = smul.addr %s181, 2
      %s185 = sadd.s32 %s183, %s184
      %s186 = smul.addr %s185, 4
      %s187 = scalar_lea.vmem %s2, %s186
      %s188 = smul.u32 2, %s17
      %v190 = vld [vmem:[%s173] sm:$0xff]
      %v191 = vld [vmem:[%s173 + $0x8] sm:$0xf]
      %v192 = vld [vmem:[%s173 + $0xc] sm:$0xff]
      %v193 = vld [vmem:[%s173 + $0x14] sm:$0xf]
      %v194 = vld [vmem:[%s173 + $0x18] sm:$0xff]
      %v195 = vld [vmem:[%s173 + $0x20] sm:$0xf]
      %v196 = vld [vmem:[%s173 + $0x24] sm:$0xff]
      %v197 = vld [vmem:[%s173 + $0x2c] sm:$0xf]
      %v198 = vld [vmem:[%s178] sm:$0xf]
      %v199 = vld [vmem:[%s178 + $0x4] sm:$0xf]
      %v200 = vld [vmem:[%s178 + $0x8] sm:$0xf]
      %v201 = vld [vmem:[%s178 + $0xc] sm:$0xf]
      %v202 = vld [vmem:[%s178 + $0x10] sm:$0xf]
      %v203 = vld [vmem:[%s178 + $0x14] sm:$0xf]
      %v204 = vld [vmem:[%s178 + $0x18] sm:$0xf]
      %v205 = vld [vmem:[%s178 + $0x1c] sm:$0xf]
      %v206 = vld [vmem:[%s178 + $0x20] sm:$0xf]
      %v207 = vld [vmem:[%s178 + $0x24] sm:$0xf]
      %v208 = vld [vmem:[%s178 + $0x28] sm:$0xf]
      %v209 = vld [vmem:[%s178 + $0x2c] sm:$0xf]
      %v210 = vld [vmem:[%s178 + $0x30] sm:$0xf]
      %v211 = vld [vmem:[%s178 + $0x34] sm:$0xf]
      %v212 = vld [vmem:[%s178 + $0x38] sm:$0xf]
      %v213 = vld [vmem:[%s178 + $0x3c] sm:$0xf]
      %v214 = vld [vmem:[%s178 + $0x40] sm:$0xf]
      %v215 = vld [vmem:[%s178 + $0x44] sm:$0xf]
      %v216 = vld [vmem:[%s178 + $0x48] sm:$0xf]
      %v217 = vld [vmem:[%s178 + $0x4c] sm:$0xf]
      %v218 = vld [vmem:[%s178 + $0x50] sm:$0xf]
      %v219 = vld [vmem:[%s178 + $0x54] sm:$0xf]
      %v220 = vld [vmem:[%s178 + $0x58] sm:$0xf]
      %v221 = vld [vmem:[%s178 + $0x5c] sm:$0xf]
      %v222 = vld [vmem:[%s178 + $0x60] sm:$0xf]
      %v223 = vld [vmem:[%s178 + $0x64] sm:$0xf]
      %v224 = vld [vmem:[%s178 + $0x68] sm:$0xf]
      %v225 = vld [vmem:[%s178 + $0x6c] sm:$0xf]
      %v226 = vld [vmem:[%s178 + $0x70] sm:$0xf]
      %v227 = vld [vmem:[%s178 + $0x74] sm:$0xf]
      %v228 = vld [vmem:[%s178 + $0x78] sm:$0xf]
      %v229 = vld [vmem:[%s178 + $0x7c] sm:$0xf]
      %v230 = vld [vmem:[%s178 + $0x80] sm:$0xf]
      %v231 = vld [vmem:[%s178 + $0x84] sm:$0xf]
      %v232 = vld [vmem:[%s178 + $0x88] sm:$0xf]
      %v233 = vld [vmem:[%s178 + $0x8c] sm:$0xf]
      %v234 = vld [vmem:[%s178 + $0x90] sm:$0xf]
      %v235 = vld [vmem:[%s178 + $0x94] sm:$0xf]
      %v236 = vld [vmem:[%s178 + $0x98] sm:$0xf]
      %v237 = vld [vmem:[%s178 + $0x9c] sm:$0xf]
      %v238 = vld [vmem:[%s178 + $0xa0] sm:$0xf]
      %v239 = vld [vmem:[%s178 + $0xa4] sm:$0xf]
      %v240 = vld [vmem:[%s178 + $0xa8] sm:$0xf]
      %v241 = vld [vmem:[%s178 + $0xac] sm:$0xf]
      %v242 = vld [vmem:[%s178 + $0xb0] sm:$0xf]
      %v243 = vld [vmem:[%s178 + $0xb4] sm:$0xf]
      %v244 = vld [vmem:[%s178 + $0xb8] sm:$0xf]
      %v245 = vld [vmem:[%s178 + $0xbc] sm:$0xf]
      %v254 = vunpack.c.l.b16 %v190
      %v255 = vunpack.c.h.b16 %v190
      %v256 = vunpack.c.l.b16 %v191
      %v257 = vunpack.c.l.b16 %v192
      %v258 = vunpack.c.h.b16 %v192
      %v259 = vunpack.c.l.b16 %v193
      %v260 = vunpack.c.l.b16 %v194
      %v261 = vunpack.c.h.b16 %v194
      %v262 = vunpack.c.l.b16 %v195
      %v263 = vunpack.c.l.b16 %v196
      %v264 = vunpack.c.h.b16 %v196
      %v265 = vunpack.c.l.b16 %v197
      %v266 = vpack.c.b16 %v257, %v254
      %v267 = vpack.c.b16 %v258, %v255
      %v268 = vpack.c.b16 %v259, %v256
      %v269 = vpack.c.b16 %v263, %v260
      %v270 = vpack.c.b16 %v264, %v261
      %v271 = vpack.c.b16 %v265, %v262
      %v326 = vunpack.c.l.b16 %v198
      %v327 = vunpack.c.l.b16 %v199
      %v328 = vunpack.c.l.b16 %v200
      %v329 = vunpack.c.l.b16 %v201
      %v330 = vunpack.c.l.b16 %v202
      %v331 = vunpack.c.l.b16 %v203
      %v332 = vunpack.c.l.b16 %v204
      %v333 = vunpack.c.l.b16 %v205
      %v334 = vunpack.c.l.b16 %v206
      %v335 = vunpack.c.l.b16 %v207
      %v336 = vunpack.c.l.b16 %v208
      %v337 = vunpack.c.l.b16 %v209
      %v338 = vunpack.c.l.b16 %v210
      %v339 = vunpack.c.l.b16 %v211
      %v340 = vunpack.c.l.b16 %v212
      %v341 = vunpack.c.l.b16 %v213
      %v342 = vunpack.c.l.b16 %v214
      %v343 = vunpack.c.l.b16 %v215
      %v344 = vunpack.c.l.b16 %v216
      %v345 = vunpack.c.l.b16 %v217
      %v346 = vunpack.c.l.b16 %v218
      %v347 = vunpack.c.l.b16 %v219
      %v348 = vunpack.c.l.b16 %v220
      %v349 = vunpack.c.l.b16 %v221
      %v350 = vunpack.c.l.b16 %v222
      %v351 = vunpack.c.l.b16 %v223
      %v352 = vunpack.c.l.b16 %v224
      %v353 = vunpack.c.l.b16 %v225
      %v354 = vunpack.c.l.b16 %v226
      %v355 = vunpack.c.l.b16 %v227
      %v356 = vunpack.c.l.b16 %v228
      %v357 = vunpack.c.l.b16 %v229
      %v358 = vunpack.c.l.b16 %v230
      %v359 = vunpack.c.l.b16 %v231
      %v360 = vunpack.c.l.b16 %v232
      %v361 = vunpack.c.l.b16 %v233
      %v362 = vunpack.c.l.b16 %v234
      %v363 = vunpack.c.l.b16 %v235
      %v364 = vunpack.c.l.b16 %v236
      %v365 = vunpack.c.l.b16 %v237
      %v366 = vunpack.c.l.b16 %v238
      %v367 = vunpack.c.l.b16 %v239
      %v368 = vunpack.c.l.b16 %v240
      %v369 = vunpack.c.l.b16 %v241
      %v370 = vunpack.c.l.b16 %v242
      %v371 = vunpack.c.l.b16 %v243
      %v372 = vunpack.c.l.b16 %v244
      %v373 = vunpack.c.l.b16 %v245
      %v374 = vpack.c.b16 %v327, %v326
      %v375 = vpack.c.b16 %v329, %v328
      %v376 = vpack.c.b16 %v331, %v330
      %v377 = vpack.c.b16 %v333, %v332
      %v378 = vpack.c.b16 %v335, %v334
      %v379 = vpack.c.b16 %v337, %v336
      %v380 = vpack.c.b16 %v339, %v338
      %v381 = vpack.c.b16 %v341, %v340
      %v382 = vpack.c.b16 %v343, %v342
      %v383 = vpack.c.b16 %v345, %v344
      %v384 = vpack.c.b16 %v347, %v346
      %v385 = vpack.c.b16 %v349, %v348
      %v386 = vpack.c.b16 %v351, %v350
      %v387 = vpack.c.b16 %v353, %v352
      %v388 = vpack.c.b16 %v355, %v354
      %v389 = vpack.c.b16 %v357, %v356
      %v390 = vpack.c.b16 %v359, %v358
      %v391 = vpack.c.b16 %v361, %v360
      %v392 = vpack.c.b16 %v363, %v362
      %v393 = vpack.c.b16 %v365, %v364
      %v394 = vpack.c.b16 %v367, %v366
      %v395 = vpack.c.b16 %v369, %v368
      %v396 = vpack.c.b16 %v371, %v370
      %v397 = vpack.c.b16 %v373, %v372
      %422 = vmatprep.subr.bf16.mxu0 0
      %423 = vmatpush1.bf16.msra.mxu0 %v374
      %424 = vmatprep.subr.bf16.mxu0 0
      %425 = vmatpush1.bf16.msra.mxu0 %v375
      %426 = vmatprep.subr.bf16.mxu0 0
      %427 = vmatpush1.bf16.msra.mxu0 %v376
      %428 = vmatprep.subr.bf16.mxu0 0
      %429 = vmatpush1.bf16.msra.mxu0 %v377
      %430 = vmatprep.subr.bf16.mxu0 0
      %431 = vmatpush1.bf16.msra.mxu0 %v378
      %432 = vmatprep.subr.bf16.mxu0 0
      %433 = vmatpush1.bf16.msra.mxu0 %v379
      %434 = vmatprep.subr.bf16.mxu0 0
      %435 = vmatpush1.bf16.msra.mxu0 %v380
      %436 = vmatprep.subr.bf16.mxu0 0
      %437 = vmatpush1.bf16.msra.mxu0 %v381
      %438 = vmatprep.subr.bf16.mxu0 0
      %439 = vmatpush1.bf16.msra.mxu0 %v382
      %440 = vmatprep.subr.bf16.mxu0 0
      %441 = vmatpush1.bf16.msra.mxu0 %v383
      %442 = vmatprep.subr.bf16.mxu0 0
      %443 = vmatpush1.bf16.msra.mxu0 %v384
      %444 = vmatprep.subr.bf16.mxu0 0
      %445 = vmatpush1.bf16.msra.mxu0 %v385
      %446 = vmatprep.subr.bf16.mxu0 0
      %447 = vmatpush1.bf16.msra.mxu0 %v386
      %448 = vmatprep.subr.bf16.mxu0 0
      %449 = vmatpush1.bf16.msra.mxu0 %v387
      %450 = vmatprep.subr.bf16.mxu0 0
      %451 = vmatpush1.bf16.msra.mxu0 %v388
      %452 = vmatprep.subr.bf16.mxu0 0
      %453 = vmatpush1.bf16.msra.mxu0 %v389
      %454 = vmatprep.mubr.bf16.mxu0 %v267
      %455 = vmatmul.mubr.bf16.gmra.mrb[0].mxu0 %v266
      %v456 = vpop.f32.mrb[0].mxu0
      %v457 = vadd.f32 0.0, %v456
      %v458 = vpop.f32.mrb[0].mxu0
      %v459 = vpop.f32.mrb[0].mxu0
      %v460 = vadd.f32 0.0, %v459
      %v461 = vpop.f32.mrb[0].mxu0
      %462 = vmatprep.mubr.bf16.mxu0 %v270
      %463 = vmatmul.mubr.bf16.gmra.mrb[0].mxu0 %v269
      %v464 = vpop.f32.mrb[0].mxu0
      %v465 = vadd.f32 0.0, %v464
      %v466 = vpop.f32.mrb[0].mxu0
      %v467 = vpop.f32.mrb[0].mxu0
      %v468 = vadd.f32 0.0, %v467
      %v469 = vpop.f32.mrb[0].mxu0
      %470 = vdwg.mxu0
      %471 = vmatprep.subr.bf16.mxu0 0
      %472 = vmatpush1.bf16.msra.mxu0 %v390
      %473 = vmatprep.subr.bf16.mxu0 0
      %474 = vmatpush1.bf16.msra.mxu0 %v391
      %475 = vmatprep.subr.bf16.mxu0 0
      %476 = vmatpush1.bf16.msra.mxu0 %v392
      %477 = vmatprep.subr.bf16.mxu0 0
      %478 = vmatpush1.bf16.msra.mxu0 %v393
      %479 = vmatprep.subr.bf16.mxu0 0
      %480 = vmatpush1.bf16.msra.mxu0 %v394
      %481 = vmatprep.subr.bf16.mxu0 0
      %482 = vmatpush1.bf16.msra.mxu0 %v395
      %483 = vmatprep.subr.bf16.mxu0 0
      %484 = vmatpush1.bf16.msra.mxu0 %v396
      %485 = vmatprep.subr.bf16.mxu0 0
      %486 = vmatpush1.bf16.msra.mxu0 %v397
      %487 = vmatprep.subr.bf16.mxu0 0
      %488 = vmatpush1.bf16.msra.mxu0 0
      %489 = vmatprep.subr.bf16.mxu0 0
      %490 = vmatpush1.bf16.msra.mxu0 0
      %491 = vmatprep.subr.bf16.mxu0 0
      %492 = vmatpush1.bf16.msra.mxu0 0
      %493 = vmatprep.subr.bf16.mxu0 0
      %494 = vmatpush1.bf16.msra.mxu0 0
      %495 = vmatprep.subr.bf16.mxu0 0
      %496 = vmatpush1.bf16.msra.mxu0 0
      %497 = vmatprep.subr.bf16.mxu0 0
      %498 = vmatpush1.bf16.msra.mxu0 0
      %499 = vmatprep.subr.bf16.mxu0 0
      %500 = vmatpush1.bf16.msra.mxu0 0
      %501 = vmatprep.subr.bf16.mxu0 0
      %502 = vmatpush1.bf16.msra.mxu0 0
      %503 = vmatprep.mubr.bf16.mxu0 0
      %504 = vmatmul.mubr.bf16.gmra.mrb[0].mxu0 %v268
      %v505 = vpop.f32.mrb[0].mxu0
      %v506 = vadd.f32 %v457, %v505
      %v507 = vpop.f32.mrb[0].mxu0
      %v508 = vpop.f32.mrb[0].mxu0
      %v509 = vadd.f32 %v460, %v508
      %v510 = vpop.f32.mrb[0].mxu0
      %511 = vmatprep.mubr.bf16.mxu0 0
      %512 = vmatmul.mubr.bf16.gmra.mrb[0].mxu0 %v271
      %v513 = vpop.f32.mrb[0].mxu0
      %v514 = vadd.f32 %v465, %v513
      %v515 = vpop.f32.mrb[0].mxu0
      %v516 = vpop.f32.mrb[0].mxu0
      %v517 = vadd.f32 %v468, %v516
      %v518 = vpop.f32.mrb[0].mxu0
      %519 = vdwg.mxu0
      %v520 = vadd.f32 %v506, %v509
      %v521 = vrot.slane %v520, 4
      %v522 = vadd.f32 %v520, %v521
      %v523 = vrot.slane %v522, 2
      %v524 = vadd.f32 %v522, %v523
      %v525 = vrot.slane %v524, 1
      %v526 = vadd.f32 %v524, %v525
      %v527 = vrcp.pop 16.0
      %v528 = vmul.f32 %v526, %v527
      %v529 = vsub.f32 %v506, %v528
      %v530 = vsub.f32 %v509, %v528
      %v531 = vmul.f32 %v529, %v529
      %v532 = vmul.f32 %v530, %v530
      %v533 = vadd.f32 %v531, %v532
      %v534 = vrot.slane %v533, 4
      %v535 = vadd.f32 %v533, %v534
      %v536 = vrot.slane %v535, 2
      %v537 = vadd.f32 %v535, %v536
      %v538 = vrot.slane %v537, 1
      %v539 = vadd.f32 %v537, %v538
      %v540 = vmul.f32 %v539, %v527
      %v541 = vadd.f32 %v540, 1e-05
      %v542 = vrsqrt.pop %v541
      %v543 = vmul.f32 %v529, %v542
      %v544 = vmul.f32 %v530, %v542
      %v545 = vmax.f32 %v543, 0.0
      %v546 = vmax.f32 %v544, 0.0
      %v547 = vpack.c.bf16 %v546, %v545
      %v549 = vunpack.c.l.b16 %v547
      %v550 = vunpack.c.h.b16 %v547
      %v551 = vpack.c.b16 %v549, %v549
      %v552 = vpack.c.b16 %v550, %v550
      %555 = vst [vmem:[%s187] sm:$0xf] %v551
      %556 = vst [vmem:[%s187 + $0x4] sm:$0xf] %v552
      %v557 = vadd.f32 %v514, %v517
      %v558 = vrot.slane %v557, 4
      %v559 = vadd.f32 %v557, %v558
      %v560 = vrot.slane %v559, 2
      %v561 = vadd.f32 %v559, %v560
      %v562 = vrot.slane %v561, 1
      %v563 = vadd.f32 %v561, %v562
      %v564 = vmul.f32 %v563, %v527
      %v565 = vsub.f32 %v514, %v564
      %v566 = vsub.f32 %v517, %v564
      %v567 = vmul.f32 %v565, %v565
      %v568 = vmul.f32 %v566, %v566
      %v569 = vadd.f32 %v567, %v568
      %v570 = vrot.slane %v569, 4
      %v571 = vadd.f32 %v569, %v570
      %v572 = vrot.slane %v571, 2
      %v573 = vadd.f32 %v571, %v572
      %v574 = vrot.slane %v573, 1
      %v575 = vadd.f32 %v573, %v574
      %v576 = vmul.f32 %v575, %v527
      %v577 = vadd.f32 %v576, 1e-05
      %v578 = vrsqrt.pop %v577
      %v579 = vmul.f32 %v565, %v578
      %v580 = vmul.f32 %v566, %v578
      %v581 = vmax.f32 %v579, 0.0
      %v582 = vmax.f32 %v580, 0.0
      %v583 = vpack.c.bf16 %v582, %v581
      %v585 = vunpack.c.l.b16 %v583
      %v586 = vunpack.c.h.b16 %v583
      %v587 = vpack.c.b16 %v585, %v585
      %v588 = vpack.c.b16 %v586, %v586
      %s591 = scalar_lea.vmem %s187, 8
      %592 = vst [vmem:[%s591] sm:$0xf] %v587
      %593 = vst [vmem:[%s591 + $0x4] sm:$0xf] %v588
      %s594 = smul.u32 2, %s17
      %p595 = scmp.lt.s32.totalorder %s594, 3
      %s596 = scalar_select %p595, %s594, 3
      %p597 = scmp.lt.s32.totalorder %s18, 0
      %s598 = scalar_select %p597, %s18, 0
      %s599 = smul.addr %s596, 2
      %s600 = sadd.s32 %s598, %s599
      %s601 = smul.addr %s600, 4
      %s602 = scalar_lea.vmem %s2, %s601
      // Predicated region
      $region29: #{forward.8} parent=27 // pred_check
        %p603 = pneg %p97
      $region30: #{forward.8} parent=27 // pred_check_branch
        %605 = sbr.rel (%p603) target = $region32
      $region31: #{forward.8} parent=27 // pred_region
        %s606 = smul.u32 2, %s17
      $region32: #{forward.8} parent=27 // pred_fallthru
        _
    $region28: #{forward.8} parent=5 // pred_fallthru
      _
    %p607 = scmp.le.s32.totalorder 2, %s8
    // Predicated region
    $region33: #{forward.8} parent=5 // pred_check
      %p608 = pneg %p607
    $region34: #{forward.8} parent=5 // pred_check_branch
      %610 = sbr.rel (%p608) target = $region36
    $region35: #{forward.8} parent=5 // pred_region
      %s611 = ssub.s32 %s8, 2
      // Predicated region
      $region37: #{forward.8} parent=35 // pred_check
        %p612 = pneg %p103
      $region38: #{forward.8} parent=35 // pred_check_branch
        %614 = sbr.rel (%p612) target = $region40
      $region39: #{forward.8} parent=35 // pred_region
        %s615 = smul.u32 2, %s19
        %p616 = scmp.lt.s32.totalorder %s615, 3
        %s617 = scalar_select %p616, %s615, 3
        %p618 = scmp.lt.s32.totalorder %s20, 0
        %s619 = scalar_select %p618, %s20, 0
        %s620 = smul.addr %s617, 2
        %s621 = sadd.s32 %s619, %s620
        %s622 = smul.addr %s621, 4
        %s623 = scalar_lea.vmem %s2, %s622
      $region40: #{forward.8} parent=35 // pred_fallthru
        _
    $region36: #{forward.8} parent=5 // pred_fallthru
      _
  $region6: #{forward.8} parent=0 // loop_footer
    %s12 = sadd.s32 1, %s8
  $region7: #{forward.8} parent=0 // loop_footer_branch
    %7 = sbr.rel target = $region3
  $region8: #{forward.8} parent=0 // loop_exit
    _

// kernel: forward.9
$region0: #{forward.9}
  #allocation0 [shape = 'u32[]', space=smem, size = 0x4, offset = 0x4, fixed_abs, tag = 'smem constant byte address 0x4 - core index']
  #allocation1 [shape = 'u32[144,128]{1,0:T(1,128)}', space=vmem, size = 0x12000, scoped, tag = 'internal scratch']
  %s0 = inlined_call_operand.vmem [shape: bf16[4,16,1664], index: 0, kind: input, shape index: {}]
  %s1 = inlined_call_operand.vmem [shape: bf16[1664,128], index: 1, kind: input, shape index: {}]
  %s2 = inlined_call_operand.vmem [shape: bf16[4,16,128], index: 2, kind: input, shape index: {}]
  %s3 = inlined_call_operand.vmem [shape: bf16[4,16,128], index: 3, kind: output, shape index: {}]
  %s4 = sld [smem:[#allocation0]]
  $region45: #{forward.9} parent=0
    _
  %s6 = ssub.s32 1, %s4
  %s7 = scalar_select 0, %s6, %s4
  loop: start=0, step=1, limit=4
  $region2: #{forward.9} parent=0 // loop_pre_header
    _
  $region3: #{forward.9} parent=0 // loop_header
    %s9 = sphi 0, %s13
    %p10 = scmp.ge.s32.totalorder %s9, 4
    %s16 = sphi 0, %s28
    %s17 = sphi 0, %s24
    %s18 = sphi 0, %s16
    %s19 = sphi 0, %s17
    %s20 = sphi 0, %s18
    %s21 = sphi 0, %s19
    %s31 = sphi 0, %s33
    %s34 = sphi 0, %s31
    %s35 = sphi 0, %s34
    %s51 = sphi 0, %s35
    %s57 = sphi 0, %s59
    %s60 = sphi 0, %s57
    %s61 = sphi 0, %s60
    %s77 = sphi 0, %s61
    %s85 = sphi 0, %s87
    %s88 = sphi 0, %s85
    %s89 = sphi 0, %s88
    %s105 = sphi 0, %s89
    %s113 = sphi 0, %s115
    %s116 = sphi 0, %s113
    %s117 = sphi 0, %s116
    %s133 = sphi 0, %s117
  $region4: #{forward.9} parent=0 // loop_header_branch
    %12 = sbr.rel (%p10) target = $region8
  $region5: #{forward.9} parent=0 // loop_body
    %s14 = ssub.s32 %s9, 1
    %s15 = ssub.s32 %s9, 2
    %s22 = sadd.s32 1, %s17
    %p23 = scmp.ge.s32.totalorder %s22, 1
    %s24 = scalar_select %p23, 0, %s22
    %s25 = sadd.s32 1, %s16
    %s26 = scalar_select %p23, %s25, %s16
    %p27 = scmp.ge.s32.totalorder %s26, 2
    %s28 = scalar_select %p27, 0, %s26
    %s29 = ssub.s32 %s16, %s28
    %p30 = scmp.eq.s32.totalorder %s29, 0
    %s32 = sadd.s32 %s31, 1
    %s33 = scalar_select %p30, %s31, %s32
    %p36 = pneg %p30
    %p37 = scmp.eq.s32.totalorder %s9, 1
    %p38 = por %p36, %p37
    %p39 = scmp.ne.s32.totalorder %s31, %s34
    %p40 = scmp.eq.s32.totalorder %s9, 0
    %p41 = por %p39, %p40
    %p42 = scmp.ne.s32.totalorder %s31, %s34
    %p43 = scmp.eq.s32.totalorder %s14, 1
    %p44 = por %p42, %p43
    %p45 = scmp.ne.s32.totalorder %s34, %s35
    %p46 = scmp.eq.s32.totalorder %s14, 0
    %p47 = por %p45, %p46
    %p48 = scmp.ne.s32.totalorder %s34, %s35
    %p49 = scmp.eq.s32.totalorder %s15, 1
    %p50 = por %p48, %p49
    %p52 = scmp.ne.s32.totalorder %s35, %s51
    %p53 = scmp.eq.s32.totalorder %s15, 0
    %p54 = por %p52, %p53
    %s55 = ssub.s32 %s17, %s24
    %p56 = scmp.eq.s32.totalorder %s55, 0
    %s58 = sadd.s32 %s57, 1
    %s59 = scalar_select %p56, %s57, %s58
    %p62 = pneg %p56
    %p63 = scmp.eq.s32.totalorder %s9, 1
    %p64 = por %p62, %p63
    %p65 = scmp.ne.s32.totalorder %s57, %s60
    %p66 = scmp.eq.s32.totalorder %s9, 0
    %p67 = por %p65, %p66
    %p68 = scmp.ne.s32.totalorder %s57, %s60
    %p69 = scmp.eq.s32.totalorder %s14, 1
    %p70 = por %p68, %p69
    %p71 = scmp.ne.s32.totalorder %s60, %s61
    %p72 = scmp.eq.s32.totalorder %s14, 0
    %p73 = por %p71, %p72
    %p74 = scmp.ne.s32.totalorder %s60, %s61
    %p75 = scmp.eq.s32.totalorder %s15, 1
    %p76 = por %p74, %p75
    %p78 = scmp.ne.s32.totalorder %s61, %s77
    %p79 = scmp.eq.s32.totalorder %s15, 0
    %p80 = por %p78, %p79
    %s81 = ssub.s32 %s16, %s28
    %s82 = ssub.s32 %s17, %s24
    %s83 = sor.u32 %s81, %s82
    %p84 = scmp.eq.s32.totalorder %s83, 0
    %s86 = sadd.s32 %s85, 1
    %s87 = scalar_select %p84, %s85, %s86
    %p90 = pneg %p84
    %p91 = scmp.eq.s32.totalorder %s9, 1
    %p92 = por %p90, %p91
    %p93 = scmp.ne.s32.totalorder %s85, %s88
    %p94 = scmp.eq.s32.totalorder %s9, 0
    %p95 = por %p93, %p94
    %p96 = scmp.ne.s32.totalorder %s85, %s88
    %p97 = scmp.eq.s32.totalorder %s14, 1
    %p98 = por %p96, %p97
    %p99 = scmp.ne.s32.totalorder %s88, %s89
    %p100 = scmp.eq.s32.totalorder %s14, 0
    %p101 = por %p99, %p100
    %p102 = scmp.ne.s32.totalorder %s88, %s89
    %p103 = scmp.eq.s32.totalorder %s15, 1
    %p104 = por %p102, %p103
    %p106 = scmp.ne.s32.totalorder %s89, %s105
    %p107 = scmp.eq.s32.totalorder %s15, 0
    %p108 = por %p106, %p107
    %s109 = ssub.s32 %s16, %s28
    %s110 = ssub.s32 %s17, %s24
    %s111 = sor.u32 %s109, %s110
    %p112 = scmp.eq.s32.totalorder %s111, 0
    %s114 = sadd.s32 %s113, 1
    %s115 = scalar_select %p112, %s113, %s114
    %p118 = pneg %p112
    %p119 = scmp.eq.s32.totalorder %s9, 1
    %p120 = por %p118, %p119
    %p121 = scmp.ne.s32.totalorder %s113, %s116
    %p122 = scmp.eq.s32.totalorder %s9, 0
    %p123 = por %p121, %p122
    %p124 = scmp.ne.s32.totalorder %s113, %s116
    %p125 = scmp.eq.s32.totalorder %s14, 1
    %p126 = por %p124, %p125
    %p127 = scmp.ne.s32.totalorder %s116, %s117
    %p128 = scmp.eq.s32.totalorder %s14, 0
    %p129 = por %p127, %p128
    %p130 = scmp.ne.s32.totalorder %s116, %s117
    %p131 = scmp.eq.s32.totalorder %s15, 1
    %p132 = por %p130, %p131
    %p134 = scmp.ne.s32.totalorder %s117, %s133
    %p135 = scmp.eq.s32.totalorder %s15, 0
    %p136 = por %p134, %p135
    %p137 = scmp.le.s32.totalorder 1, %s9
    %p138 = scmp.lt.s32.totalorder %s9, 3
    %p139 = pnand %p137, %p138
    %p140 = pneg %p139
    // Predicated region
    $region9: #{forward.9} parent=5 // pred_check
      _
    $region10: #{forward.9} parent=5 // pred_check_branch
      %142 = sbr.rel (%p139) target = $region12
    $region11: #{forward.9} parent=5 // pred_region
      %s143 = ssub.s32 %s9, 1
      // Predicated region
      $region13: #{forward.9} parent=11 // pred_check
        %p144 = pneg %p73
      $region14: #{forward.9} parent=11 // pred_check_branch
        %146 = sbr.rel (%p144) target = $region16
      $region15: #{forward.9} parent=11 // pred_region
        %p147 = scmp.lt.s32.totalorder %s19, 0
        %s148 = scalar_select %p147, %s19, 0
        %s149 = smul.addr %s148, 4
        %s150 = scalar_lea.vmem %s1, %s149
      $region16: #{forward.9} parent=11 // pred_fallthru
        _
    $region12: #{forward.9} parent=5 // pred_fallthru
      _
    %p151 = scmp.lt.s32.totalorder %s9, 2
    // Predicated region
    $region17: #{forward.9} parent=5 // pred_check
      %p152 = pneg %p151
    $region18: #{forward.9} parent=5 // pred_check_branch
      %154 = sbr.rel (%p152) target = $region20
    $region19: #{forward.9} parent=5 // pred_region
      // Predicated region
      $region21: #{forward.9} parent=19 // pred_check
        %p155 = pneg %p41
      $region22: #{forward.9} parent=19 // pred_check_branch
        %157 = sbr.rel (%p155) target = $region24
      $region23: #{forward.9} parent=19 // pred_region
        %s158 = smul.u32 2, %s16
        %p159 = scmp.lt.s32.totalorder %s158, 3
        %s160 = scalar_select %p159, %s158, 3
        %s161 = smul.addr %s160, 26
        %s162 = smul.addr %s161, 4
        %s163 = scalar_lea.vmem %s0, %s162
        %s164 = smul.u32 2, %s16
      $region24: #{forward.9} parent=19 // pred_fallthru
        _
      // Predicated region
      $region25: #{forward.9} parent=19 // pred_check
        %p165 = pneg %p95
      $region26: #{forward.9} parent=19 // pred_check_branch
        %167 = sbr.rel (%p165) target = $region28
      $region27: #{forward.9} parent=19 // pred_region
        %s168 = smul.u32 2, %s16
        %p169 = scmp.lt.s32.totalorder %s168, 3
        %s170 = scalar_select %p169, %s168, 3
        %p171 = scmp.lt.s32.totalorder %s17, 0
        %s172 = scalar_select %p171, %s17, 0
        %s173 = smul.addr %s170, 2
        %s174 = sadd.s32 %s172, %s173
        %s175 = smul.addr %s174, 4
        %s176 = scalar_lea.vmem %s2, %s175
        %s177 = smul.u32 2, %s16
      $region28: #{forward.9} parent=19 // pred_fallthru
        _
    $region20: #{forward.9} parent=5 // pred_fallthru
      _
    %p178 = scmp.le.s32.totalorder 1, %s9
    %p179 = scmp.lt.s32.totalorder %s9, 3
    %p180 = pnand %p178, %p179
    %p181 = pneg %p180
    // Predicated region
    $region29: #{forward.9} parent=5 // pred_check
      _
    $region30: #{forward.9} parent=5 // pred_check_branch
      %183 = sbr.rel (%p180) target = $region32
    $region31: #{forward.9} parent=5 // pred_region
      %s184 = ssub.s32 %s9, 1
      %s185 = smul.u32 2, %s18
      %p186 = scmp.lt.s32.totalorder %s185, 3
      %s187 = scalar_select %p186, %s185, 3
      %s188 = smul.addr %s187, 26
      %s189 = smul.addr %s188, 4
      %s190 = scalar_lea.vmem %s0, %s189
      %p191 = pneg %p47
      %p192 = pneg %p44
      %p193 = scmp.lt.s32.totalorder %s19, 0
      %s194 = scalar_select %p193, %s19, 0
      %s195 = smul.addr %s194, 4
      %s196 = scalar_lea.vmem %s1, %s195
      %p197 = pneg %p73
      %p198 = pneg %p70
      %s199 = smul.u32 2, %s18
      %p200 = scmp.lt.s32.totalorder %s199, 3
      %s201 = scalar_select %p200, %s199, 3
      %p202 = scmp.lt.s32.totalorder %s19, 0
      %s203 = scalar_select %p202, %s19, 0
      %s204 = smul.addr %s201, 2
      %s205 = sadd.s32 %s203, %s204
      %s206 = smul.addr %s205, 4
      %s207 = scalar_lea.vmem %s2, %s206
      %p208 = pneg %p101
      %p209 = pneg %p98
      %p210 = pneg %p129
      %p211 = pneg %p126
      %s212 = smul.u32 2, %s18
      %p213 = scmp.lt.s32.totalorder %s212, 3
      %s214 = scalar_select %p213, %s212, 3
      %p215 = scmp.lt.s32.totalorder %s19, 0
      %s216 = scalar_select %p215, %s19, 0
      %s217 = smul.addr %s214, 2
      %s218 = sadd.s32 %s216, %s217
      %s219 = smul.addr %s218, 4
      %s220 = scalar_lea.vmem %s3, %s219
      %s221 = smul.u32 2, %s18
      %p222 = scmp.lt.s32.totalorder %s221, 3
      %s223 = scalar_select %p222, %s221, 3
      %s224 = smul.addr %s223, 26
      %s225 = smul.addr %s224, 4
      %s226 = scalar_lea.vmem %s0, %s225
      %s227 = smul.u32 2, %s18
      %p228 = scmp.lt.s32.totalorder %s19, 0
      %s229 = scalar_select %p228, %s19, 0
      %s230 = smul.addr %s229, 4
      %s231 = scalar_lea.vmem %s1, %s230
      %s232 = smul.u32 2, %s18
      %p233 = scmp.lt.s32.totalorder %s232, 3
      %s234 = scalar_select %p233, %s232, 3
      %p235 = scmp.lt.s32.totalorder %s19, 0
      %s236 = scalar_select %p235, %s19, 0
      %s237 = smul.addr %s234, 2
      %s238 = sadd.s32 %s236, %s237
      %s239 = smul.addr %s238, 4
      %s240 = scalar_lea.vmem %s2, %s239
      %s241 = smul.u32 2, %s18
      %s242 = smul.u32 2, %s18
      %p243 = scmp.lt.s32.totalorder %s242, 3
      %s244 = scalar_select %p243, %s242, 3
      %p245 = scmp.lt.s32.totalorder %s19, 0
      %s246 = scalar_select %p245, %s19, 0
      %s247 = smul.addr %s244, 2
      %s248 = sadd.s32 %s246, %s247
      %s249 = smul.addr %s248, 4
      %s250 = scalar_lea.vmem %s3, %s249
      %s251 = smul.u32 2, %s18
      %v253 = vld [vmem:[%s226] sm:$0xff]
      %v254 = vld [vmem:[%s226 + $0x8] sm:$0xff]
      %v255 = vld [vmem:[%s226 + $0x10] sm:$0xff]
      %v256 = vld [vmem:[%s226 + $0x18] sm:$0xff]
      %v257 = vld [vmem:[%s226 + $0x20] sm:$0xff]
      %v258 = vld [vmem:[%s226 + $0x28] sm:$0xff]
      %v259 = vld [vmem:[%s226 + $0x30] sm:$0xf]
      %v260 = vld [vmem:[%s226 + $0x34] sm:$0xff]
      %v261 = vld [vmem:[%s226 + $0x3c] sm:$0xff]
      %v262 = vld [vmem:[%s226 + $0x44] sm:$0xff]
      %v263 = vld [vmem:[%s226 + $0x4c] sm:$0xff]
      %v264 = vld [vmem:[%s226 + $0x54] sm:$0xff]
      %v265 = vld [vmem:[%s226 + $0x5c] sm:$0xff]
      %v266 = vld [vmem:[%s226 + $0x64] sm:$0xf]
      %v267 = vld [vmem:[%s226 + $0x68] sm:$0xff]
      %v268 = vld [vmem:[%s226 + $0x70] sm:$0xff]
      %v269 = vld [vmem:[%s226 + $0x78] sm:$0xff]
      %v270 = vld [vmem:[%s226 + $0x80] sm:$0xff]
      %v271 = vld [vmem:[%s226 + $0x88] sm:$0xff]
      %v272 = vld [vmem:[%s226 + $0x90] sm:$0xff]
      %v273 = vld [vmem:[%s226 + $0x98] sm:$0xf]
      %v274 = vld [vmem:[%s226 + $0x9c] sm:$0xff]
      %v275 = vld [vmem:[%s226 + $0xa4] sm:$0xff]
      %v276 = vld [vmem:[%s226 + $0xac] sm:$0xff]
      %v277 = vld [vmem:[%s226 + $0xb4] sm:$0xff]
      %v278 = vld [vmem:[%s226 + $0xbc] sm:$0xff]
      %v279 = vld [vmem:[%s226 + $0xc4] sm:$0xff]
      %v280 = vld [vmem:[%s226 + $0xcc] sm:$0xf]
      %v281 = vld [vmem:[%s231] sm:$0xf]
      %v282 = vld [vmem:[%s231 + $0x4] sm:$0xf]
      %v283 = vld [vmem:[%s231 + $0x8] sm:$0xf]
      %v284 = vld [vmem:[%s231 + $0xc] sm:$0xf]
      %v285 = vld [vmem:[%s231 + $0x10] sm:$0xf]
      %v286 = vld [vmem:[%s231 + $0x14] sm:$0xf]
      %v287 = vld [vmem:[%s231 + $0x18] sm:$0xf]
      %v288 = vld [vmem:[%s231 + $0x1c] sm:$0xf]
      %v289 = vld [vmem:[%s231 + $0x20] sm:$0xf]
      %v290 = vld [vmem:[%s231 + $0x24] sm:$0xf]
      %v291 = vld [vmem:[%s231 + $0x28] sm:$0xf]
      %v292 = vld [vmem:[%s231 + $0x2c] sm:$0xf]
      %v293 = vld [vmem:[%s231 + $0x30] sm:$0xf]
      %v294 = vld [vmem:[%s231 + $0x34] sm:$0xf]
      %v295 = vld [vmem:[%s231 + $0x38] sm:$0xf]
      %v296 = vld [vmem:[%s231 + $0x3c] sm:$0xf]
      %v297 = vld [vmem:[%s231 + $0x40] sm:$0xf]
      %v298 = vld [vmem:[%s231 + $0x44] sm:$0xf]
      %v299 = vld [vmem:[%s231 + $0x48] sm:$0xf]
      %v300 = vld [vmem:[%s231 + $0x4c] sm:$0xf]
      %v301 = vld [vmem:[%s231 + $0x50] sm:$0xf]
      %v302 = vld [vmem:[%s231 + $0x54] sm:$0xf]
      %v303 = vld [vmem:[%s231 + $0x58] sm:$0xf]
      %v304 = vld [vmem:[%s231 + $0x5c] sm:$0xf]
      %v305 = vld [vmem:[%s231 + $0x60] sm:$0xf]
      %v306 = vld [vmem:[%s231 + $0x64] sm:$0xf]
      %v307 = vld [vmem:[%s231 + $0x68] sm:$0xf]
      %v308 = vld [vmem:[%s231 + $0x6c] sm:$0xf]
      %v309 = vld [vmem:[%s231 + $0x70] sm:$0xf]
      %v310 = vld [vmem:[%s231 + $0x74] sm:$0xf]
      %v311 = vld [vmem:[%s231 + $0x78] sm:$0xf]
      %v312 = vld [vmem:[%s231 + $0x7c] sm:$0xf]
      %v313 = vld [vmem:[%s231 + $0x80] sm:$0xf]
      %v314 = vld [vmem:[%s231 + $0x84] sm:$0xf]
      %v315 = vld [vmem:[%s231 + $0x88] sm:$0xf]
      %v316 = vld [vmem:[%s231 + $0x8c] sm:$0xf]
      %v317 = vld [vmem:[%s231 + $0x90] sm:$0xf]
      %v318 = vld [vmem:[%s231 + $0x94] sm:$0xf]
      %v319 = vld [vmem:[%s231 + $0x98] sm:$0xf]
      %v320 = vld [vmem:[%s231 + $0x9c] sm:$0xf]
      %v321 = vld [vmem:[%s231 + $0xa0] sm:$0xf]
      %v322 = vld [vmem:[%s231 + $0xa4] sm:$0xf]
      %v323 = vld [vmem:[%s231 + $0xa8] sm:$0xf]
      %v324 = vld [vmem:[%s231 + $0xac] sm:$0xf]
      %v325 = vld [vmem:[%s231 + $0xb0] sm:$0xf]
      %v326 = vld [vmem:[%s231 + $0xb4] sm:$0xf]
      %v327 = vld [vmem:[%s231 + $0xb8] sm:$0xf]
      %v328 = vld [vmem:[%s231 + $0xbc] sm:$0xf]
      %v329 = vld [vmem:[%s231 + $0xc0] sm:$0xf]
      %v330 = vld [vmem:[%s231 + $0xc4] sm:$0xf]
      %v331 = vld [vmem:[%s231 + $0xc8] sm:$0xf]
      %v332 = vld [vmem:[%s231 + $0xcc] sm:$0xf]
      %v333 = vld [vmem:[%s231 + $0xd0] sm:$0xf]
      %v334 = vld [vmem:[%s231 + $0xd4] sm:$0xf]
      %v335 = vld [vmem:[%s231 + $0xd8] sm:$0xf]
      %v336 = vld [vmem:[%s231 + $0xdc] sm:$0xf]
      %v337 = vld [vmem:[%s231 + $0xe0] sm:$0xf]
      %v338 = vld [vmem:[%s231 + $0xe4] sm:$0xf]
      %v339 = vld [vmem:[%s231 + $0xe8] sm:$0xf]
      %v340 = vld [vmem:[%s231 + $0xec] sm:$0xf]
      %v341 = vld [vmem:[%s231 + $0xf0] sm:$0xf]
      %v342 = vld [vmem:[%s231 + $0xf4] sm:$0xf]
      %v343 = vld [vmem:[%s231 + $0xf8] sm:$0xf]
      %v344 = vld [vmem:[%s231 + $0xfc] sm:$0xf]
      %v345 = vld [vmem:[%s231 + $0x100] sm:$0xf]
      %v346 = vld [vmem:[%s231 + $0x104] sm:$0xf]
      %v347 = vld [vmem:[%s231 + $0x108] sm:$0xf]
      %v348 = vld [vmem:[%s231 + $0x10c] sm:$0xf]
      %v349 = vld [vmem:[%s231 + $0x110] sm:$0xf]
      %v350 = vld [vmem:[%s231 + $0x114] sm:$0xf]
      %v351 = vld [vmem:[%s231 + $0x118] sm:$0xf]
      %v352 = vld [vmem:[%s231 + $0x11c] sm:$0xf]
      %v353 = vld [vmem:[%s231 + $0x120] sm:$0xf]
      %v354 = vld [vmem:[%s231 + $0x124] sm:$0xf]
      %v355 = vld [vmem:[%s231 + $0x128] sm:$0xf]
      %v356 = vld [vmem:[%s231 + $0x12c] sm:$0xf]
      %v357 = vld [vmem:[%s231 + $0x130] sm:$0xf]
      %v358 = vld [vmem:[%s231 + $0x134] sm:$0xf]
      %v359 = vld [vmem:[%s231 + $0x138] sm:$0xf]
      %v360 = vld [vmem:[%s231 + $0x13c] sm:$0xf]
      %v361 = vld [vmem:[%s231 + $0x140] sm:$0xf]
      %v362 = vld [vmem:[%s231 + $0x144] sm:$0xf]
      %v363 = vld [vmem:[%s231 + $0x148] sm:$0xf]
      %v364 = vld [vmem:[%s231 + $0x14c] sm:$0xf]
      %v365 = vld [vmem:[%s231 + $0x150] sm:$0xf]
      %v366 = vld [vmem:[%s231 + $0x154] sm:$0xf]
      %v367 = vld [vmem:[%s231 + $0x158] sm:$0xf]
      %v368 = vld [vmem:[%s231 + $0x15c] sm:$0xf]
      %v369 = vld [vmem:[%s231 + $0x160] sm:$0xf]
      %v370 = vld [vmem:[%s231 + $0x164] sm:$0xf]
      %v371 = vld [vmem:[%s231 + $0x168] sm:$0xf]
      %v372 = vld [vmem:[%s231 + $0x16c] sm:$0xf]
      %v373 = vld [vmem:[%s231 + $0x170] sm:$0xf]
      %v374 = vld [vmem:[%s231 + $0x174] sm:$0xf]
      %v375 = vld [vmem:[%s231 + $0x178] sm:$0xf]
      %v376 = vld [vmem:[%s231 + $0x17c] sm:$0xf]
      %v377 = vld [vmem:[%s231 + $0x180] sm:$0xf]
      %v378 = vld [vmem:[%s231 + $0x184] sm:$0xf]
      %v379 = vld [vmem:[%s231 + $0x188] sm:$0xf]
      %v380 = vld [vmem:[%s231 + $0x18c] sm:$0xf]
      %v381 = vld [vmem:[%s231 + $0x190] sm:$0xf]
      %v382 = vld [vmem:[%s231 + $0x194] sm:$0xf]
      %v383 = vld [vmem:[%s231 + $0x198] sm:$0xf]
      %v384 = vld [vmem:[%s231 + $0x19c] sm:$0xf]
      %v385 = vld [vmem:[%s231 + $0x1a0] sm:$0xf]
      %v386 = vld [vmem:[%s231 + $0x1a4] sm:$0xf]
      %v387 = vld [vmem:[%s231 + $0x1a8] sm:$0xf]
      %v388 = vld [vmem:[%s231 + $0x1ac] sm:$0xf]
      %v389 = vld [vmem:[%s231 + $0x1b0] sm:$0xf]
      %v390 = vld [vmem:[%s231 + $0x1b4] sm:$0xf]
      %v391 = vld [vmem:[%s231 + $0x1b8] sm:$0xf]
      %v392 = vld [vmem:[%s231 + $0x1bc] sm:$0xf]
      %v393 = vld [vmem:[%s231 + $0x1c0] sm:$0xf]
      %v394 = vld [vmem:[%s231 + $0x1c4] sm:$0xf]
      %v395 = vld [vmem:[%s231 + $0x1c8] sm:$0xf]
      %v396 = vld [vmem:[%s231 + $0x1cc] sm:$0xf]
      %v397 = vld [vmem:[%s231 + $0x1d0] sm:$0xf]
      %v398 = vld [vmem:[%s231 + $0x1d4] sm:$0xf]
      %v399 = vld [vmem:[%s231 + $0x1d8] sm:$0xf]
      %v400 = vld [vmem:[%s231 + $0x1dc] sm:$0xf]
      %v401 = vld [vmem:[%s231 + $0x1e0] sm:$0xf]
      %v402 = vld [vmem:[%s231 + $0x1e4] sm:$0xf]
      %v403 = vld [vmem:[%s231 + $0x1e8] sm:$0xf]
      %v404 = vld [vmem:[%s231 + $0x1ec] sm:$0xf]
      %v405 = vld [vmem:[%s231 + $0x1f0] sm:$0xf]
      %v406 = vld [vmem:[%s231 + $0x1f4] sm:$0xf]
      %v407 = vld [vmem:[%s231 + $0x1f8] sm:$0xf]
      %v408 = vld [vmem:[%s231 + $0x1fc] sm:$0xf]
      %v409 = vld [vmem:[%s231 + $0x200] sm:$0xf]
      %v410 = vld [vmem:[%s231 + $0x204] sm:$0xf]
      %v411 = vld [vmem:[%s231 + $0x208] sm:$0xf]
      %v412 = vld [vmem:[%s231 + $0x20c] sm:$0xf]
      %v413 = vld [vmem:[%s231 + $0x210] sm:$0xf]
      %v414 = vld [vmem:[%s231 + $0x214] sm:$0xf]
      %v415 = vld [vmem:[%s231 + $0x218] sm:$0xf]
      %v416 = vld [vmem:[%s231 + $0x21c] sm:$0xf]
      %v417 = vld [vmem:[%s231 + $0x220] sm:$0xf]
      %v418 = vld [vmem:[%s231 + $0x224] sm:$0xf]
      %v419 = vld [vmem:[%s231 + $0x228] sm:$0xf]
      %v420 = vld [vmem:[%s231 + $0x22c] sm:$0xf]
      %v421 = vld [vmem:[%s231 + $0x230] sm:$0xf]
      %v422 = vld [vmem:[%s231 + $0x234] sm:$0xf]
      %v423 = vld [vmem:[%s231 + $0x238] sm:$0xf]
      %v424 = vld [vmem:[%s231 + $0x23c] sm:$0xf]
      %v425 = vld [vmem:[%s231 + $0x240] sm:$0xf]
      %v426 = vld [vmem:[%s231 + $0x244] sm:$0xf]
      %v427 = vld [vmem:[%s231 + $0x248] sm:$0xf]
      %v428 = vld [vmem:[%s231 + $0x24c] sm:$0xf]
      %v429 = vld [vmem:[%s231 + $0x250] sm:$0xf]
      %v430 = vld [vmem:[%s231 + $0x254] sm:$0xf]
      %v431 = vld [vmem:[%s231 + $0x258] sm:$0xf]
      %v432 = vld [vmem:[%s231 + $0x25c] sm:$0xf]
      %v433 = vld [vmem:[%s231 + $0x260] sm:$0xf]
      %v434 = vld [vmem:[%s231 + $0x264] sm:$0xf]
      %v435 = vld [vmem:[%s231 + $0x268] sm:$0xf]
      %v436 = vld [vmem:[%s231 + $0x26c] sm:$0xf]
      %v437 = vld [vmem:[%s231 + $0x270] sm:$0xf]
      %v438 = vld [vmem:[%s231 + $0x274] sm:$0xf]
      %v439 = vld [vmem:[%s231 + $0x278] sm:$0xf]
      %v440 = vld [vmem:[%s231 + $0x27c] sm:$0xf]
      %v441 = vld [vmem:[%s231 + $0x280] sm:$0xf]
      %v442 = vld [vmem:[%s231 + $0x284] sm:$0xf]
      %v443 = vld [vmem:[%s231 + $0x288] sm:$0xf]
      %v444 = vld [vmem:[%s231 + $0x28c] sm:$0xf]
      %v445 = vld [vmem:[%s231 + $0x290] sm:$0xf]
      %v446 = vld [vmem:[%s231 + $0x294] sm:$0xf]
      %v447 = vld [vmem:[%s231 + $0x298] sm:$0xf]
      %v448 = vld [vmem:[%s231 + $0x29c] sm:$0xf]
      %v449 = vld [vmem:[%s231 + $0x2a0] sm:$0xf]
      %v450 = vld [vmem:[%s231 + $0x2a4] sm:$0xf]
      %v451 = vld [vmem:[%s231 + $0x2a8] sm:$0xf]
      %v452 = vld [vmem:[%s231 + $0x2ac] sm:$0xf]
      %v453 = vld [vmem:[%s231 + $0x2b0] sm:$0xf]
      %v454 = vld [vmem:[%s231 + $0x2b4] sm:$0xf]
      %v455 = vld [vmem:[%s231 + $0x2b8] sm:$0xf]
      %v456 = vld [vmem:[%s231 + $0x2bc] sm:$0xf]
      %v457 = vld [vmem:[%s231 + $0x2c0] sm:$0xf]
      %v458 = vld [vmem:[%s231 + $0x2c4] sm:$0xf]
      %v459 = vld [vmem:[%s231 + $0x2c8] sm:$0xf]
      %v460 = vld [vmem:[%s231 + $0x2cc] sm:$0xf]
      %v461 = vld [vmem:[%s231 + $0x2d0] sm:$0xf]
      %v462 = vld [vmem:[%s231 + $0x2d4] sm:$0xf]
      %v463 = vld [vmem:[%s231 + $0x2d8] sm:$0xf]
      %v464 = vld [vmem:[%s231 + $0x2dc] sm:$0xf]
      %v465 = vld [vmem:[%s231 + $0x2e0] sm:$0xf]
      %v466 = vld [vmem:[%s231 + $0x2e4] sm:$0xf]
      %v467 = vld [vmem:[%s231 + $0x2e8] sm:$0xf]
      %v468 = vld [vmem:[%s231 + $0x2ec] sm:$0xf]
      %v469 = vld [vmem:[%s231 + $0x2f0] sm:$0xf]
      %v470 = vld [vmem:[%s231 + $0x2f4] sm:$0xf]
      %v471 = vld [vmem:[%s231 + $0x2f8] sm:$0xf]
      %v472 = vld [vmem:[%s231 + $0x2fc] sm:$0xf]
      %v473 = vld [vmem:[%s231 + $0x300] sm:$0xf]
      %v474 = vld [vmem:[%s231 + $0x304] sm:$0xf]
      %v475 = vld [vmem:[%s231 + $0x308] sm:$0xf]
      %v476 = vld [vmem:[%s231 + $0x30c] sm:$0xf]
      %v477 = vld [vmem:[%s231 + $0x310] sm:$0xf]
      %v478 = vld [vmem:[%s231 + $0x314] sm:$0xf]
      %v479 = vld [vmem:[%s231 + $0x318] sm:$0xf]
      %v480 = vld [vmem:[%s231 + $0x31c] sm:$0xf]
      %v481 = vld [vmem:[%s231 + $0x320] sm:$0xf]
      %v482 = vld [vmem:[%s231 + $0x324] sm:$0xf]
      %v483 = vld [vmem:[%s231 + $0x328] sm:$0xf]
      %v484 = vld [vmem:[%s231 + $0x32c] sm:$0xf]
      %v485 = vld [vmem:[%s231 + $0x330] sm:$0xf]
      %v486 = vld [vmem:[%s231 + $0x334] sm:$0xf]
      %v487 = vld [vmem:[%s231 + $0x338] sm:$0xf]
      %v488 = vld [vmem:[%s231 + $0x33c] sm:$0xf]
      %v517 = vunpack.c.l.b16 %v253
      %v518 = vunpack.c.h.b16 %v253
      %v519 = vunpack.c.l.b16 %v254
      %v520 = vunpack.c.h.b16 %v254
      %v521 = vunpack.c.l.b16 %v255
      %v522 = vunpack.c.h.b16 %v255
      %v523 = vunpack.c.l.b16 %v256
      %v524 = vunpack.c.h.b16 %v256
      %v525 = vunpack.c.l.b16 %v257
      %v526 = vunpack.c.h.b16 %v257
      %v527 = vunpack.c.l.b16 %v258
      %v528 = vunpack.c.h.b16 %v258
      %v529 = vunpack.c.l.b16 %v259
      %v530 = vunpack.c.l.b16 %v260
      %v531 = vunpack.c.h.b16 %v260
      %v532 = vunpack.c.l.b16 %v261
      %v533 = vunpack.c.h.b16 %v261
      %v534 = vunpack.c.l.b16 %v262
      %v535 = vunpack.c.h.b16 %v262
      %v536 = vunpack.c.l.b16 %v263
      %v537 = vunpack.c.h.b16 %v263
      %v538 = vunpack.c.l.b16 %v264
      %v539 = vunpack.c.h.b16 %v264
      %v540 = vunpack.c.l.b16 %v265
      %v541 = vunpack.c.h.b16 %v265
      %v542 = vunpack.c.l.b16 %v266
      %v543 = vunpack.c.l.b16 %v267
      %v544 = vunpack.c.h.b16 %v267
      %v545 = vunpack.c.l.b16 %v268
      %v546 = vunpack.c.h.b16 %v268
      %v547 = vunpack.c.l.b16 %v269
      %v548 = vunpack.c.h.b16 %v269
      %v549 = vunpack.c.l.b16 %v270
      %v550 = vunpack.c.h.b16 %v270
      %v551 = vunpack.c.l.b16 %v271
      %v552 = vunpack.c.h.b16 %v271
      %v553 = vunpack.c.l.b16 %v272
      %v554 = vunpack.c.h.b16 %v272
      %v555 = vunpack.c.l.b16 %v273
      %v556 = vunpack.c.l.b16 %v274
      %v557 = vunpack.c.h.b16 %v274
      %v558 = vunpack.c.l.b16 %v275
      %v559 = vunpack.c.h.b16 %v275
      %v560 = vunpack.c.l.b16 %v276
      %v561 = vunpack.c.h.b16 %v276
      %v562 = vunpack.c.l.b16 %v277
      %v563 = vunpack.c.h.b16 %v277
      %v564 = vunpack.c.l.b16 %v278
      %v565 = vunpack.c.h.b16 %v278
      %v566 = vunpack.c.l.b16 %v279
      %v567 = vunpack.c.h.b16 %v279
      %v568 = vunpack.c.l.b16 %v280
      %v569 = vpack.c.b16 %v530, %v517
      %v570 = vpack.c.b16 %v531, %v518
      %v571 = vpack.c.b16 %v532, %v519
      %v572 = vpack.c.b16 %v533, %v520
      %v573 = vpack.c.b16 %v534, %v521
      %v574 = vpack.c.b16 %v535, %v522
      %v575 = vpack.c.b16 %v536, %v523
      %v576 = vpack.c.b16 %v537, %v524
      %v577 = vpack.c.b16 %v538, %v525
      %v578 = vpack.c.b16 %v539, %v526
      %v579 = vpack.c.b16 %v540, %v527
      %v580 = vpack.c.b16 %v541, %v528
      %v581 = vpack.c.b16 %v542, %v529
      %v582 = vpack.c.b16 %v556, %v543
      %v583 = vpack.c.b16 %v557, %v544
      %v584 = vpack.c.b16 %v558, %v545
      %v585 = vpack.c.b16 %v559, %v546
      %v586 = vpack.c.b16 %v560, %v547
      %v587 = vpack.c.b16 %v561, %v548
      %v588 = vpack.c.b16 %v562, %v549
      %v589 = vpack.c.b16 %v563, %v550
      %v590 = vpack.c.b16 %v564, %v551
      %v591 = vpack.c.b16 %v565, %v552
      %v592 = vpack.c.b16 %v566, %v553
      %v593 = vpack.c.b16 %v567, %v554
      %v594 = vpack.c.b16 %v568, %v555
      %v829 = vunpack.c.l.b16 %v281
      %v830 = vunpack.c.l.b16 %v282
      %v831 = vunpack.c.l.b16 %v283
      %v832 = vunpack.c.l.b16 %v284
      %v833 = vunpack.c.l.b16 %v285
      %v834 = vunpack.c.l.b16 %v286
      %v835 = vunpack.c.l.b16 %v287
      %v836 = vunpack.c.l.b16 %v288
      %v837 = vunpack.c.l.b16 %v289
      %v838 = vunpack.c.l.b16 %v290
      %v839 = vunpack.c.l.b16 %v291
      %v840 = vunpack.c.l.b16 %v292
      %v841 = vunpack.c.l.b16 %v293
      %v842 = vunpack.c.l.b16 %v294
      %v843 = vunpack.c.l.b16 %v295
      %v844 = vunpack.c.l.b16 %v296
      %v845 = vunpack.c.l.b16 %v297
      %v846 = vunpack.c.l.b16 %v298
      %v847 = vunpack.c.l.b16 %v299
      %v848 = vunpack.c.l.b16 %v300
      %v849 = vunpack.c.l.b16 %v301
      %v850 = vunpack.c.l.b16 %v302
      %v851 = vunpack.c.l.b16 %v303
      %v852 = vunpack.c.l.b16 %v304
      %v853 = vunpack.c.l.b16 %v305
      %v854 = vunpack.c.l.b16 %v306
      %v855 = vunpack.c.l.b16 %v307
      %v856 = vunpack.c.l.b16 %v308
      %v857 = vunpack.c.l.b16 %v309
      %v858 = vunpack.c.l.b16 %v310
      %v859 = vunpack.c.l.b16 %v311
      %v860 = vunpack.c.l.b16 %v312
      %v861 = vunpack.c.l.b16 %v313
      %v862 = vunpack.c.l.b16 %v314
      %v863 = vunpack.c.l.b16 %v315
      %v864 = vunpack.c.l.b16 %v316
      %v865 = vunpack.c.l.b16 %v317
      %v866 = vunpack.c.l.b16 %v318
      %v867 = vunpack.c.l.b16 %v319
      %v868 = vunpack.c.l.b16 %v320
      %v869 = vunpack.c.l.b16 %v321
      %v870 = vunpack.c.l.b16 %v322
      %v871 = vunpack.c.l.b16 %v323
      %v872 = vunpack.c.l.b16 %v324
      %v873 = vunpack.c.l.b16 %v325
      %v874 = vunpack.c.l.b16 %v326
      %v875 = vunpack.c.l.b16 %v327
      %v876 = vunpack.c.l.b16 %v328
      %v877 = vunpack.c.l.b16 %v329
      %v878 = vunpack.c.l.b16 %v330
      %v879 = vunpack.c.l.b16 %v331
      %v880 = vunpack.c.l.b16 %v332
      %v881 = vunpack.c.l.b16 %v333
      %v882 = vunpack.c.l.b16 %v334
      %v883 = vunpack.c.l.b16 %v335
      %v884 = vunpack.c.l.b16 %v336
      %v885 = vunpack.c.l.b16 %v337
      %v886 = vunpack.c.l.b16 %v338
      %v887 = vunpack.c.l.b16 %v339
      %v888 = vunpack.c.l.b16 %v340
      %v889 = vunpack.c.l.b16 %v341
      %v890 = vunpack.c.l.b16 %v342
      %v891 = vunpack.c.l.b16 %v343
      %v892 = vunpack.c.l.b16 %v344
      %v893 = vunpack.c.l.b16 %v345
      %v894 = vunpack.c.l.b16 %v346
      %v895 = vunpack.c.l.b16 %v347
      %v896 = vunpack.c.l.b16 %v348
      %v897 = vunpack.c.l.b16 %v349
      %v898 = vunpack.c.l.b16 %v350
      %v899 = vunpack.c.l.b16 %v351
      %v900 = vunpack.c.l.b16 %v352
      %v901 = vunpack.c.l.b16 %v353
      %v902 = vunpack.c.l.b16 %v354
      %v903 = vunpack.c.l.b16 %v355
      %v904 = vunpack.c.l.b16 %v356
      %v905 = vunpack.c.l.b16 %v357
      %v906 = vunpack.c.l.b16 %v358
      %v907 = vunpack.c.l.b16 %v359
      %v908 = vunpack.c.l.b16 %v360
      %v909 = vunpack.c.l.b16 %v361
      %v910 = vunpack.c.l.b16 %v362
      %v911 = vunpack.c.l.b16 %v363
      %v912 = vunpack.c.l.b16 %v364
      %v913 = vunpack.c.l.b16 %v365
      %v914 = vunpack.c.l.b16 %v366
      %v915 = vunpack.c.l.b16 %v367
      %v916 = vunpack.c.l.b16 %v368
      %v917 = vunpack.c.l.b16 %v369
      %v918 = vunpack.c.l.b16 %v370
      %v919 = vunpack.c.l.b16 %v371
      %v920 = vunpack.c.l.b16 %v372
      %v921 = vunpack.c.l.b16 %v373
      %v922 = vunpack.c.l.b16 %v374
      %v923 = vunpack.c.l.b16 %v375
      %v924 = vunpack.c.l.b16 %v376
      %v925 = vunpack.c.l.b16 %v377
      %v926 = vunpack.c.l.b16 %v378
      %v927 = vunpack.c.l.b16 %v379
      %v928 = vunpack.c.l.b16 %v380
      %v929 = vunpack.c.l.b16 %v381
      %v930 = vunpack.c.l.b16 %v382
      %v931 = vunpack.c.l.b16 %v383
      %v932 = vunpack.c.l.b16 %v384
      %v933 = vunpack.c.l.b16 %v385
      %v934 = vunpack.c.l.b16 %v386
      %v935 = vunpack.c.l.b16 %v387
      %v936 = vunpack.c.l.b16 %v388
      %v937 = vunpack.c.l.b16 %v389
      %v938 = vunpack.c.l.b16 %v390
      %v939 = vunpack.c.l.b16 %v391
      %v940 = vunpack.c.l.b16 %v392
      %v941 = vunpack.c.l.b16 %v393
      %v942 = vunpack.c.l.b16 %v394
      %v943 = vunpack.c.l.b16 %v395
      %v944 = vunpack.c.l.b16 %v396
      %v945 = vunpack.c.l.b16 %v397
      %v946 = vunpack.c.l.b16 %v398
      %v947 = vunpack.c.l.b16 %v399
      %v948 = vunpack.c.l.b16 %v400
      %v949 = vunpack.c.l.b16 %v401
      %v950 = vunpack.c.l.b16 %v402
      %v951 = vunpack.c.l.b16 %v403
      %v952 = vunpack.c.l.b16 %v404
      %v953 = vunpack.c.l.b16 %v405
      %v954 = vunpack.c.l.b16 %v406
      %v955 = vunpack.c.l.b16 %v407
      %v956 = vunpack.c.l.b16 %v408
      %v957 = vunpack.c.l.b16 %v409
      %v958 = vunpack.c.l.b16 %v410
      %v959 = vunpack.c.l.b16 %v411
      %v960 = vunpack.c.l.b16 %v412
      %v961 = vunpack.c.l.b16 %v413
      %v962 = vunpack.c.l.b16 %v414
      %v963 = vunpack.c.l.b16 %v415
      %v964 = vunpack.c.l.b16 %v416
      %v965 = vunpack.c.l.b16 %v417
      %v966 = vunpack.c.l.b16 %v418
      %v967 = vunpack.c.l.b16 %v419
      %v968 = vunpack.c.l.b16 %v420
      %v969 = vunpack.c.l.b16 %v421
      %v970 = vunpack.c.l.b16 %v422
      %v971 = vunpack.c.l.b16 %v423
      %v972 = vunpack.c.l.b16 %v424
      %v973 = vunpack.c.l.b16 %v425
      %v974 = vunpack.c.l.b16 %v426
      %v975 = vunpack.c.l.b16 %v427
      %v976 = vunpack.c.l.b16 %v428
      %v977 = vunpack.c.l.b16 %v429
      %v978 = vunpack.c.l.b16 %v430
      %v979 = vunpack.c.l.b16 %v431
      %v980 = vunpack.c.l.b16 %v432
      %v981 = vunpack.c.l.b16 %v433
      %v982 = vunpack.c.l.b16 %v434
      %v983 = vunpack.c.l.b16 %v435
      %v984 = vunpack.c.l.b16 %v436
      %v985 = vunpack.c.l.b16 %v437
      %v986 = vunpack.c.l.b16 %v438
      %v987 = vunpack.c.l.b16 %v439
      %v988 = vunpack.c.l.b16 %v440
      %v989 = vunpack.c.l.b16 %v441
      %v990 = vunpack.c.l.b16 %v442
      %v991 = vunpack.c.l.b16 %v443
      %v992 = vunpack.c.l.b16 %v444
      %v993 = vunpack.c.l.b16 %v445
      %v994 = vunpack.c.l.b16 %v446
      %v995 = vunpack.c.l.b16 %v447
      %v996 = vunpack.c.l.b16 %v448
      %v997 = vunpack.c.l.b16 %v449
      %v998 = vunpack.c.l.b16 %v450
      %v999 = vunpack.c.l.b16 %v451
      %v1000 = vunpack.c.l.b16 %v452
      %v1001 = vunpack.c.l.b16 %v453
      %v1002 = vunpack.c.l.b16 %v454
      %v1003 = vunpack.c.l.b16 %v455
      %v1004 = vunpack.c.l.b16 %v456
      %v1005 = vunpack.c.l.b16 %v457
      %v1006 = vunpack.c.l.b16 %v458
      %v1007 = vunpack.c.l.b16 %v459
      %v1008 = vunpack.c.l.b16 %v460
      %v1009 = vunpack.c.l.b16 %v461
      %v1010 = vunpack.c.l.b16 %v462
      %v1011 = vunpack.c.l.b16 %v463
      %v1012 = vunpack.c.l.b16 %v464
      %v1013 = vunpack.c.l.b16 %v465
      %v1014 = vunpack.c.l.b16 %v466
      %v1015 = vunpack.c.l.b16 %v467
      %v1016 = vunpack.c.l.b16 %v468
      %v1017 = vunpack.c.l.b16 %v469
      %v1018 = vunpack.c.l.b16 %v470
      %v1019 = vunpack.c.l.b16 %v471
      %v1020 = vunpack.c.l.b16 %v472
      %v1021 = vunpack.c.l.b16 %v473
      %v1022 = vunpack.c.l.b16 %v474
      %v1023 = vunpack.c.l.b16 %v475
      %v1024 = vunpack.c.l.b16 %v476
      %v1025 = vunpack.c.l.b16 %v477
      %v1026 = vunpack.c.l.b16 %v478
      %v1027 = vunpack.c.l.b16 %v479
      %v1028 = vunpack.c.l.b16 %v480
      %v1029 = vunpack.c.l.b16 %v481
      %v1030 = vunpack.c.l.b16 %v482
      %v1031 = vunpack.c.l.b16 %v483
      %v1032 = vunpack.c.l.b16 %v484
      %v1033 = vunpack.c.l.b16 %v485
      %v1034 = vunpack.c.l.b16 %v486
      %v1035 = vunpack.c.l.b16 %v487
      %v1036 = vunpack.c.l.b16 %v488
      %v1037 = vpack.c.b16 %v830, %v829
      %v1038 = vpack.c.b16 %v832, %v831
      %v1039 = vpack.c.b16 %v834, %v833
      %v1040 = vpack.c.b16 %v836, %v835
      %v1041 = vpack.c.b16 %v838, %v837
      %v1042 = vpack.c.b16 %v840, %v839
      %v1043 = vpack.c.b16 %v842, %v841
      %v1044 = vpack.c.b16 %v844, %v843
      %v1045 = vpack.c.b16 %v846, %v845
      %v1046 = vpack.c.b16 %v848, %v847
      %v1047 = vpack.c.b16 %v850, %v849
      %v1048 = vpack.c.b16 %v852, %v851
      %v1049 = vpack.c.b16 %v854, %v853
      %v1050 = vpack.c.b16 %v856, %v855
      %v1051 = vpack.c.b16 %v858, %v857
      %v1052 = vpack.c.b16 %v860, %v859
      %v1053 = vpack.c.b16 %v862, %v861
      %v1054 = vpack.c.b16 %v864, %v863
      %v1055 = vpack.c.b16 %v866, %v865
      %v1056 = vpack.c.b16 %v868, %v867
      %v1057 = vpack.c.b16 %v870, %v869
      %v1058 = vpack.c.b16 %v872, %v871
      %v1059 = vpack.c.b16 %v874, %v873
      %v1060 = vpack.c.b16 %v876, %v875
      %v1061 = vpack.c.b16 %v878, %v877
      %v1062 = vpack.c.b16 %v880, %v879
      %v1063 = vpack.c.b16 %v882, %v881
      %v1064 = vpack.c.b16 %v884, %v883
      %v1065 = vpack.c.b16 %v886, %v885
      %v1066 = vpack.c.b16 %v888, %v887
      %v1067 = vpack.c.b16 %v890, %v889
      %v1068 = vpack.c.b16 %v892, %v891
      %v1069 = vpack.c.b16 %v894, %v893
      %v1070 = vpack.c.b16 %v896, %v895
      %v1071 = vpack.c.b16 %v898, %v897
      %v1072 = vpack.c.b16 %v900, %v899
      %v1073 = vpack.c.b16 %v902, %v901
      %v1074 = vpack.c.b16 %v904, %v903
      %v1075 = vpack.c.b16 %v906, %v905
      %v1076 = vpack.c.b16 %v908, %v907
      %v1077 = vpack.c.b16 %v910, %v909
      %v1078 = vpack.c.b16 %v912, %v911
      %v1079 = vpack.c.b16 %v914, %v913
      %v1080 = vpack.c.b16 %v916, %v915
      %v1081 = vpack.c.b16 %v918, %v917
      %v1082 = vpack.c.b16 %v920, %v919
      %v1083 = vpack.c.b16 %v922, %v921
      %v1084 = vpack.c.b16 %v924, %v923
      %v1085 = vpack.c.b16 %v926, %v925
      %v1086 = vpack.c.b16 %v928, %v927
      %v1087 = vpack.c.b16 %v930, %v929
      %v1088 = vpack.c.b16 %v932, %v931
      %v1089 = vpack.c.b16 %v934, %v933
      %v1090 = vpack.c.b16 %v936, %v935
      %v1091 = vpack.c.b16 %v938, %v937
      %v1092 = vpack.c.b16 %v940, %v939
      %v1093 = vpack.c.b16 %v942, %v941
      %v1094 = vpack.c.b16 %v944, %v943
      %v1095 = vpack.c.b16 %v946, %v945
      %v1096 = vpack.c.b16 %v948, %v947
      %v1097 = vpack.c.b16 %v950, %v949
      %v1098 = vpack.c.b16 %v952, %v951
      %v1099 = vpack.c.b16 %v954, %v953
      %v1100 = vpack.c.b16 %v956, %v955
      %v1101 = vpack.c.b16 %v958, %v957
      %v1102 = vpack.c.b16 %v960, %v959
      %v1103 = vpack.c.b16 %v962, %v961
      %v1104 = vpack.c.b16 %v964, %v963
      %v1105 = vpack.c.b16 %v966, %v965
      %v1106 = vpack.c.b16 %v968, %v967
      %v1107 = vpack.c.b16 %v970, %v969
      %v1108 = vpack.c.b16 %v972, %v971
      %v1109 = vpack.c.b16 %v974, %v973
      %v1110 = vpack.c.b16 %v976, %v975
      %v1111 = vpack.c.b16 %v978, %v977
      %v1112 = vpack.c.b16 %v980, %v979
      %v1113 = vpack.c.b16 %v982, %v981
      %v1114 = vpack.c.b16 %v984, %v983
      %v1115 = vpack.c.b16 %v986, %v985
      %v1116 = vpack.c.b16 %v988, %v987
      %v1117 = vpack.c.b16 %v990, %v989
      %v1118 = vpack.c.b16 %v992, %v991
      %v1119 = vpack.c.b16 %v994, %v993
      %v1120 = vpack.c.b16 %v996, %v995
      %v1121 = vpack.c.b16 %v998, %v997
      %v1122 = vpack.c.b16 %v1000, %v999
      %v1123 = vpack.c.b16 %v1002, %v1001
      %v1124 = vpack.c.b16 %v1004, %v1003
      %v1125 = vpack.c.b16 %v1006, %v1005
      %v1126 = vpack.c.b16 %v1008, %v1007
      %v1127 = vpack.c.b16 %v1010, %v1009
      %v1128 = vpack.c.b16 %v1012, %v1011
      %v1129 = vpack.c.b16 %v1014, %v1013
      %v1130 = vpack.c.b16 %v1016, %v1015
      %v1131 = vpack.c.b16 %v1018, %v1017
      %v1132 = vpack.c.b16 %v1020, %v1019
      %v1133 = vpack.c.b16 %v1022, %v1021
      %v1134 = vpack.c.b16 %v1024, %v1023
      %v1135 = vpack.c.b16 %v1026, %v1025
      %v1136 = vpack.c.b16 %v1028, %v1027
      %v1137 = vpack.c.b16 %v1030, %v1029
      %v1138 = vpack.c.b16 %v1032, %v1031
      %v1139 = vpack.c.b16 %v1034, %v1033
      %v1140 = vpack.c.b16 %v1036, %v1035
      %1245 = vmatprep.subr.bf16.mxu0 0
      %1246 = vmatpush1.bf16.msra.mxu0 %v1037
      %1247 = vmatprep.subr.bf16.mxu0 0
      %1248 = vmatpush1.bf16.msra.mxu0 %v1038
      %1249 = vmatprep.subr.bf16.mxu0 0
      %1250 = vmatpush1.bf16.msra.mxu0 %v1039
      %1251 = vmatprep.subr.bf16.mxu0 0
      %1252 = vmatpush1.bf16.msra.mxu0 %v1040
      %1253 = vmatprep.subr.bf16.mxu0 0
      %1254 = vmatpush1.bf16.msra.mxu0 %v1041
      %1255 = vmatprep.subr.bf16.mxu0 0
      %1256 = vmatpush1.bf16.msra.mxu0 %v1042
      %1257 = vmatprep.subr.bf16.mxu0 0
      %1258 = vmatpush1.bf16.msra.mxu0 %v1043
      %1259 = vmatprep.subr.bf16.mxu0 0
      %1260 = vmatpush1.bf16.msra.mxu0 %v1044
      %1261 = vmatprep.subr.bf16.mxu0 0
      %1262 = vmatpush1.bf16.msra.mxu0 %v1045
      %1263 = vmatprep.subr.bf16.mxu0 0
      %1264 = vmatpush1.bf16.msra.mxu0 %v1046
      %1265 = vmatprep.subr.bf16.mxu0 0
      %1266 = vmatpush1.bf16.msra.mxu0 %v1047
      %1267 = vmatprep.subr.bf16.mxu0 0
      %1268 = vmatpush1.bf16.msra.mxu0 %v1048
      %1269 = vmatprep.subr.bf16.mxu0 0
      %1270 = vmatpush1.bf16.msra.mxu0 %v1049
      %1271 = vmatprep.subr.bf16.mxu0 0
      %1272 = vmatpush1.bf16.msra.mxu0 %v1050
      %1273 = vmatprep.subr.bf16.mxu0 0
      %1274 = vmatpush1.bf16.msra.mxu0 %v1051
      %1275 = vmatprep.subr.bf16.mxu0 0
      %1276 = vmatpush1.bf16.msra.mxu0 %v1052
      %1277 = vmatprep.mubr.bf16.mxu0 %v570
      %1278 = vmatmul.mubr.bf16.gmra.mrb[0].mxu0 %v569
      %v1279 = vpop.f32.mrb[0].mxu0
      %v1280 = vadd.f32 0.0, %v1279
      %v1281 = vpop.f32.mrb[0].mxu0
      %v1282 = vpop.f32.mrb[0].mxu0
      %v1283 = vadd.f32 0.0, %v1282
      %v1284 = vpop.f32.mrb[0].mxu0
      %1285 = vmatprep.mubr.bf16.mxu0 %v583
      %1286 = vmatmul.mubr.bf16.gmra.mrb[0].mxu0 %v582
      %v1287 = vpop.f32.mrb[0].mxu0
      %v1288 = vadd.f32 0.0, %v1287
      %v1289 = vpop.f32.mrb[0].mxu0
      %v1290 = vpop.f32.mrb[0].mxu0
      %v1291 = vadd.f32 0.0, %v1290
      %v1292 = vpop.f32.mrb[0].mxu0
      %1293 = vdwg.mxu0
      %1294 = vmatprep.subr.bf16.mxu0 0
      %1295 = vmatpush1.bf16.msra.mxu0 %v1053
      %1296 = vmatprep.subr.bf16.mxu0 0
      %1297 = vmatpush1.bf16.msra.mxu0 %v1054
      %1298 = vmatprep.subr.bf16.mxu0 0
      %1299 = vmatpush1.bf16.msra.mxu0 %v1055
      %1300 = vmatprep.subr.bf16.mxu0 0
      %1301 = vmatpush1.bf16.msra.mxu0 %v1056
      %1302 = vmatprep.subr.bf16.mxu0 0
      %1303 = vmatpush1.bf16.msra.mxu0 %v1057
      %1304 = vmatprep.subr.bf16.mxu0 0
      %1305 = vmatpush1.bf16.msra.mxu0 %v1058
      %1306 = vmatprep.subr.bf16.mxu0 0
      %1307 = vmatpush1.bf16.msra.mxu0 %v1059
      %1308 = vmatprep.subr.bf16.mxu0 0
      %1309 = vmatpush1.bf16.msra.mxu0 %v1060
      %1310 = vmatprep.subr.bf16.mxu0 0
      %1311 = vmatpush1.bf16.msra.mxu0 %v1061
      %1312 = vmatprep.subr.bf16.mxu0 0
      %1313 = vmatpush1.bf16.msra.mxu0 %v1062
      %1314 = vmatprep.subr.bf16.mxu0 0
      %1315 = vmatpush1.bf16.msra.mxu0 %v1063
      %1316 = vmatprep.subr.bf16.mxu0 0
      %1317 = vmatpush1.bf16.msra.mxu0 %v1064
      %1318 = vmatprep.subr.bf16.mxu0 0
      %1319 = vmatpush1.bf16.msra.mxu0 %v1065
      %1320 = vmatprep.subr.bf16.mxu0 0
      %1321 = vmatpush1.bf16.msra.mxu0 %v1066
      %1322 = vmatprep.subr.bf16.mxu0 0
      %1323 = vmatpush1.bf16.msra.mxu0 %v1067
      %1324 = vmatprep.subr.bf16.mxu0 0
      %1325 = vmatpush1.bf16.msra.mxu0 %v1068
      %1326 = vmatprep.mubr.bf16.mxu0 %v572
      %1327 = vmatmul.mubr.bf16.gmra.mrb[0].mxu0 %v571
      %v1328 = vpop.f32.mrb[0].mxu0
      %v1329 = vadd.f32 %v1280, %v1328
      %v1330 = vpop.f32.mrb[0].mxu0
      %v1331 = vpop.f32.mrb[0].mxu0
      %v1332 = vadd.f32 %v1283, %v1331
      %v1333 = vpop.f32.mrb[0].mxu0
      %1334 = vmatprep.mubr.bf16.mxu0 %v585
      %1335 = vmatmul.mubr.bf16.gmra.mrb[0].mxu0 %v584
      %v1336 = vpop.f32.mrb[0].mxu0
      %v1337 = vadd.f32 %v1288, %v1336
      %v1338 = vpop.f32.mrb[0].mxu0
      %v1339 = vpop.f32.mrb[0].mxu0
      %v1340 = vadd.f32 %v1291, %v1339
      %v1341 = vpop.f32.mrb[0].mxu0
      %1342 = vdwg.mxu0
      %1343 = vmatprep.subr.bf16.mxu0 0
      %1344 = vmatpush1.bf16.msra.mxu0 %v1069
      %1345 = vmatprep.subr.bf16.mxu0 0
      %1346 = vmatpush1.bf16.msra.mxu0 %v1070
      %1347 = vmatprep.subr.bf16.mxu0 0
      %1348 = vmatpush1.bf16.msra.mxu0 %v1071
      %1349 = vmatprep.subr.bf16.mxu0 0
      %1350 = vmatpush1.bf16.msra.mxu0 %v1072
      %1351 = vmatprep.subr.bf16.mxu0 0
      %1352 = vmatpush1.bf16.msra.mxu0 %v1073
      %1353 = vmatprep.subr.bf16.mxu0 0
      %1354 = vmatpush1.bf16.msra.mxu0 %v1074
      %1355 = vmatprep.subr.bf16.mxu0 0
      %1356 = vmatpush1.bf16.msra.mxu0 %v1075
      %1357 = vmatprep.subr.bf16.mxu0 0
      %1358 = vmatpush1.bf16.msra.mxu0 %v1076
      %1359 = vmatprep.subr.bf16.mxu0 0
      %1360 = vmatpush1.bf16.msra.mxu0 %v1077
      %1361 = vmatprep.subr.bf16.mxu0 0
      %1362 = vmatpush1.bf16.msra.mxu0 %v1078
      %1363 = vmatprep.subr.bf16.mxu0 0
      %1364 = vmatpush1.bf16.msra.mxu0 %v1079
      %1365 = vmatprep.subr.bf16.mxu0 0
      %1366 = vmatpush1.bf16.msra.mxu0 %v1080
      %1367 = vmatprep.subr.bf16.mxu0 0
      %1368 = vmatpush1.bf16.msra.mxu0 %v1081
      %1369 = vmatprep.subr.bf16.mxu0 0
      %1370 = vmatpush1.bf16.msra.mxu0 %v1082
      %1371 = vmatprep.subr.bf16.mxu0 0
      %1372 = vmatpush1.bf16.msra.mxu0 %v1083
      %1373 = vmatprep.subr.bf16.mxu0 0
      %1374 = vmatpush1.bf16.msra.mxu0 %v1084
      %1375 = vmatprep.mubr.bf16.mxu0 %v574
      %1376 = vmatmul.mubr.bf16.gmra.mrb[0].mxu0 %v573
      %v1377 = vpop.f32.mrb[0].mxu0
      %v1378 = vadd.f32 %v1329, %v1377
      %v1379 = vpop.f32.mrb[0].mxu0
      %v1380 = vpop.f32.mrb[0].mxu0
      %v1381 = vadd.f32 %v1332, %v1380
      %v1382 = vpop.f32.mrb[0].mxu0
      %1383 = vmatprep.mubr.bf16.mxu0 %v587
      %1384 = vmatmul.mubr.bf16.gmra.mrb[0].mxu0 %v586
      %v1385 = vpop.f32.mrb[0].mxu0
      %v1386 = vadd.f32 %v1337, %v1385
      %v1387 = vpop.f32.mrb[0].mxu0
      %v1388 = vpop.f32.mrb[0].mxu0
      %v1389 = vadd.f32 %v1340, %v1388
      %v1390 = vpop.f32.mrb[0].mxu0
      %1391 = vdwg.mxu0
      %1392 = vmatprep.subr.bf16.mxu0 0
      %1393 = vmatpush1.bf16.msra.mxu0 %v1085
      %1394 = vmatprep.subr.bf16.mxu0 0
      %1395 = vmatpush1.bf16.msra.mxu0 %v1086
      %1396 = vmatprep.subr.bf16.mxu0 0
      %1397 = vmatpush1.bf16.msra.mxu0 %v1087
      %1398 = vmatprep.subr.bf16.mxu0 0
      %1399 = vmatpush1.bf16.msra.mxu0 %v1088
      %1400 = vmatprep.subr.bf16.mxu0 0
      %1401 = vmatpush1.bf16.msra.mxu0 %v1089
      %1402 = vmatprep.subr.bf16.mxu0 0
      %1403 = vmatpush1.bf16.msra.mxu0 %v1090
      %1404 = vmatprep.subr.bf16.mxu0 0
      %1405 = vmatpush1.bf16.msra.mxu0 %v1091
      %1406 = vmatprep.subr.bf16.mxu0 0
      %1407 = vmatpush1.bf16.msra.mxu0 %v1092
      %1408 = vmatprep.subr.bf16.mxu0 0
      %1409 = vmatpush1.bf16.msra.mxu0 %v1093
      %1410 = vmatprep.subr.bf16.mxu0 0
      %1411 = vmatpush1.bf16.msra.mxu0 %v1094
      %1412 = vmatprep.subr.bf16.mxu0 0
      %1413 = vmatpush1.bf16.msra.mxu0 %v1095
      %1414 = vmatprep.subr.bf16.mxu0 0
      %1415 = vmatpush1.bf16.msra.mxu0 %v1096
      %1416 = vmatprep.subr.bf16.mxu0 0
      %1417 = vmatpush1.bf16.msra.mxu0 %v1097
      %1418 = vmatprep.subr.bf16.mxu0 0
      %1419 = vmatpush1.bf16.msra.mxu0 %v1098
      %1420 = vmatprep.subr.bf16.mxu0 0
      %1421 = vmatpush1.bf16.msra.mxu0 %v1099
      %1422 = vmatprep.subr.bf16.mxu0 0
      %1423 = vmatpush1.bf16.msra.mxu0 %v1100
      %1424 = vmatprep.mubr.bf16.mxu0 %v576
      %1425 = vmatmul.mubr.bf16.gmra.mrb[0].mxu0 %v575
      %v1426 = vpop.f32.mrb[0].mxu0
      %v1427 = vadd.f32 %v1378, %v1426
      %v1428 = vpop.f32.mrb[0].mxu0
      %v1429 = vpop.f32.mrb[0].mxu0
      %v1430 = vadd.f32 %v1381, %v1429
      %v1431 = vpop.f32.mrb[0].mxu0
      %1432 = vmatprep.mubr.bf16.mxu0 %v589
      %1433 = vmatmul.mubr.bf16.gmra.mrb[0].mxu0 %v588
      %v1434 = vpop.f32.mrb[0].mxu0
      %v1435 = vadd.f32 %v1386, %v1434
      %v1436 = vpop.f32.mrb[0].mxu0
      %v1437 = vpop.f32.mrb[0].mxu0
      %v1438 = vadd.f32 %v1389, %v1437
      %v1439 = vpop.f32.mrb[0].mxu0
      %1440 = vdwg.mxu0
      %1441 = vmatprep.subr.bf16.mxu0 0
      %1442 = vmatpush1.bf16.msra.mxu0 %v1101
      %1443 = vmatprep.subr.bf16.mxu0 0
      %1444 = vmatpush1.bf16.msra.mxu0 %v1102
      %1445 = vmatprep.subr.bf16.mxu0 0
      %1446 = vmatpush1.bf16.msra.mxu0 %v1103
      %1447 = vmatprep.subr.bf16.mxu0 0
      %1448 = vmatpush1.bf16.msra.mxu0 %v1104
      %1449 = vmatprep.subr.bf16.mxu0 0
      %1450 = vmatpush1.bf16.msra.mxu0 %v1105
      %1451 = vmatprep.subr.bf16.mxu0 0
      %1452 = vmatpush1.bf16.msra.mxu0 %v1106
      %1453 = vmatprep.subr.bf16.mxu0 0
      %1454 = vmatpush1.bf16.msra.mxu0 %v1107
      %1455 = vmatprep.subr.bf16.mxu0 0
      %1456 = vmatpush1.bf16.msra.mxu0 %v1108
      %1457 = vmatprep.subr.bf16.mxu0 0
      %1458 = vmatpush1.bf16.msra.mxu0 %v1109
      %1459 = vmatprep.subr.bf16.mxu0 0
      %1460 = vmatpush1.bf16.msra.mxu0 %v1110
      %1461 = vmatprep.subr.bf16.mxu0 0
      %1462 = vmatpush1.bf16.msra.mxu0 %v1111
      %1463 = vmatprep.subr.bf16.mxu0 0
      %1464 = vmatpush1.bf16.msra.mxu0 %v1112
      %1465 = vmatprep.subr.bf16.mxu0 0
      %1466 = vmatpush1.bf16.msra.mxu0 %v1113
      %1467 = vmatprep.subr.bf16.mxu0 0
      %1468 = vmatpush1.bf16.msra.mxu0 %v1114
      %1469 = vmatprep.subr.bf16.mxu0 0
      %1470 = vmatpush1.bf16.msra.mxu0 %v1115
      %1471 = vmatprep.subr.bf16.mxu0 0
      %1472 = vmatpush1.bf16.msra.mxu0 %v1116
      %1473 = vmatprep.mubr.bf16.mxu0 %v578
      %1474 = vmatmul.mubr.bf16.gmra.mrb[0].mxu0 %v577
      %v1475 = vpop.f32.mrb[0].mxu0
      %v1476 = vadd.f32 %v1427, %v1475
      %v1477 = vpop.f32.mrb[0].mxu0
      %v1478 = vpop.f32.mrb[0].mxu0
      %v1479 = vadd.f32 %v1430, %v1478
      %v1480 = vpop.f32.mrb[0].mxu0
      %1481 = vmatprep.mubr.bf16.mxu0 %v591
      %1482 = vmatmul.mubr.bf16.gmra.mrb[0].mxu0 %v590
      %v1483 = vpop.f32.mrb[0].mxu0
      %v1484 = vadd.f32 %v1435, %v1483
      %v1485 = vpop.f32.mrb[0].mxu0
      %v1486 = vpop.f32.mrb[0].mxu0
      %v1487 = vadd.f32 %v1438, %v1486
      %v1488 = vpop.f32.mrb[0].mxu0
      %1489 = vdwg.mxu0
      %1490 = vmatprep.subr.bf16.mxu0 0
      %1491 = vmatpush1.bf16.msra.mxu0 %v1117
      %1492 = vmatprep.subr.bf16.mxu0 0
      %1493 = vmatpush1.bf16.msra.mxu0 %v1118
      %1494 = vmatprep.subr.bf16.mxu0 0
      %1495 = vmatpush1.bf16.msra.mxu0 %v1119
      %1496 = vmatprep.subr.bf16.mxu0 0
      %1497 = vmatpush1.bf16.msra.mxu0 %v1120
      %1498 = vmatprep.subr.bf16.mxu0 0
      %1499 = vmatpush1.bf16.msra.mxu0 %v1121
      %1500 = vmatprep.subr.bf16.mxu0 0
      %1501 = vmatpush1.bf16.msra.mxu0 %v1122
      %1502 = vmatprep.subr.bf16.mxu0 0
      %1503 = vmatpush1.bf16.msra.mxu0 %v1123
      %1504 = vmatprep.subr.bf16.mxu0 0
      %1505 = vmatpush1.bf16.msra.mxu0 %v1124
      %1506 = vmatprep.subr.bf16.mxu0 0
      %1507 = vmatpush1.bf16.msra.mxu0 %v1125
      %1508 = vmatprep.subr.bf16.mxu0 0
      %1509 = vmatpush1.bf16.msra.mxu0 %v1126
      %1510 = vmatprep.subr.bf16.mxu0 0
      %1511 = vmatpush1.bf16.msra.mxu0 %v1127
      %1512 = vmatprep.subr.bf16.mxu0 0
      %1513 = vmatpush1.bf16.msra.mxu0 %v1128
      %1514 = vmatprep.subr.bf16.mxu0 0
      %1515 = vmatpush1.bf16.msra.mxu0 %v1129
      %1516 = vmatprep.subr.bf16.mxu0 0
      %1517 = vmatpush1.bf16.msra.mxu0 %v1130
      %1518 = vmatprep.subr.bf16.mxu0 0
      %1519 = vmatpush1.bf16.msra.mxu0 %v1131
      %1520 = vmatprep.subr.bf16.mxu0 0
      %1521 = vmatpush1.bf16.msra.mxu0 %v1132
      %1522 = vmatprep.mubr.bf16.mxu0 %v580
      %1523 = vmatmul.mubr.bf16.gmra.mrb[0].mxu0 %v579
      %v1524 = vpop.f32.mrb[0].mxu0
      %v1525 = vadd.f32 %v1476, %v1524
      %v1526 = vpop.f32.mrb[0].mxu0
      %v1527 = vpop.f32.mrb[0].mxu0
      %v1528 = vadd.f32 %v1479, %v1527
      %v1529 = vpop.f32.mrb[0].mxu0
      %1530 = vmatprep.mubr.bf16.mxu0 %v593
      %1531 = vmatmul.mubr.bf16.gmra.mrb[0].mxu0 %v592
      %v1532 = vpop.f32.mrb[0].mxu0
      %v1533 = vadd.f32 %v1484, %v1532
      %v1534 = vpop.f32.mrb[0].mxu0
      %v1535 = vpop.f32.mrb[0].mxu0
      %v1536 = vadd.f32 %v1487, %v1535
      %v1537 = vpop.f32.mrb[0].mxu0
      %1538 = vdwg.mxu0
      %1539 = vmatprep.subr.bf16.mxu0 0
      %1540 = vmatpush1.bf16.msra.mxu0 %v1133
      %1541 = vmatprep.subr.bf16.mxu0 0
      %1542 = vmatpush1.bf16.msra.mxu0 %v1134
      %1543 = vmatprep.subr.bf16.mxu0 0
      %1544 = vmatpush1.bf16.msra.mxu0 %v1135
      %1545 = vmatprep.subr.bf16.mxu0 0
      %1546 = vmatpush1.bf16.msra.mxu0 %v1136
      %1547 = vmatprep.subr.bf16.mxu0 0
      %1548 = vmatpush1.bf16.msra.mxu0 %v1137
      %1549 = vmatprep.subr.bf16.mxu0 0
      %1550 = vmatpush1.bf16.msra.mxu0 %v1138
      %1551 = vmatprep.subr.bf16.mxu0 0
      %1552 = vmatpush1.bf16.msra.mxu0 %v1139
      %1553 = vmatprep.subr.bf16.mxu0 0
      %1554 = vmatpush1.bf16.msra.mxu0 %v1140
      %1555 = vmatprep.subr.bf16.mxu0 0
      %1556 = vmatpush1.bf16.msra.mxu0 0
      %1557 = vmatprep.subr.bf16.mxu0 0
      %1558 = vmatpush1.bf16.msra.mxu0 0
      %1559 = vmatprep.subr.bf16.mxu0 0
      %1560 = vmatpush1.bf16.msra.mxu0 0
      %1561 = vmatprep.subr.bf16.mxu0 0
      %1562 = vmatpush1.bf16.msra.mxu0 0
      %1563 = vmatprep.subr.bf16.mxu0 0
      %1564 = vmatpush1.bf16.msra.mxu0 0
      %1565 = vmatprep.subr.bf16.mxu0 0
      %1566 = vmatpush1.bf16.msra.mxu0 0
      %1567 = vmatprep.subr.bf16.mxu0 0
      %1568 = vmatpush1.bf16.msra.mxu0 0
      %1569 = vmatprep.subr.bf16.mxu0 0
      %1570 = vmatpush1.bf16.msra.mxu0 0
      %1571 = vmatprep.mubr.bf16.mxu0 0
      %1572 = vmatmul.mubr.bf16.gmra.mrb[0].mxu0 %v581
      %v1573 = vpop.f32.mrb[0].mxu0
      %v1574 = vadd.f32 %v1525, %v1573
      %v1575 = vpop.f32.mrb[0].mxu0
      %v1576 = vpop.f32.mrb[0].mxu0
      %v1577 = vadd.f32 %v1528, %v1576
      %v1578 = vpop.f32.mrb[0].mxu0
      %1579 = vmatprep.mubr.bf16.mxu0 0
      %1580 = vmatmul.mubr.bf16.gmra.mrb[0].mxu0 %v594
      %v1581 = vpop.f32.mrb[0].mxu0
      %v1582 = vadd.f32 %v1533, %v1581
      %v1583 = vpop.f32.mrb[0].mxu0
      %v1584 = vpop.f32.mrb[0].mxu0
      %v1585 = vadd.f32 %v1536, %v1584
      %v1586 = vpop.f32.mrb[0].mxu0
      %1587 = vdwg.mxu0
      %v1588 = vadd.f32 %v1574, %v1577
      %v1589 = vrot.slane %v1588, 4
      %v1590 = vadd.f32 %v1588, %v1589
      %v1591 = vrot.slane %v1590, 2
      %v1592 = vadd.f32 %v1590, %v1591
      %v1593 = vrot.slane %v1592, 1
      %v1594 = vadd.f32 %v1592, %v1593
      %v1595 = vrcp.pop 16.0
      %v1596 = vmul.f32 %v1594, %v1595
      %v1597 = vsub.f32 %v1574, %v1596
      %v1598 = vsub.f32 %v1577, %v1596
      %v1599 = vmul.f32 %v1597, %v1597
      %v1600 = vmul.f32 %v1598, %v1598
      %v1601 = vadd.f32 %v1599, %v1600
      %v1602 = vrot.slane %v1601, 4
      %v1603 = vadd.f32 %v1601, %v1602
      %v1604 = vrot.slane %v1603, 2
      %v1605 = vadd.f32 %v1603, %v1604
      %v1606 = vrot.slane %v1605, 1
      %v1607 = vadd.f32 %v1605, %v1606
      %v1608 = vmul.f32 %v1607, %v1595
      %v1609 = vadd.f32 %v1608, 1e-05
      %v1610 = vrsqrt.pop %v1609
      %v1611 = vmul.f32 %v1597, %v1610
      %v1612 = vmul.f32 %v1598, %v1610
      %v1613 = vmax.f32 %v1611, 0.0
      %v1614 = vmax.f32 %v1612, 0.0
      %v1615 = vld [vmem:[%s240] sm:$0xf]
      %v1616 = vld [vmem:[%s240 + $0x4] sm:$0xf]
      %v1617 = vunpack.c.l.bf16 %v1615
      %v1618 = vunpack.c.l.bf16 %v1616
      %v1619 = vadd.f32 %v1613, %v1617
      %v1620 = vadd.f32 %v1614, %v1618
      %v1621 = vpack.c.bf16 %v1620, %v1619
      %v1623 = vunpack.c.l.b16 %v1621
      %v1624 = vunpack.c.h.b16 %v1621
      %v1625 = vpack.c.b16 %v1623, %v1623
      %v1626 = vpack.c.b16 %v1624, %v1624
      %1629 = vst [vmem:[%s250] sm:$0xf] %v1625
      %1630 = vst [vmem:[%s250 + $0x4] sm:$0xf] %v1626
      %v1631 = vadd.f32 %v1582, %v1585
      %v1632 = vrot.slane %v1631, 4
      %v1633 = vadd.f32 %v1631, %v1632
      %v1634 = vrot.slane %v1633, 2
      %v1635 = vadd.f32 %v1633, %v1634
      %v1636 = vrot.slane %v1635, 1
      %v1637 = vadd.f32 %v1635, %v1636
      %v1638 = vmul.f32 %v1637, %v1595
      %v1639 = vsub.f32 %v1582, %v1638
      %v1640 = vsub.f32 %v1585, %v1638
      %v1641 = vmul.f32 %v1639, %v1639
      %v1642 = vmul.f32 %v1640, %v1640
      %v1643 = vadd.f32 %v1641, %v1642
      %v1644 = vrot.slane %v1643, 4
      %v1645 = vadd.f32 %v1643, %v1644
      %v1646 = vrot.slane %v1645, 2
      %v1647 = vadd.f32 %v1645, %v1646
      %v1648 = vrot.slane %v1647, 1
      %v1649 = vadd.f32 %v1647, %v1648
      %v1650 = vmul.f32 %v1649, %v1595
      %v1651 = vadd.f32 %v1650, 1e-05
      %v1652 = vrsqrt.pop %v1651
      %v1653 = vmul.f32 %v1639, %v1652
      %v1654 = vmul.f32 %v1640, %v1652
      %v1655 = vmax.f32 %v1653, 0.0
      %v1656 = vmax.f32 %v1654, 0.0
      %s1657 = scalar_lea.vmem %s240, 8
      %v1658 = vld [vmem:[%s1657] sm:$0xf]
      %v1659 = vld [vmem:[%s1657 + $0x4] sm:$0xf]
      %v1660 = vunpack.c.l.bf16 %v1658
      %v1661 = vunpack.c.l.bf16 %v1659
      %v1662 = vadd.f32 %v1655, %v1660
      %v1663 = vadd.f32 %v1656, %v1661
      %v1664 = vpack.c.bf16 %v1663, %v1662
      %v1666 = vunpack.c.l.b16 %v1664
      %v1667 = vunpack.c.h.b16 %v1664
      %v1668 = vpack.c.b16 %v1666, %v1666
      %v1669 = vpack.c.b16 %v1667, %v1667
      %s1672 = scalar_lea.vmem %s250, 8
      %1673 = vst [vmem:[%s1672] sm:$0xf] %v1668
      %1674 = vst [vmem:[%s1672 + $0x4] sm:$0xf] %v1669
      %s1675 = smul.u32 2, %s18
      %p1676 = scmp.lt.s32.totalorder %s1675, 3
      %s1677 = scalar_select %p1676, %s1675, 3
      %p1678 = scmp.lt.s32.totalorder %s19, 0
      %s1679 = scalar_select %p1678, %s19, 0
      %s1680 = smul.addr %s1677, 2
      %s1681 = sadd.s32 %s1679, %s1680
      %s1682 = smul.addr %s1681, 4
      %s1683 = scalar_lea.vmem %s3, %s1682
      // Predicated region
      $region33: #{forward.9} parent=31 // pred_check
        %p1684 = pneg %p126
      $region34: #{forward.9} parent=31 // pred_check_branch
        %1686 = sbr.rel (%p1684) target = $region36
      $region35: #{forward.9} parent=31 // pred_region
        %s1687 = smul.u32 2, %s18
      $region36: #{forward.9} parent=31 // pred_fallthru
        _
    $region32: #{forward.9} parent=5 // pred_fallthru
      _
    %p1688 = scmp.le.s32.totalorder 2, %s9
    // Predicated region
    $region37: #{forward.9} parent=5 // pred_check
      %p1689 = pneg %p1688
    $region38: #{forward.9} parent=5 // pred_check_branch
      %1691 = sbr.rel (%p1689) target = $region40
    $region39: #{forward.9} parent=5 // pred_region
      %s1692 = ssub.s32 %s9, 2
      // Predicated region
      $region41: #{forward.9} parent=39 // pred_check
        %p1693 = pneg %p132
      $region42: #{forward.9} parent=39 // pred_check_branch
        %1695 = sbr.rel (%p1693) target = $region44
      $region43: #{forward.9} parent=39 // pred_region
        %s1696 = smul.u32 2, %s20
        %p1697 = scmp.lt.s32.totalorder %s1696, 3
        %s1698 = scalar_select %p1697, %s1696, 3
        %p1699 = scmp.lt.s32.totalorder %s21, 0
        %s1700 = scalar_select %p1699, %s21, 0
        %s1701 = smul.addr %s1698, 2
        %s1702 = sadd.s32 %s1700, %s1701
        %s1703 = smul.addr %s1702, 4
        %s1704 = scalar_lea.vmem %s3, %s1703
      $region44: #{forward.9} parent=39 // pred_fallthru
        _
    $region40: #{forward.9} parent=5 // pred_fallthru
      _
  $region6: #{forward.9} parent=0 // loop_footer
    %s13 = sadd.s32 1, %s9
  $region7: #{forward.9} parent=0 // loop_footer_branch
    %8 = sbr.rel target = $region3
  $region8: #{forward.9} parent=0 // loop_exit
    _

</llo_original>
